<compile_context>
chip_gen: v6e
topology: v6e:2x2x1
jax: 0.10.0
libtpu: 0.0.40
codegen_flags: <defaults>
</compile_context>

<pallas_src>
import functools

import jax
import jax.numpy as jnp
from jax import lax
from jax.experimental import pallas as pl
from jax.experimental.pallas import tpu as pltpu


# ----------------------------------------------------------------------------
# Fused per-batch Pallas kernel
# ----------------------------------------------------------------------------

def _pvconv_fused_kernel(feat_ref, vidx_ref, lo_ref, cwgt_ref, mask_ref,
                         w1_ref, t1_ref, w2_ref, t2_ref,
                         pw_ref, pb_ref, pg_ref, pbt_ref,
                         out_ref, *, R, ks, groups):
    # feat_ref : (Cin+1, N) f32  -- channel-padded point features + trailing row of ones
    # vidx_ref : (N, 1)    i32   -- rounded flat voxel index per point (column layout)
    # lo_ref   : (1, N)    i32   -- floor-corner flat voxel index per point
    # cwgt_ref : (8, N)    f32   -- trilinear corner weights (dx,dy,dz nested order)
    # mask_ref : (k3, V)   f32   -- per-tap boundary masks (precomputed)
    # w1_ref   : (Cout, k3*Cin)  bf16 (BN1 scale folded) ; w2_ref : (Cout, k3*Cout) bf16
    # t1/t2    : (Cout, 1) f32   -- folded BatchNorm shifts
    # pw_ref   : (Cout, Cin) bf16 ; pb/pg/pbt : (Cout, 1) f32
    # out_ref  : (Cout, N) f32
    V = R * R * R
    cin_p1, N = feat_ref.shape
    Cin = cin_p1 - 1                      # padded to a multiple of 8 in the wrapper
    Cout = out_ref.shape[0]
    p = ks // 2

    feat_bf = feat_ref[...].astype(jnp.bfloat16)                    # (Cin+1, N)

    # ---- 1) avg_voxelize: one canonical bf16 matmul (K = N) -> sums + counts ----
    onehot_nv = (lax.broadcasted_iota(jnp.int32, (N, V), 1)
                 == vidx_ref[...]).astype(jnp.bfloat16)             # (N, V) pre-transposed
    sums = jnp.dot(feat_bf, onehot_nv,
                   preferred_element_type=jnp.float32)              # (Cin+1, V)
    cnt = sums[Cin:Cin + 1, :]                                      # (1, V) point counts
    inv = jnp.where(cnt > 0.5,
                    pl.reciprocal(jnp.maximum(cnt, 1.0), approx=True), 0.0)
    grid0 = sums[:Cin, :] * inv                                     # (Cin, V) voxel means

    # ---- 2) two Conv3d + (folded) BN + SiLU layers: stacked-tap contraction ----
    shifts = [(a - p) * R * R + (b - p) * R + (c - p)
              for a in range(ks) for b in range(ks) for c in range(ks)]
    masks = mask_ref[...]                                           # (k3, V) f32

    def conv_bn_silu(g, w_ref, shift_bn):
        # g: (C, V) f32 with C a multiple of 8 -> sublane-aligned concat of taps.
        pieces = []
        for k, s in enumerate(shifts):
            rolled = pltpu.roll(g, shift=(-s) % V, axis=1) if s else g
            pieces.append(rolled * masks[k:k + 1, :])               # zero-pad boundaries
        stacked = jnp.concatenate(pieces, axis=0).astype(jnp.bfloat16)   # (k3*C, V)
        y = jnp.dot(w_ref[...], stacked,
                    preferred_element_type=jnp.float32) + shift_bn  # BN scale is in w
        return y * jax.nn.sigmoid(y)                                # SiLU

    grid1 = conv_bn_silu(grid0, w1_ref, t1_ref[...])                # (Cout, V)
    grid2 = conv_bn_silu(grid1, w2_ref, t2_ref[...])                # (Cout, V)

    # ---- 3) point branch: SharedMLP = Conv1d(1x1) + GroupNorm(groups) + SiLU ----
    y = jnp.dot(pw_ref[...], feat_bf[:Cin, :],
                preferred_element_type=jnp.float32) + pb_ref[...]   # (Cout, N)
    cpg = Cout // groups
    norm_cnt = float(cpg * N)
    ss1 = jnp.sum(y, axis=1, keepdims=True)                         # (Cout, 1)
    ss2 = jnp.sum(y * y, axis=1, keepdims=True)
    ch = lax.broadcasted_iota(jnp.int32, (Cout, 1), 0)
    mean_c = jnp.zeros((Cout, 1), jnp.float32)
    var_c = jnp.zeros((Cout, 1), jnp.float32)
    for gi in range(groups):                                        # VPU-only group stats
        gs1 = jnp.sum(ss1[gi * cpg:(gi + 1) * cpg, :], keepdims=True)   # (1, 1)
        gs2 = jnp.sum(ss2[gi * cpg:(gi + 1) * cpg, :], keepdims=True)
        gm = gs1 / norm_cnt
        gv = jnp.maximum(gs2 / norm_cnt - gm * gm, 0.0)             # clamp variance >= 0
        in_g = (ch >= gi * cpg) & (ch < (gi + 1) * cpg)
        mean_c = jnp.where(in_g, gm, mean_c)
        var_c = jnp.where(in_g, gv, var_c)
    z = (y - mean_c) * lax.rsqrt(var_c + 1e-5) * pg_ref[...] + pbt_ref[...]
    pt = z * jax.nn.sigmoid(z)                                      # (Cout, N)

    # ---- 4) trilinear devoxelize + residual: 8 rolled copies + ONE gather matmul ----
    # Corner (dx,dy,dz) value at point n == grid2[:, lo[n] + shift] (mod V); any corner
    # whose index would need clamping has trilinear weight exactly 0, so the wrap is inert.
    corner_shifts = [dx * R * R + dy * R + dz
                     for dx in (0, 1) for dy in (0, 1) for dz in (0, 1)]
    dev = [pltpu.roll(grid2, shift=(-s) % V, axis=1) if s else grid2
           for s in corner_shifts]
    dev = jnp.concatenate(dev, axis=0).astype(jnp.bfloat16)         # (8*Cout, V)
    onehot_dev = (lax.broadcasted_iota(jnp.int32, (V, N), 0)
                  == lo_ref[...]).astype(jnp.bfloat16)              # (V, N)
    gathered = jnp.dot(dev, onehot_dev,
                       preferred_element_type=jnp.float32)          # (8*Cout, N)
    vox = jnp.zeros((Cout, N), jnp.float32)
    for k in range(8):
        vox = vox + gathered[k * Cout:(k + 1) * Cout, :] * cwgt_ref[pl.ds(k, 1), :]
    out_ref[...] = vox + pt


def pvconv_fused_call(feat_aug, vidx, lo_flat, corner_w, masks,
                      w1, t1, w2, t2, pw, pb, pgamma, pbeta,
                      *, R, ks, groups):
    B, cin_p1, N = feat_aug.shape
    Cout = w1.shape[0]
    V = R ** 3
    k3 = ks ** 3
    kern = functools.partial(_pvconv_fused_kernel, R=R, ks=ks, groups=groups)
    return pl.pallas_call(
        kern,
        out_shape=jax.ShapeDtypeStruct((B, Cout, N), jnp.float32),
        grid=(B,),
        in_specs=[
            pl.BlockSpec((None, cin_p1, N), lambda b: (b, 0, 0)),       # features (+ones row)
            pl.BlockSpec((None, N, 1), lambda b: (b, 0, 0)),            # rounded voxel index
            pl.BlockSpec((None, 1, N), lambda b: (b, 0, 0)),            # floor corner index
            pl.BlockSpec((None, 8, N), lambda b: (b, 0, 0)),            # trilinear weights
            pl.BlockSpec((k3, V), lambda b: (0, 0)),                    # tap boundary masks
            pl.BlockSpec((Cout, w1.shape[1]), lambda b: (0, 0)),        # conv1 weight (bf16, BN folded)
            pl.BlockSpec((Cout, 1), lambda b: (0, 0)),                  # conv1 BN shift
            pl.BlockSpec((Cout, w2.shape[1]), lambda b: (0, 0)),        # conv2 weight (bf16, BN folded)
            pl.BlockSpec((Cout, 1), lambda b: (0, 0)),                  # conv2 BN shift
            pl.BlockSpec((Cout, pw.shape[1]), lambda b: (0, 0)),        # point 1x1-conv weight
            pl.BlockSpec((Cout, 1), lambda b: (0, 0)),                  # point bias
            pl.BlockSpec((Cout, 1), lambda b: (0, 0)),                  # GroupNorm gamma
            pl.BlockSpec((Cout, 1), lambda b: (0, 0)),                  # GroupNorm beta
        ],
        out_specs=pl.BlockSpec((None, Cout, N), lambda b: (b, 0, 0)),
        compiler_params=pltpu.CompilerParams(
            dimension_semantics=("parallel",),      # batches across TCs on v7x megacore
            vmem_limit_bytes=32 * 1024 * 1024),
    )(feat_aug, vidx, lo_flat, corner_w, masks, w1, t1, w2, t2, pw, pb, pgamma, pbeta)


# ----------------------------------------------------------------------------
# Plain-JAX glue (index math / one-time parameter folding only)
# ----------------------------------------------------------------------------

def normalize_coords(coords, r, normalize=True, eps=0.0):
    # Mirrors Voxelization.forward coordinate normalization (guarded denominator).
    c = coords - jnp.mean(coords, axis=2, keepdims=True)
    if normalize:
        nrm = jnp.linalg.norm(c, axis=1, keepdims=True)              # (B, 1, N)
        denom = jnp.max(nrm, axis=2, keepdims=True) * 2.0 + eps
        c = c / jnp.maximum(denom, 1e-8) + 0.5
    else:
        c = (c + 1.0) / 2.0
    return jnp.clip(c * r, 0.0, r - 1)                               # continuous in [0, r-1]


def trilinear_prep(norm_coords, r):
    # (B, 3, N) continuous coords -> base (floor) corner flat index + 8 corner weights.
    lo_f = jnp.floor(norm_coords)
    frac = norm_coords - lo_f
    lo = lo_f.astype(jnp.int32)
    lo_flat = (lo[:, 0] * r * r + lo[:, 1] * r + lo[:, 2])[:, None, :]   # (B, 1, N)
    w_list = []
    for dx in (0, 1):
        for dy in (0, 1):
            for dz in (0, 1):
                wx = frac[:, 0] if dx else 1.0 - frac[:, 0]
                wy = frac[:, 1] if dy else 1.0 - frac[:, 1]
                wz = frac[:, 2] if dz else 1.0 - frac[:, 2]
                w_list.append(wx * wy * wz)
    corner_w = jnp.stack(w_list, axis=1).astype(jnp.float32)             # (B, 8, N)
    return lo_flat.astype(jnp.int32), corner_w


def fold_bn(bn, conv_bias, eps=1e-5):
    # Fold eval-mode BatchNorm3d (+ conv bias) into per-channel scale / shift.
    scale = bn["gamma"] / jnp.sqrt(bn["var"] + eps)
    shift = bn["beta"] - bn["mean"] * scale + conv_bias * scale
    return scale.astype(jnp.float32), shift[:, None].astype(jnp.float32)


def init_params(key, c_in, c_out, ks):
    k3 = ks ** 3
    keys = jax.random.split(key, 6)

    def nrm(k, shape, scale):
        return jax.random.normal(k, shape, jnp.float32) * scale

    def bn_init(c):
        return dict(gamma=jnp.linspace(0.8, 1.2, c, dtype=jnp.float32),
                    beta=jnp.linspace(-0.1, 0.1, c, dtype=jnp.float32),
                    mean=jnp.zeros((c,), jnp.float32),
                    var=jnp.ones((c,), jnp.float32))

    return {
        "conv1_w": nrm(keys[0], (c_out, c_in, ks, ks, ks), 1.0 / (c_in * k3) ** 0.5),
        "conv1_b": nrm(keys[1], (c_out,), 0.1),
        "bn1": bn_init(c_out),
        "conv2_w": nrm(keys[2], (c_out, c_out, ks, ks, ks), 1.0 / (c_out * k3) ** 0.5),
        "conv2_b": nrm(keys[3], (c_out,), 0.1),
        "bn2": bn_init(c_out),
        "pw": nrm(keys[4], (c_out, c_in), 1.0 / c_in ** 0.5),
        "pb": nrm(keys[5], (c_out,), 0.1),
        "pgamma": jnp.linspace(0.9, 1.1, c_out, dtype=jnp.float32),
        "pbeta": jnp.linspace(-0.05, 0.05, c_out, dtype=jnp.float32),
    }


def pvconv_forward(params, features, coords, time_emb, *, resolution, kernel_size,
                   normalize=True, eps=0.0, groups=8):
    R = resolution
    V = R ** 3
    ks = kernel_size
    k3 = ks ** 3
    B, Cin, N = features.shape
    Cout = params["conv1_w"].shape[0]
    assert Cout % 8 == 0 and Cout % groups == 0
    cin_pad = ((Cin + 7) // 8) * 8          # pad channels so tap stacking is tile-aligned
    pad = cin_pad - Cin
    features = features.astype(jnp.float32)

    # ---- voxelization / devoxelization index math (glue) ----
    norm_coords = normalize_coords(coords.astype(jnp.float32), R, normalize, eps)
    vox = jnp.round(norm_coords).astype(jnp.int32)
    vidx = (vox[:, 0] * R * R + vox[:, 1] * R + vox[:, 2]).astype(jnp.int32)[:, :, None]
    lo_flat, corner_w = trilinear_prep(norm_coords, R)

    # ---- 3x3x3 boundary masks, precomputed once (constant block index) ----
    p = ks // 2
    pos = jnp.arange(V, dtype=jnp.int32)
    fx, fy, fz = pos // (R * R), (pos // R) % R, pos % R
    m_list = []
    for a in range(ks):
        for b in range(ks):
            for c in range(ks):
                da, db, dc = a - p, b - p, c - p
                m_list.append((fx + da >= 0) & (fx + da < R) &
                              (fy + db >= 0) & (fy + db < R) &
                              (fz + dc >= 0) & (fz + dc < R))
    masks = jnp.stack(m_list, axis=0).astype(jnp.float32)                # (k3, V)

    # ---- parameter packing: channel pad, tap-stack layout, fold BN scale into weights ----
    feat_pad = jnp.pad(features, ((0, 0), (0, pad), (0, 0)))
    feat_aug = jnp.concatenate([feat_pad, jnp.ones((B, 1, N), jnp.float32)], axis=1)

    s1, t1 = fold_bn(params["bn1"], params["conv1_b"])
    s2, t2 = fold_bn(params["bn2"], params["conv2_b"])
    # torch Conv3d weight (Cout, Cin, k, k, k) -> lane-dense (Cout, k^3*Cin), tap-major.
    w1 = jnp.transpose(params["conv1_w"], (0, 2, 3, 4, 1))               # (Cout,k,k,k,Cin)
    w1 = jnp.pad(w1, ((0, 0), (0, 0), (0, 0), (0, 0), (0, pad)))
    w1 = (w1.reshape(Cout, k3 * cin_pad) * s1[:, None]).astype(jnp.bfloat16)
    w2 = jnp.transpose(params["conv2_w"], (0, 2, 3, 4, 1)).reshape(Cout, k3 * Cout)
    w2 = (w2 * s2[:, None]).astype(jnp.bfloat16)
    pw = jnp.pad(params["pw"], ((0, 0), (0, pad))).astype(jnp.bfloat16)  # (Cout, cin_pad)

    fused = pvconv_fused_call(
        feat_aug, vidx, lo_flat, corner_w, masks,
        w1, t1, w2, t2, pw,
        params["pb"][:, None], params["pgamma"][:, None], params["pbeta"][:, None],
        R=R, ks=ks, groups=groups)

    return fused, coords, time_emb


# ----------------------------------------------------------------------------
# main
# ----------------------------------------------------------------------------

if __name__ == "__main__":
    B, C_IN, C_OUT, N, R, KS = 2, 4, 8, 128, 8, 3

    key = jax.random.PRNGKey(0)
    k_feat, k_coord, k_temb, k_par = jax.random.split(key, 4)
    features = jax.random.normal(k_feat, (B, C_IN, N), jnp.float32)
    coords = jax.random.normal(k_coord, (B, 3, N), jnp.float32)
    time_emb = jax.random.normal(k_temb, (B, 64), jnp.float32)   # passthrough in PVConv

    params = init_params(k_par, C_IN, C_OUT, KS)

    fused, out_coords, out_temb = pvconv_forward(
        params, features, coords, time_emb, resolution=R, kernel_size=KS,
        normalize=True, eps=0.0)

    jax.block_until_ready(fused)
    assert fused.shape == (B, C_OUT, N)
    assert out_coords.shape == (B, 3, N)
    assert bool(jnp.all(jnp.isfinite(fused)))
    print("KERNEL_OK")
</pallas_src>

<mosaic_0001>
module attributes {stable_mosaic.version = 11 : i64} {
  func.func @_pvconv_fused_kernel(%arg0: i32, %arg1: memref<1x9x128xf32, #tpu.memory_space<vmem>>, %arg2: memref<1x128x1xi32, #tpu.memory_space<vmem>>, %arg3: memref<1x1x128xi32, #tpu.memory_space<vmem>>, %arg4: memref<1x8x128xf32, #tpu.memory_space<vmem>>, %arg5: memref<27x512xf32, #tpu.memory_space<vmem>>, %arg6: memref<8x216xbf16, #tpu.memory_space<vmem>>, %arg7: memref<8x1xf32, #tpu.memory_space<vmem>>, %arg8: memref<8x216xbf16, #tpu.memory_space<vmem>>, %arg9: memref<8x1xf32, #tpu.memory_space<vmem>>, %arg10: memref<8x8xbf16, #tpu.memory_space<vmem>>, %arg11: memref<8x1xf32, #tpu.memory_space<vmem>>, %arg12: memref<8x1xf32, #tpu.memory_space<vmem>>, %arg13: memref<8x1xf32, #tpu.memory_space<vmem>>, %arg14: memref<1x8x128xf32, #tpu.memory_space<vmem>>) attributes {dimension_semantics = [#tpu.dimension_semantics<parallel>], iteration_bounds = array<i64: 2>, scalar_prefetch = 0 : i64, scratch_operands = 0 : i64, tpu.core_type = #tpu.core_type<tc>, window_params = [{transform_indices = @transform_0, window_bounds = array<i64: 1, 9, 128>}, {transform_indices = @transform_1, window_bounds = array<i64: 1, 128, 1>}, {transform_indices = @transform_2, window_bounds = array<i64: 1, 1, 128>}, {transform_indices = @transform_3, window_bounds = array<i64: 1, 8, 128>}, {pipeline_mode = #tpu.pipeline_mode<synchronous>, transform_indices = @transform_4, window_bounds = array<i64: 27, 512>}, {pipeline_mode = #tpu.pipeline_mode<synchronous>, transform_indices = @transform_5, window_bounds = array<i64: 8, 216>}, {pipeline_mode = #tpu.pipeline_mode<synchronous>, transform_indices = @transform_6, window_bounds = array<i64: 8, 1>}, {pipeline_mode = #tpu.pipeline_mode<synchronous>, transform_indices = @transform_7, window_bounds = array<i64: 8, 216>}, {pipeline_mode = #tpu.pipeline_mode<synchronous>, transform_indices = @transform_8, window_bounds = array<i64: 8, 1>}, {pipeline_mode = #tpu.pipeline_mode<synchronous>, transform_indices = @transform_9, window_bounds = array<i64: 8, 8>}, {pipeline_mode = #tpu.pipeline_mode<synchronous>, transform_indices = @transform_10, window_bounds = array<i64: 8, 1>}, {pipeline_mode = #tpu.pipeline_mode<synchronous>, transform_indices = @transform_11, window_bounds = array<i64: 8, 1>}, {pipeline_mode = #tpu.pipeline_mode<synchronous>, transform_indices = @transform_12, window_bounds = array<i64: 8, 1>}, {transform_indices = @transform_13, window_bounds = array<i64: 1, 8, 128>}]} {
    %c0 = arith.constant 0 : index
    %c0_0 = arith.constant 0 : index
    %c0_1 = arith.constant 0 : index
    %0 = vector.load %arg1[%c0, %c0_0, %c0_1] : memref<1x9x128xf32, #tpu.memory_space<vmem>>, vector<1x9x128xf32>
    %1 = vector.shape_cast %0 : vector<1x9x128xf32> to vector<9x128xf32>
    %2 = arith.truncf %1 : vector<9x128xf32> to vector<9x128xbf16>
    %3 = tpu.iota {dimensions = array<i32: 1>} : vector<128x512xi32>
    %c0_2 = arith.constant 0 : index
    %c0_3 = arith.constant 0 : index
    %c0_4 = arith.constant 0 : index
    %4 = vector.load %arg2[%c0_2, %c0_3, %c0_4] : memref<1x128x1xi32, #tpu.memory_space<vmem>>, vector<1x128x1xi32>
    %5 = vector.shape_cast %4 : vector<1x128x1xi32> to vector<128x1xi32>
    %6 = vector.broadcast %5 : vector<128x1xi32> to vector<128x512xi32>
    %7 = arith.cmpi eq, %3, %6 : vector<128x512xi32>
    %8 = arith.extui %7 : vector<128x512xi1> to vector<128x512xi32>
    %9 = arith.sitofp %8 : vector<128x512xi32> to vector<128x512xf32>
    %10 = arith.truncf %9 : vector<128x512xf32> to vector<128x512xbf16>
    %cst = arith.constant dense<0.000000e+00> : vector<9x512xf32>
    %11 = tpu.matmul %2, %10, %cst {dimension_numbers = #tpu.dot_dimension_numbers<[1], [0], [0], [1], [0, 0, 1, 1], [], []>} : vector<9x128xbf16>, vector<128x512xbf16>, vector<9x512xf32> -> vector<9x512xf32>
    %12 = vector.extract_strided_slice %11 {offsets = [8, 0], sizes = [1, 512], strides = [1, 1]} : vector<9x512xf32> to vector<1x512xf32>
    %cst_5 = arith.constant 5.000000e-01 : f32
    %13 = vector.broadcast %cst_5 : f32 to vector<1x512xf32>
    %14 = arith.cmpf ogt, %12, %13 : vector<1x512xf32>
    %cst_6 = arith.constant 1.000000e+00 : f32
    %15 = vector.broadcast %cst_6 : f32 to vector<1x512xf32>
    %16 = arith.maximumf %12, %15 : vector<1x512xf32>
    %17 = tpu.reciprocal %16 {approx = true} : vector<1x512xf32> -> vector<1x512xf32>
    %cst_7 = arith.constant 0.000000e+00 : f32
    %18 = vector.broadcast %cst_7 : f32 to vector<1x512xf32>
    %19 = arith.select %14, %17, %18 : vector<1x512xi1>, vector<1x512xf32>
    %20 = vector.extract_strided_slice %11 {offsets = [0, 0], sizes = [8, 512], strides = [1, 1]} : vector<9x512xf32> to vector<8x512xf32>
    %21 = vector.broadcast %19 : vector<1x512xf32> to vector<8x512xf32>
    %22 = arith.mulf %20, %21 : vector<8x512xf32>
    %c0_8 = arith.constant 0 : index
    %c0_9 = arith.constant 0 : index
    %23 = vector.load %arg5[%c0_8, %c0_9] : memref<27x512xf32, #tpu.memory_space<vmem>>, vector<27x512xf32>
    %c0_10 = arith.constant 0 : index
    %c0_11 = arith.constant 0 : index
    %24 = vector.load %arg7[%c0_10, %c0_11] : memref<8x1xf32, #tpu.memory_space<vmem>>, vector<8x1xf32>
    %c73_i32 = arith.constant 73 : i32
    %25 = tpu.dynamic_rotate %22 by %c73_i32 dim 1 : vector<8x512xf32>, i32 -> vector<8x512xf32>
    %26 = vector.extract_strided_slice %23 {offsets = [0, 0], sizes = [1, 512], strides = [1, 1]} : vector<27x512xf32> to vector<1x512xf32>
    %27 = vector.broadcast %26 : vector<1x512xf32> to vector<8x512xf32>
    %28 = arith.mulf %25, %27 : vector<8x512xf32>
    %c72_i32 = arith.constant 72 : i32
    %29 = tpu.dynamic_rotate %22 by %c72_i32 dim 1 : vector<8x512xf32>, i32 -> vector<8x512xf32>
    %30 = vector.extract_strided_slice %23 {offsets = [1, 0], sizes = [1, 512], strides = [1, 1]} : vector<27x512xf32> to vector<1x512xf32>
    %31 = vector.broadcast %30 : vector<1x512xf32> to vector<8x512xf32>
    %32 = arith.mulf %29, %31 : vector<8x512xf32>
    %c71_i32 = arith.constant 71 : i32
    %33 = tpu.dynamic_rotate %22 by %c71_i32 dim 1 : vector<8x512xf32>, i32 -> vector<8x512xf32>
    %34 = vector.extract_strided_slice %23 {offsets = [2, 0], sizes = [1, 512], strides = [1, 1]} : vector<27x512xf32> to vector<1x512xf32>
    %35 = vector.broadcast %34 : vector<1x512xf32> to vector<8x512xf32>
    %36 = arith.mulf %33, %35 : vector<8x512xf32>
    %c65_i32 = arith.constant 65 : i32
    %37 = tpu.dynamic_rotate %22 by %c65_i32 dim 1 : vector<8x512xf32>, i32 -> vector<8x512xf32>
    %38 = vector.extract_strided_slice %23 {offsets = [3, 0], sizes = [1, 512], strides = [1, 1]} : vector<27x512xf32> to vector<1x512xf32>
    %39 = vector.broadcast %38 : vector<1x512xf32> to vector<8x512xf32>
    %40 = arith.mulf %37, %39 : vector<8x512xf32>
    %c64_i32 = arith.constant 64 : i32
    %41 = tpu.dynamic_rotate %22 by %c64_i32 dim 1 : vector<8x512xf32>, i32 -> vector<8x512xf32>
    %42 = vector.extract_strided_slice %23 {offsets = [4, 0], sizes = [1, 512], strides = [1, 1]} : vector<27x512xf32> to vector<1x512xf32>
    %43 = vector.broadcast %42 : vector<1x512xf32> to vector<8x512xf32>
    %44 = arith.mulf %41, %43 : vector<8x512xf32>
    %c63_i32 = arith.constant 63 : i32
    %45 = tpu.dynamic_rotate %22 by %c63_i32 dim 1 : vector<8x512xf32>, i32 -> vector<8x512xf32>
    %46 = vector.extract_strided_slice %23 {offsets = [5, 0], sizes = [1, 512], strides = [1, 1]} : vector<27x512xf32> to vector<1x512xf32>
    %47 = vector.broadcast %46 : vector<1x512xf32> to vector<8x512xf32>
    %48 = arith.mulf %45, %47 : vector<8x512xf32>
    %c57_i32 = arith.constant 57 : i32
    %49 = tpu.dynamic_rotate %22 by %c57_i32 dim 1 : vector<8x512xf32>, i32 -> vector<8x512xf32>
    %50 = vector.extract_strided_slice %23 {offsets = [6, 0], sizes = [1, 512], strides = [1, 1]} : vector<27x512xf32> to vector<1x512xf32>
    %51 = vector.broadcast %50 : vector<1x512xf32> to vector<8x512xf32>
    %52 = arith.mulf %49, %51 : vector<8x512xf32>
    %c56_i32 = arith.constant 56 : i32
    %53 = tpu.dynamic_rotate %22 by %c56_i32 dim 1 : vector<8x512xf32>, i32 -> vector<8x512xf32>
    %54 = vector.extract_strided_slice %23 {offsets = [7, 0], sizes = [1, 512], strides = [1, 1]} : vector<27x512xf32> to vector<1x512xf32>
    %55 = vector.broadcast %54 : vector<1x512xf32> to vector<8x512xf32>
    %56 = arith.mulf %53, %55 : vector<8x512xf32>
    %c55_i32 = arith.constant 55 : i32
    %57 = tpu.dynamic_rotate %22 by %c55_i32 dim 1 : vector<8x512xf32>, i32 -> vector<8x512xf32>
    %58 = vector.extract_strided_slice %23 {offsets = [8, 0], sizes = [1, 512], strides = [1, 1]} : vector<27x512xf32> to vector<1x512xf32>
    %59 = vector.broadcast %58 : vector<1x512xf32> to vector<8x512xf32>
    %60 = arith.mulf %57, %59 : vector<8x512xf32>
    %c9_i32 = arith.constant 9 : i32
    %61 = tpu.dynamic_rotate %22 by %c9_i32 dim 1 : vector<8x512xf32>, i32 -> vector<8x512xf32>
    %62 = vector.extract_strided_slice %23 {offsets = [9, 0], sizes = [1, 512], strides = [1, 1]} : vector<27x512xf32> to vector<1x512xf32>
    %63 = vector.broadcast %62 : vector<1x512xf32> to vector<8x512xf32>
    %64 = arith.mulf %61, %63 : vector<8x512xf32>
    %c8_i32 = arith.constant 8 : i32
    %65 = tpu.dynamic_rotate %22 by %c8_i32 dim 1 : vector<8x512xf32>, i32 -> vector<8x512xf32>
    %66 = vector.extract_strided_slice %23 {offsets = [10, 0], sizes = [1, 512], strides = [1, 1]} : vector<27x512xf32> to vector<1x512xf32>
    %67 = vector.broadcast %66 : vector<1x512xf32> to vector<8x512xf32>
    %68 = arith.mulf %65, %67 : vector<8x512xf32>
    %c7_i32 = arith.constant 7 : i32
    %69 = tpu.dynamic_rotate %22 by %c7_i32 dim 1 : vector<8x512xf32>, i32 -> vector<8x512xf32>
    %70 = vector.extract_strided_slice %23 {offsets = [11, 0], sizes = [1, 512], strides = [1, 1]} : vector<27x512xf32> to vector<1x512xf32>
    %71 = vector.broadcast %70 : vector<1x512xf32> to vector<8x512xf32>
    %72 = arith.mulf %69, %71 : vector<8x512xf32>
    %c1_i32 = arith.constant 1 : i32
    %73 = tpu.dynamic_rotate %22 by %c1_i32 dim 1 : vector<8x512xf32>, i32 -> vector<8x512xf32>
    %74 = vector.extract_strided_slice %23 {offsets = [12, 0], sizes = [1, 512], strides = [1, 1]} : vector<27x512xf32> to vector<1x512xf32>
    %75 = vector.broadcast %74 : vector<1x512xf32> to vector<8x512xf32>
    %76 = arith.mulf %73, %75 : vector<8x512xf32>
    %77 = vector.extract_strided_slice %23 {offsets = [13, 0], sizes = [1, 512], strides = [1, 1]} : vector<27x512xf32> to vector<1x512xf32>
    %78 = vector.broadcast %77 : vector<1x512xf32> to vector<8x512xf32>
    %79 = arith.mulf %22, %78 : vector<8x512xf32>
    %c511_i32 = arith.constant 511 : i32
    %80 = tpu.dynamic_rotate %22 by %c511_i32 dim 1 : vector<8x512xf32>, i32 -> vector<8x512xf32>
    %81 = vector.extract_strided_slice %23 {offsets = [14, 0], sizes = [1, 512], strides = [1, 1]} : vector<27x512xf32> to vector<1x512xf32>
    %82 = vector.broadcast %81 : vector<1x512xf32> to vector<8x512xf32>
    %83 = arith.mulf %80, %82 : vector<8x512xf32>
    %c505_i32 = arith.constant 505 : i32
    %84 = tpu.dynamic_rotate %22 by %c505_i32 dim 1 : vector<8x512xf32>, i32 -> vector<8x512xf32>
    %85 = vector.extract_strided_slice %23 {offsets = [15, 0], sizes = [1, 512], strides = [1, 1]} : vector<27x512xf32> to vector<1x512xf32>
    %86 = vector.broadcast %85 : vector<1x512xf32> to vector<8x512xf32>
    %87 = arith.mulf %84, %86 : vector<8x512xf32>
    %c504_i32 = arith.constant 504 : i32
    %88 = tpu.dynamic_rotate %22 by %c504_i32 dim 1 : vector<8x512xf32>, i32 -> vector<8x512xf32>
    %89 = vector.extract_strided_slice %23 {offsets = [16, 0], sizes = [1, 512], strides = [1, 1]} : vector<27x512xf32> to vector<1x512xf32>
    %90 = vector.broadcast %89 : vector<1x512xf32> to vector<8x512xf32>
    %91 = arith.mulf %88, %90 : vector<8x512xf32>
    %c503_i32 = arith.constant 503 : i32
    %92 = tpu.dynamic_rotate %22 by %c503_i32 dim 1 : vector<8x512xf32>, i32 -> vector<8x512xf32>
    %93 = vector.extract_strided_slice %23 {offsets = [17, 0], sizes = [1, 512], strides = [1, 1]} : vector<27x512xf32> to vector<1x512xf32>
    %94 = vector.broadcast %93 : vector<1x512xf32> to vector<8x512xf32>
    %95 = arith.mulf %92, %94 : vector<8x512xf32>
    %c457_i32 = arith.constant 457 : i32
    %96 = tpu.dynamic_rotate %22 by %c457_i32 dim 1 : vector<8x512xf32>, i32 -> vector<8x512xf32>
    %97 = vector.extract_strided_slice %23 {offsets = [18, 0], sizes = [1, 512], strides = [1, 1]} : vector<27x512xf32> to vector<1x512xf32>
    %98 = vector.broadcast %97 : vector<1x512xf32> to vector<8x512xf32>
    %99 = arith.mulf %96, %98 : vector<8x512xf32>
    %c456_i32 = arith.constant 456 : i32
    %100 = tpu.dynamic_rotate %22 by %c456_i32 dim 1 : vector<8x512xf32>, i32 -> vector<8x512xf32>
    %101 = vector.extract_strided_slice %23 {offsets = [19, 0], sizes = [1, 512], strides = [1, 1]} : vector<27x512xf32> to vector<1x512xf32>
    %102 = vector.broadcast %101 : vector<1x512xf32> to vector<8x512xf32>
    %103 = arith.mulf %100, %102 : vector<8x512xf32>
    %c455_i32 = arith.constant 455 : i32
    %104 = tpu.dynamic_rotate %22 by %c455_i32 dim 1 : vector<8x512xf32>, i32 -> vector<8x512xf32>
    %105 = vector.extract_strided_slice %23 {offsets = [20, 0], sizes = [1, 512], strides = [1, 1]} : vector<27x512xf32> to vector<1x512xf32>
    %106 = vector.broadcast %105 : vector<1x512xf32> to vector<8x512xf32>
    %107 = arith.mulf %104, %106 : vector<8x512xf32>
    %c449_i32 = arith.constant 449 : i32
    %108 = tpu.dynamic_rotate %22 by %c449_i32 dim 1 : vector<8x512xf32>, i32 -> vector<8x512xf32>
    %109 = vector.extract_strided_slice %23 {offsets = [21, 0], sizes = [1, 512], strides = [1, 1]} : vector<27x512xf32> to vector<1x512xf32>
    %110 = vector.broadcast %109 : vector<1x512xf32> to vector<8x512xf32>
    %111 = arith.mulf %108, %110 : vector<8x512xf32>
    %c448_i32 = arith.constant 448 : i32
    %112 = tpu.dynamic_rotate %22 by %c448_i32 dim 1 : vector<8x512xf32>, i32 -> vector<8x512xf32>
    %113 = vector.extract_strided_slice %23 {offsets = [22, 0], sizes = [1, 512], strides = [1, 1]} : vector<27x512xf32> to vector<1x512xf32>
    %114 = vector.broadcast %113 : vector<1x512xf32> to vector<8x512xf32>
    %115 = arith.mulf %112, %114 : vector<8x512xf32>
    %c447_i32 = arith.constant 447 : i32
    %116 = tpu.dynamic_rotate %22 by %c447_i32 dim 1 : vector<8x512xf32>, i32 -> vector<8x512xf32>
    %117 = vector.extract_strided_slice %23 {offsets = [23, 0], sizes = [1, 512], strides = [1, 1]} : vector<27x512xf32> to vector<1x512xf32>
    %118 = vector.broadcast %117 : vector<1x512xf32> to vector<8x512xf32>
    %119 = arith.mulf %116, %118 : vector<8x512xf32>
    %c441_i32 = arith.constant 441 : i32
    %120 = tpu.dynamic_rotate %22 by %c441_i32 dim 1 : vector<8x512xf32>, i32 -> vector<8x512xf32>
    %121 = vector.extract_strided_slice %23 {offsets = [24, 0], sizes = [1, 512], strides = [1, 1]} : vector<27x512xf32> to vector<1x512xf32>
    %122 = vector.broadcast %121 : vector<1x512xf32> to vector<8x512xf32>
    %123 = arith.mulf %120, %122 : vector<8x512xf32>
    %c440_i32 = arith.constant 440 : i32
    %124 = tpu.dynamic_rotate %22 by %c440_i32 dim 1 : vector<8x512xf32>, i32 -> vector<8x512xf32>
    %125 = vector.extract_strided_slice %23 {offsets = [25, 0], sizes = [1, 512], strides = [1, 1]} : vector<27x512xf32> to vector<1x512xf32>
    %126 = vector.broadcast %125 : vector<1x512xf32> to vector<8x512xf32>
    %127 = arith.mulf %124, %126 : vector<8x512xf32>
    %c439_i32 = arith.constant 439 : i32
    %128 = tpu.dynamic_rotate %22 by %c439_i32 dim 1 : vector<8x512xf32>, i32 -> vector<8x512xf32>
    %129 = vector.extract_strided_slice %23 {offsets = [26, 0], sizes = [1, 512], strides = [1, 1]} : vector<27x512xf32> to vector<1x512xf32>
    %130 = vector.broadcast %129 : vector<1x512xf32> to vector<8x512xf32>
    %131 = arith.mulf %128, %130 : vector<8x512xf32>
    %132 = tpu.concatenate %28, %32, %36, %40, %44, %48, %52, %56, %60, %64, %68, %72, %76, %79, %83, %87 in 0 : vector<8x512xf32>, vector<8x512xf32>, vector<8x512xf32>, vector<8x512xf32>, vector<8x512xf32>, vector<8x512xf32>, vector<8x512xf32>, vector<8x512xf32>, vector<8x512xf32>, vector<8x512xf32>, vector<8x512xf32>, vector<8x512xf32>, vector<8x512xf32>, vector<8x512xf32>, vector<8x512xf32>, vector<8x512xf32> -> vector<128x512xf32>
    %133 = tpu.concatenate %91, %95, %99, %103, %107, %111, %115, %119, %123, %127, %131 in 0 : vector<8x512xf32>, vector<8x512xf32>, vector<8x512xf32>, vector<8x512xf32>, vector<8x512xf32>, vector<8x512xf32>, vector<8x512xf32>, vector<8x512xf32>, vector<8x512xf32>, vector<8x512xf32>, vector<8x512xf32> -> vector<88x512xf32>
    %134 = tpu.concatenate %132, %133 in 0 : vector<128x512xf32>, vector<88x512xf32> -> vector<216x512xf32>
    %135 = arith.truncf %134 : vector<216x512xf32> to vector<216x512xbf16>
    %c0_12 = arith.constant 0 : index
    %c0_13 = arith.constant 0 : index
    %136 = vector.load %arg6[%c0_12, %c0_13] : memref<8x216xbf16, #tpu.memory_space<vmem>>, vector<8x216xbf16>
    %cst_14 = arith.constant dense<0.000000e+00> : vector<8x512xf32>
    %137 = tpu.matmul %136, %135, %cst_14 {dimension_numbers = #tpu.dot_dimension_numbers<[1], [0], [0], [1], [0, 0, 1, 1], [], []>} : vector<8x216xbf16>, vector<216x512xbf16>, vector<8x512xf32> -> vector<8x512xf32>
    %138 = vector.broadcast %24 : vector<8x1xf32> to vector<8x512xf32>
    %139 = arith.addf %137, %138 : vector<8x512xf32>
    %140 = arith.negf %139 : vector<8x512xf32>
    %141 = math.exp %140 : vector<8x512xf32>
    %cst_15 = arith.constant 1.000000e+00 : f32
    %142 = vector.broadcast %cst_15 : f32 to vector<8x512xf32>
    %143 = arith.addf %142, %141 : vector<8x512xf32>
    %144 = arith.divf %142, %143 : vector<8x512xf32>
    %145 = arith.mulf %139, %144 : vector<8x512xf32>
    %c0_16 = arith.constant 0 : index
    %c0_17 = arith.constant 0 : index
    %146 = vector.load %arg9[%c0_16, %c0_17] : memref<8x1xf32, #tpu.memory_space<vmem>>, vector<8x1xf32>
    %c73_i32_18 = arith.constant 73 : i32
    %147 = tpu.dynamic_rotate %145 by %c73_i32_18 dim 1 : vector<8x512xf32>, i32 -> vector<8x512xf32>
    %148 = vector.extract_strided_slice %23 {offsets = [0, 0], sizes = [1, 512], strides = [1, 1]} : vector<27x512xf32> to vector<1x512xf32>
    %149 = vector.broadcast %148 : vector<1x512xf32> to vector<8x512xf32>
    %150 = arith.mulf %147, %149 : vector<8x512xf32>
    %c72_i32_19 = arith.constant 72 : i32
    %151 = tpu.dynamic_rotate %145 by %c72_i32_19 dim 1 : vector<8x512xf32>, i32 -> vector<8x512xf32>
    %152 = vector.extract_strided_slice %23 {offsets = [1, 0], sizes = [1, 512], strides = [1, 1]} : vector<27x512xf32> to vector<1x512xf32>
    %153 = vector.broadcast %152 : vector<1x512xf32> to vector<8x512xf32>
    %154 = arith.mulf %151, %153 : vector<8x512xf32>
    %c71_i32_20 = arith.constant 71 : i32
    %155 = tpu.dynamic_rotate %145 by %c71_i32_20 dim 1 : vector<8x512xf32>, i32 -> vector<8x512xf32>
    %156 = vector.extract_strided_slice %23 {offsets = [2, 0], sizes = [1, 512], strides = [1, 1]} : vector<27x512xf32> to vector<1x512xf32>
    %157 = vector.broadcast %156 : vector<1x512xf32> to vector<8x512xf32>
    %158 = arith.mulf %155, %157 : vector<8x512xf32>
    %c65_i32_21 = arith.constant 65 : i32
    %159 = tpu.dynamic_rotate %145 by %c65_i32_21 dim 1 : vector<8x512xf32>, i32 -> vector<8x512xf32>
    %160 = vector.extract_strided_slice %23 {offsets = [3, 0], sizes = [1, 512], strides = [1, 1]} : vector<27x512xf32> to vector<1x512xf32>
    %161 = vector.broadcast %160 : vector<1x512xf32> to vector<8x512xf32>
    %162 = arith.mulf %159, %161 : vector<8x512xf32>
    %c64_i32_22 = arith.constant 64 : i32
    %163 = tpu.dynamic_rotate %145 by %c64_i32_22 dim 1 : vector<8x512xf32>, i32 -> vector<8x512xf32>
    %164 = vector.extract_strided_slice %23 {offsets = [4, 0], sizes = [1, 512], strides = [1, 1]} : vector<27x512xf32> to vector<1x512xf32>
    %165 = vector.broadcast %164 : vector<1x512xf32> to vector<8x512xf32>
    %166 = arith.mulf %163, %165 : vector<8x512xf32>
    %c63_i32_23 = arith.constant 63 : i32
    %167 = tpu.dynamic_rotate %145 by %c63_i32_23 dim 1 : vector<8x512xf32>, i32 -> vector<8x512xf32>
    %168 = vector.extract_strided_slice %23 {offsets = [5, 0], sizes = [1, 512], strides = [1, 1]} : vector<27x512xf32> to vector<1x512xf32>
    %169 = vector.broadcast %168 : vector<1x512xf32> to vector<8x512xf32>
    %170 = arith.mulf %167, %169 : vector<8x512xf32>
    %c57_i32_24 = arith.constant 57 : i32
    %171 = tpu.dynamic_rotate %145 by %c57_i32_24 dim 1 : vector<8x512xf32>, i32 -> vector<8x512xf32>
    %172 = vector.extract_strided_slice %23 {offsets = [6, 0], sizes = [1, 512], strides = [1, 1]} : vector<27x512xf32> to vector<1x512xf32>
    %173 = vector.broadcast %172 : vector<1x512xf32> to vector<8x512xf32>
    %174 = arith.mulf %171, %173 : vector<8x512xf32>
    %c56_i32_25 = arith.constant 56 : i32
    %175 = tpu.dynamic_rotate %145 by %c56_i32_25 dim 1 : vector<8x512xf32>, i32 -> vector<8x512xf32>
    %176 = vector.extract_strided_slice %23 {offsets = [7, 0], sizes = [1, 512], strides = [1, 1]} : vector<27x512xf32> to vector<1x512xf32>
    %177 = vector.broadcast %176 : vector<1x512xf32> to vector<8x512xf32>
    %178 = arith.mulf %175, %177 : vector<8x512xf32>
    %c55_i32_26 = arith.constant 55 : i32
    %179 = tpu.dynamic_rotate %145 by %c55_i32_26 dim 1 : vector<8x512xf32>, i32 -> vector<8x512xf32>
    %180 = vector.extract_strided_slice %23 {offsets = [8, 0], sizes = [1, 512], strides = [1, 1]} : vector<27x512xf32> to vector<1x512xf32>
    %181 = vector.broadcast %180 : vector<1x512xf32> to vector<8x512xf32>
    %182 = arith.mulf %179, %181 : vector<8x512xf32>
    %c9_i32_27 = arith.constant 9 : i32
    %183 = tpu.dynamic_rotate %145 by %c9_i32_27 dim 1 : vector<8x512xf32>, i32 -> vector<8x512xf32>
    %184 = vector.extract_strided_slice %23 {offsets = [9, 0], sizes = [1, 512], strides = [1, 1]} : vector<27x512xf32> to vector<1x512xf32>
    %185 = vector.broadcast %184 : vector<1x512xf32> to vector<8x512xf32>
    %186 = arith.mulf %183, %185 : vector<8x512xf32>
    %c8_i32_28 = arith.constant 8 : i32
    %187 = tpu.dynamic_rotate %145 by %c8_i32_28 dim 1 : vector<8x512xf32>, i32 -> vector<8x512xf32>
    %188 = vector.extract_strided_slice %23 {offsets = [10, 0], sizes = [1, 512], strides = [1, 1]} : vector<27x512xf32> to vector<1x512xf32>
    %189 = vector.broadcast %188 : vector<1x512xf32> to vector<8x512xf32>
    %190 = arith.mulf %187, %189 : vector<8x512xf32>
    %c7_i32_29 = arith.constant 7 : i32
    %191 = tpu.dynamic_rotate %145 by %c7_i32_29 dim 1 : vector<8x512xf32>, i32 -> vector<8x512xf32>
    %192 = vector.extract_strided_slice %23 {offsets = [11, 0], sizes = [1, 512], strides = [1, 1]} : vector<27x512xf32> to vector<1x512xf32>
    %193 = vector.broadcast %192 : vector<1x512xf32> to vector<8x512xf32>
    %194 = arith.mulf %191, %193 : vector<8x512xf32>
    %c1_i32_30 = arith.constant 1 : i32
    %195 = tpu.dynamic_rotate %145 by %c1_i32_30 dim 1 : vector<8x512xf32>, i32 -> vector<8x512xf32>
    %196 = vector.extract_strided_slice %23 {offsets = [12, 0], sizes = [1, 512], strides = [1, 1]} : vector<27x512xf32> to vector<1x512xf32>
    %197 = vector.broadcast %196 : vector<1x512xf32> to vector<8x512xf32>
    %198 = arith.mulf %195, %197 : vector<8x512xf32>
    %199 = vector.extract_strided_slice %23 {offsets = [13, 0], sizes = [1, 512], strides = [1, 1]} : vector<27x512xf32> to vector<1x512xf32>
    %200 = vector.broadcast %199 : vector<1x512xf32> to vector<8x512xf32>
    %201 = arith.mulf %145, %200 : vector<8x512xf32>
    %c511_i32_31 = arith.constant 511 : i32
    %202 = tpu.dynamic_rotate %145 by %c511_i32_31 dim 1 : vector<8x512xf32>, i32 -> vector<8x512xf32>
    %203 = vector.extract_strided_slice %23 {offsets = [14, 0], sizes = [1, 512], strides = [1, 1]} : vector<27x512xf32> to vector<1x512xf32>
    %204 = vector.broadcast %203 : vector<1x512xf32> to vector<8x512xf32>
    %205 = arith.mulf %202, %204 : vector<8x512xf32>
    %c505_i32_32 = arith.constant 505 : i32
    %206 = tpu.dynamic_rotate %145 by %c505_i32_32 dim 1 : vector<8x512xf32>, i32 -> vector<8x512xf32>
    %207 = vector.extract_strided_slice %23 {offsets = [15, 0], sizes = [1, 512], strides = [1, 1]} : vector<27x512xf32> to vector<1x512xf32>
    %208 = vector.broadcast %207 : vector<1x512xf32> to vector<8x512xf32>
    %209 = arith.mulf %206, %208 : vector<8x512xf32>
    %c504_i32_33 = arith.constant 504 : i32
    %210 = tpu.dynamic_rotate %145 by %c504_i32_33 dim 1 : vector<8x512xf32>, i32 -> vector<8x512xf32>
    %211 = vector.extract_strided_slice %23 {offsets = [16, 0], sizes = [1, 512], strides = [1, 1]} : vector<27x512xf32> to vector<1x512xf32>
    %212 = vector.broadcast %211 : vector<1x512xf32> to vector<8x512xf32>
    %213 = arith.mulf %210, %212 : vector<8x512xf32>
    %c503_i32_34 = arith.constant 503 : i32
    %214 = tpu.dynamic_rotate %145 by %c503_i32_34 dim 1 : vector<8x512xf32>, i32 -> vector<8x512xf32>
    %215 = vector.extract_strided_slice %23 {offsets = [17, 0], sizes = [1, 512], strides = [1, 1]} : vector<27x512xf32> to vector<1x512xf32>
    %216 = vector.broadcast %215 : vector<1x512xf32> to vector<8x512xf32>
    %217 = arith.mulf %214, %216 : vector<8x512xf32>
    %c457_i32_35 = arith.constant 457 : i32
    %218 = tpu.dynamic_rotate %145 by %c457_i32_35 dim 1 : vector<8x512xf32>, i32 -> vector<8x512xf32>
    %219 = vector.extract_strided_slice %23 {offsets = [18, 0], sizes = [1, 512], strides = [1, 1]} : vector<27x512xf32> to vector<1x512xf32>
    %220 = vector.broadcast %219 : vector<1x512xf32> to vector<8x512xf32>
    %221 = arith.mulf %218, %220 : vector<8x512xf32>
    %c456_i32_36 = arith.constant 456 : i32
    %222 = tpu.dynamic_rotate %145 by %c456_i32_36 dim 1 : vector<8x512xf32>, i32 -> vector<8x512xf32>
    %223 = vector.extract_strided_slice %23 {offsets = [19, 0], sizes = [1, 512], strides = [1, 1]} : vector<27x512xf32> to vector<1x512xf32>
    %224 = vector.broadcast %223 : vector<1x512xf32> to vector<8x512xf32>
    %225 = arith.mulf %222, %224 : vector<8x512xf32>
    %c455_i32_37 = arith.constant 455 : i32
    %226 = tpu.dynamic_rotate %145 by %c455_i32_37 dim 1 : vector<8x512xf32>, i32 -> vector<8x512xf32>
    %227 = vector.extract_strided_slice %23 {offsets = [20, 0], sizes = [1, 512], strides = [1, 1]} : vector<27x512xf32> to vector<1x512xf32>
    %228 = vector.broadcast %227 : vector<1x512xf32> to vector<8x512xf32>
    %229 = arith.mulf %226, %228 : vector<8x512xf32>
    %c449_i32_38 = arith.constant 449 : i32
    %230 = tpu.dynamic_rotate %145 by %c449_i32_38 dim 1 : vector<8x512xf32>, i32 -> vector<8x512xf32>
    %231 = vector.extract_strided_slice %23 {offsets = [21, 0], sizes = [1, 512], strides = [1, 1]} : vector<27x512xf32> to vector<1x512xf32>
    %232 = vector.broadcast %231 : vector<1x512xf32> to vector<8x512xf32>
    %233 = arith.mulf %230, %232 : vector<8x512xf32>
    %c448_i32_39 = arith.constant 448 : i32
    %234 = tpu.dynamic_rotate %145 by %c448_i32_39 dim 1 : vector<8x512xf32>, i32 -> vector<8x512xf32>
    %235 = vector.extract_strided_slice %23 {offsets = [22, 0], sizes = [1, 512], strides = [1, 1]} : vector<27x512xf32> to vector<1x512xf32>
    %236 = vector.broadcast %235 : vector<1x512xf32> to vector<8x512xf32>
    %237 = arith.mulf %234, %236 : vector<8x512xf32>
    %c447_i32_40 = arith.constant 447 : i32
    %238 = tpu.dynamic_rotate %145 by %c447_i32_40 dim 1 : vector<8x512xf32>, i32 -> vector<8x512xf32>
    %239 = vector.extract_strided_slice %23 {offsets = [23, 0], sizes = [1, 512], strides = [1, 1]} : vector<27x512xf32> to vector<1x512xf32>
    %240 = vector.broadcast %239 : vector<1x512xf32> to vector<8x512xf32>
    %241 = arith.mulf %238, %240 : vector<8x512xf32>
    %c441_i32_41 = arith.constant 441 : i32
    %242 = tpu.dynamic_rotate %145 by %c441_i32_41 dim 1 : vector<8x512xf32>, i32 -> vector<8x512xf32>
    %243 = vector.extract_strided_slice %23 {offsets = [24, 0], sizes = [1, 512], strides = [1, 1]} : vector<27x512xf32> to vector<1x512xf32>
    %244 = vector.broadcast %243 : vector<1x512xf32> to vector<8x512xf32>
    %245 = arith.mulf %242, %244 : vector<8x512xf32>
    %c440_i32_42 = arith.constant 440 : i32
    %246 = tpu.dynamic_rotate %145 by %c440_i32_42 dim 1 : vector<8x512xf32>, i32 -> vector<8x512xf32>
    %247 = vector.extract_strided_slice %23 {offsets = [25, 0], sizes = [1, 512], strides = [1, 1]} : vector<27x512xf32> to vector<1x512xf32>
    %248 = vector.broadcast %247 : vector<1x512xf32> to vector<8x512xf32>
    %249 = arith.mulf %246, %248 : vector<8x512xf32>
    %c439_i32_43 = arith.constant 439 : i32
    %250 = tpu.dynamic_rotate %145 by %c439_i32_43 dim 1 : vector<8x512xf32>, i32 -> vector<8x512xf32>
    %251 = vector.extract_strided_slice %23 {offsets = [26, 0], sizes = [1, 512], strides = [1, 1]} : vector<27x512xf32> to vector<1x512xf32>
    %252 = vector.broadcast %251 : vector<1x512xf32> to vector<8x512xf32>
    %253 = arith.mulf %250, %252 : vector<8x512xf32>
    %254 = tpu.concatenate %150, %154, %158, %162, %166, %170, %174, %178, %182, %186, %190, %194, %198, %201, %205, %209 in 0 : vector<8x512xf32>, vector<8x512xf32>, vector<8x512xf32>, vector<8x512xf32>, vector<8x512xf32>, vector<8x512xf32>, vector<8x512xf32>, vector<8x512xf32>, vector<8x512xf32>, vector<8x512xf32>, vector<8x512xf32>, vector<8x512xf32>, vector<8x512xf32>, vector<8x512xf32>, vector<8x512xf32>, vector<8x512xf32> -> vector<128x512xf32>
    %255 = tpu.concatenate %213, %217, %221, %225, %229, %233, %237, %241, %245, %249, %253 in 0 : vector<8x512xf32>, vector<8x512xf32>, vector<8x512xf32>, vector<8x512xf32>, vector<8x512xf32>, vector<8x512xf32>, vector<8x512xf32>, vector<8x512xf32>, vector<8x512xf32>, vector<8x512xf32>, vector<8x512xf32> -> vector<88x512xf32>
    %256 = tpu.concatenate %254, %255 in 0 : vector<128x512xf32>, vector<88x512xf32> -> vector<216x512xf32>
    %257 = arith.truncf %256 : vector<216x512xf32> to vector<216x512xbf16>
    %c0_44 = arith.constant 0 : index
    %c0_45 = arith.constant 0 : index
    %258 = vector.load %arg8[%c0_44, %c0_45] : memref<8x216xbf16, #tpu.memory_space<vmem>>, vector<8x216xbf16>
    %cst_46 = arith.constant dense<0.000000e+00> : vector<8x512xf32>
    %259 = tpu.matmul %258, %257, %cst_46 {dimension_numbers = #tpu.dot_dimension_numbers<[1], [0], [0], [1], [0, 0, 1, 1], [], []>} : vector<8x216xbf16>, vector<216x512xbf16>, vector<8x512xf32> -> vector<8x512xf32>
    %260 = vector.broadcast %146 : vector<8x1xf32> to vector<8x512xf32>
    %261 = arith.addf %259, %260 : vector<8x512xf32>
    %262 = arith.negf %261 : vector<8x512xf32>
    %263 = math.exp %262 : vector<8x512xf32>
    %cst_47 = arith.constant 1.000000e+00 : f32
    %264 = vector.broadcast %cst_47 : f32 to vector<8x512xf32>
    %265 = arith.addf %264, %263 : vector<8x512xf32>
    %266 = arith.divf %264, %265 : vector<8x512xf32>
    %267 = arith.mulf %261, %266 : vector<8x512xf32>
    %c0_48 = arith.constant 0 : index
    %c0_49 = arith.constant 0 : index
    %268 = vector.load %arg10[%c0_48, %c0_49] : memref<8x8xbf16, #tpu.memory_space<vmem>>, vector<8x8xbf16>
    %269 = vector.extract_strided_slice %2 {offsets = [0, 0], sizes = [8, 128], strides = [1, 1]} : vector<9x128xbf16> to vector<8x128xbf16>
    %cst_50 = arith.constant dense<0.000000e+00> : vector<8x128xf32>
    %270 = tpu.matmul %268, %269, %cst_50 {dimension_numbers = #tpu.dot_dimension_numbers<[1], [0], [0], [1], [0, 0, 1, 1], [], []>} : vector<8x8xbf16>, vector<8x128xbf16>, vector<8x128xf32> -> vector<8x128xf32>
    %c0_51 = arith.constant 0 : index
    %c0_52 = arith.constant 0 : index
    %271 = vector.load %arg11[%c0_51, %c0_52] : memref<8x1xf32, #tpu.memory_space<vmem>>, vector<8x1xf32>
    %272 = vector.broadcast %271 : vector<8x1xf32> to vector<8x128xf32>
    %273 = arith.addf %270, %272 : vector<8x128xf32>
    %cst_53 = arith.constant dense<0.000000e+00> : vector<8xf32>
    %274 = vector.multi_reduction <add>, %273, %cst_53 [1] : vector<8x128xf32> to vector<8xf32>
    %275 = vector.shape_cast %274 : vector<8xf32> to vector<8x1xf32>
    %276 = arith.mulf %273, %273 : vector<8x128xf32>
    %cst_54 = arith.constant dense<0.000000e+00> : vector<8xf32>
    %277 = vector.multi_reduction <add>, %276, %cst_54 [1] : vector<8x128xf32> to vector<8xf32>
    %278 = vector.shape_cast %277 : vector<8xf32> to vector<8x1xf32>
    %279 = tpu.iota {dimensions = array<i32: 0>} : vector<8x1xi32>
    %cst_55 = arith.constant 0.000000e+00 : f32
    %280 = vector.broadcast %cst_55 : f32 to vector<8x1xf32>
    %cst_56 = arith.constant 0.000000e+00 : f32
    %281 = vector.broadcast %cst_56 : f32 to vector<8x1xf32>
    %282 = vector.extract_strided_slice %275 {offsets = [0, 0], sizes = [1, 1], strides = [1, 1]} : vector<8x1xf32> to vector<1x1xf32>
    %283 = vector.shape_cast %282 : vector<1x1xf32> to vector<1x1x1xf32>
    %cst_57 = arith.constant dense<0.000000e+00> : vector<1xf32>
    %284 = vector.multi_reduction <add>, %283, %cst_57 [1, 2] : vector<1x1x1xf32> to vector<1xf32>
    %285 = vector.shape_cast %284 : vector<1xf32> to vector<1x1x1xf32>
    %286 = vector.extract %285[0, 0, 0] : f32 from vector<1x1x1xf32>
    %287 = vector.broadcast %286 : f32 to vector<1x1xf32>
    %288 = vector.extract_strided_slice %278 {offsets = [0, 0], sizes = [1, 1], strides = [1, 1]} : vector<8x1xf32> to vector<1x1xf32>
    %289 = vector.shape_cast %288 : vector<1x1xf32> to vector<1x1x1xf32>
    %cst_58 = arith.constant dense<0.000000e+00> : vector<1xf32>
    %290 = vector.multi_reduction <add>, %289, %cst_58 [1, 2] : vector<1x1x1xf32> to vector<1xf32>
    %291 = vector.shape_cast %290 : vector<1xf32> to vector<1x1x1xf32>
    %292 = vector.extract %291[0, 0, 0] : f32 from vector<1x1x1xf32>
    %293 = vector.broadcast %292 : f32 to vector<1x1xf32>
    %cst_59 = arith.constant 1.280000e+02 : f32
    %294 = vector.broadcast %cst_59 : f32 to vector<1x1xf32>
    %295 = arith.divf %287, %294 : vector<1x1xf32>
    %cst_60 = arith.constant 1.280000e+02 : f32
    %296 = vector.broadcast %cst_60 : f32 to vector<1x1xf32>
    %297 = arith.divf %293, %296 : vector<1x1xf32>
    %298 = arith.mulf %295, %295 : vector<1x1xf32>
    %299 = arith.subf %297, %298 : vector<1x1xf32>
    %cst_61 = arith.constant 0.000000e+00 : f32
    %300 = vector.broadcast %cst_61 : f32 to vector<1x1xf32>
    %301 = arith.maximumf %299, %300 : vector<1x1xf32>
    %c0_i32 = arith.constant 0 : i32
    %302 = vector.broadcast %c0_i32 : i32 to vector<8x1xi32>
    %303 = arith.cmpi sge, %279, %302 : vector<8x1xi32>
    %c1_i32_62 = arith.constant 1 : i32
    %304 = vector.broadcast %c1_i32_62 : i32 to vector<8x1xi32>
    %305 = arith.cmpi slt, %279, %304 : vector<8x1xi32>
    %306 = arith.andi %303, %305 : vector<8x1xi1>
    %307 = vector.shape_cast %295 : vector<1x1xf32> to vector<1x1xf32>
    %308 = vector.broadcast %307 : vector<1x1xf32> to vector<8x1xf32>
    %309 = arith.select %306, %308, %280 : vector<8x1xi1>, vector<8x1xf32>
    %310 = vector.shape_cast %301 : vector<1x1xf32> to vector<1x1xf32>
    %311 = vector.broadcast %310 : vector<1x1xf32> to vector<8x1xf32>
    %312 = arith.select %306, %311, %281 : vector<8x1xi1>, vector<8x1xf32>
    %313 = vector.extract_strided_slice %275 {offsets = [1, 0], sizes = [1, 1], strides = [1, 1]} : vector<8x1xf32> to vector<1x1xf32>
    %314 = vector.shape_cast %313 : vector<1x1xf32> to vector<1x1x1xf32>
    %cst_63 = arith.constant dense<0.000000e+00> : vector<1xf32>
    %315 = vector.multi_reduction <add>, %314, %cst_63 [1, 2] : vector<1x1x1xf32> to vector<1xf32>
    %316 = vector.shape_cast %315 : vector<1xf32> to vector<1x1x1xf32>
    %317 = vector.extract %316[0, 0, 0] : f32 from vector<1x1x1xf32>
    %318 = vector.broadcast %317 : f32 to vector<1x1xf32>
    %319 = vector.extract_strided_slice %278 {offsets = [1, 0], sizes = [1, 1], strides = [1, 1]} : vector<8x1xf32> to vector<1x1xf32>
    %320 = vector.shape_cast %319 : vector<1x1xf32> to vector<1x1x1xf32>
    %cst_64 = arith.constant dense<0.000000e+00> : vector<1xf32>
    %321 = vector.multi_reduction <add>, %320, %cst_64 [1, 2] : vector<1x1x1xf32> to vector<1xf32>
    %322 = vector.shape_cast %321 : vector<1xf32> to vector<1x1x1xf32>
    %323 = vector.extract %322[0, 0, 0] : f32 from vector<1x1x1xf32>
    %324 = vector.broadcast %323 : f32 to vector<1x1xf32>
    %cst_65 = arith.constant 1.280000e+02 : f32
    %325 = vector.broadcast %cst_65 : f32 to vector<1x1xf32>
    %326 = arith.divf %318, %325 : vector<1x1xf32>
    %cst_66 = arith.constant 1.280000e+02 : f32
    %327 = vector.broadcast %cst_66 : f32 to vector<1x1xf32>
    %328 = arith.divf %324, %327 : vector<1x1xf32>
    %329 = arith.mulf %326, %326 : vector<1x1xf32>
    %330 = arith.subf %328, %329 : vector<1x1xf32>
    %cst_67 = arith.constant 0.000000e+00 : f32
    %331 = vector.broadcast %cst_67 : f32 to vector<1x1xf32>
    %332 = arith.maximumf %330, %331 : vector<1x1xf32>
    %c1_i32_68 = arith.constant 1 : i32
    %333 = vector.broadcast %c1_i32_68 : i32 to vector<8x1xi32>
    %334 = arith.cmpi sge, %279, %333 : vector<8x1xi32>
    %c2_i32 = arith.constant 2 : i32
    %335 = vector.broadcast %c2_i32 : i32 to vector<8x1xi32>
    %336 = arith.cmpi slt, %279, %335 : vector<8x1xi32>
    %337 = arith.andi %334, %336 : vector<8x1xi1>
    %338 = vector.shape_cast %326 : vector<1x1xf32> to vector<1x1xf32>
    %339 = vector.broadcast %338 : vector<1x1xf32> to vector<8x1xf32>
    %340 = arith.select %337, %339, %309 : vector<8x1xi1>, vector<8x1xf32>
    %341 = vector.shape_cast %332 : vector<1x1xf32> to vector<1x1xf32>
    %342 = vector.broadcast %341 : vector<1x1xf32> to vector<8x1xf32>
    %343 = arith.select %337, %342, %312 : vector<8x1xi1>, vector<8x1xf32>
    %344 = vector.extract_strided_slice %275 {offsets = [2, 0], sizes = [1, 1], strides = [1, 1]} : vector<8x1xf32> to vector<1x1xf32>
    %345 = vector.shape_cast %344 : vector<1x1xf32> to vector<1x1x1xf32>
    %cst_69 = arith.constant dense<0.000000e+00> : vector<1xf32>
    %346 = vector.multi_reduction <add>, %345, %cst_69 [1, 2] : vector<1x1x1xf32> to vector<1xf32>
    %347 = vector.shape_cast %346 : vector<1xf32> to vector<1x1x1xf32>
    %348 = vector.extract %347[0, 0, 0] : f32 from vector<1x1x1xf32>
    %349 = vector.broadcast %348 : f32 to vector<1x1xf32>
    %350 = vector.extract_strided_slice %278 {offsets = [2, 0], sizes = [1, 1], strides = [1, 1]} : vector<8x1xf32> to vector<1x1xf32>
    %351 = vector.shape_cast %350 : vector<1x1xf32> to vector<1x1x1xf32>
    %cst_70 = arith.constant dense<0.000000e+00> : vector<1xf32>
    %352 = vector.multi_reduction <add>, %351, %cst_70 [1, 2] : vector<1x1x1xf32> to vector<1xf32>
    %353 = vector.shape_cast %352 : vector<1xf32> to vector<1x1x1xf32>
    %354 = vector.extract %353[0, 0, 0] : f32 from vector<1x1x1xf32>
    %355 = vector.broadcast %354 : f32 to vector<1x1xf32>
    %cst_71 = arith.constant 1.280000e+02 : f32
    %356 = vector.broadcast %cst_71 : f32 to vector<1x1xf32>
    %357 = arith.divf %349, %356 : vector<1x1xf32>
    %cst_72 = arith.constant 1.280000e+02 : f32
    %358 = vector.broadcast %cst_72 : f32 to vector<1x1xf32>
    %359 = arith.divf %355, %358 : vector<1x1xf32>
    %360 = arith.mulf %357, %357 : vector<1x1xf32>
    %361 = arith.subf %359, %360 : vector<1x1xf32>
    %cst_73 = arith.constant 0.000000e+00 : f32
    %362 = vector.broadcast %cst_73 : f32 to vector<1x1xf32>
    %363 = arith.maximumf %361, %362 : vector<1x1xf32>
    %c2_i32_74 = arith.constant 2 : i32
    %364 = vector.broadcast %c2_i32_74 : i32 to vector<8x1xi32>
    %365 = arith.cmpi sge, %279, %364 : vector<8x1xi32>
    %c3_i32 = arith.constant 3 : i32
    %366 = vector.broadcast %c3_i32 : i32 to vector<8x1xi32>
    %367 = arith.cmpi slt, %279, %366 : vector<8x1xi32>
    %368 = arith.andi %365, %367 : vector<8x1xi1>
    %369 = vector.shape_cast %357 : vector<1x1xf32> to vector<1x1xf32>
    %370 = vector.broadcast %369 : vector<1x1xf32> to vector<8x1xf32>
    %371 = arith.select %368, %370, %340 : vector<8x1xi1>, vector<8x1xf32>
    %372 = vector.shape_cast %363 : vector<1x1xf32> to vector<1x1xf32>
    %373 = vector.broadcast %372 : vector<1x1xf32> to vector<8x1xf32>
    %374 = arith.select %368, %373, %343 : vector<8x1xi1>, vector<8x1xf32>
    %375 = vector.extract_strided_slice %275 {offsets = [3, 0], sizes = [1, 1], strides = [1, 1]} : vector<8x1xf32> to vector<1x1xf32>
    %376 = vector.shape_cast %375 : vector<1x1xf32> to vector<1x1x1xf32>
    %cst_75 = arith.constant dense<0.000000e+00> : vector<1xf32>
    %377 = vector.multi_reduction <add>, %376, %cst_75 [1, 2] : vector<1x1x1xf32> to vector<1xf32>
    %378 = vector.shape_cast %377 : vector<1xf32> to vector<1x1x1xf32>
    %379 = vector.extract %378[0, 0, 0] : f32 from vector<1x1x1xf32>
    %380 = vector.broadcast %379 : f32 to vector<1x1xf32>
    %381 = vector.extract_strided_slice %278 {offsets = [3, 0], sizes = [1, 1], strides = [1, 1]} : vector<8x1xf32> to vector<1x1xf32>
    %382 = vector.shape_cast %381 : vector<1x1xf32> to vector<1x1x1xf32>
    %cst_76 = arith.constant dense<0.000000e+00> : vector<1xf32>
    %383 = vector.multi_reduction <add>, %382, %cst_76 [1, 2] : vector<1x1x1xf32> to vector<1xf32>
    %384 = vector.shape_cast %383 : vector<1xf32> to vector<1x1x1xf32>
    %385 = vector.extract %384[0, 0, 0] : f32 from vector<1x1x1xf32>
    %386 = vector.broadcast %385 : f32 to vector<1x1xf32>
    %cst_77 = arith.constant 1.280000e+02 : f32
    %387 = vector.broadcast %cst_77 : f32 to vector<1x1xf32>
    %388 = arith.divf %380, %387 : vector<1x1xf32>
    %cst_78 = arith.constant 1.280000e+02 : f32
    %389 = vector.broadcast %cst_78 : f32 to vector<1x1xf32>
    %390 = arith.divf %386, %389 : vector<1x1xf32>
    %391 = arith.mulf %388, %388 : vector<1x1xf32>
    %392 = arith.subf %390, %391 : vector<1x1xf32>
    %cst_79 = arith.constant 0.000000e+00 : f32
    %393 = vector.broadcast %cst_79 : f32 to vector<1x1xf32>
    %394 = arith.maximumf %392, %393 : vector<1x1xf32>
    %c3_i32_80 = arith.constant 3 : i32
    %395 = vector.broadcast %c3_i32_80 : i32 to vector<8x1xi32>
    %396 = arith.cmpi sge, %279, %395 : vector<8x1xi32>
    %c4_i32 = arith.constant 4 : i32
    %397 = vector.broadcast %c4_i32 : i32 to vector<8x1xi32>
    %398 = arith.cmpi slt, %279, %397 : vector<8x1xi32>
    %399 = arith.andi %396, %398 : vector<8x1xi1>
    %400 = vector.shape_cast %388 : vector<1x1xf32> to vector<1x1xf32>
    %401 = vector.broadcast %400 : vector<1x1xf32> to vector<8x1xf32>
    %402 = arith.select %399, %401, %371 : vector<8x1xi1>, vector<8x1xf32>
    %403 = vector.shape_cast %394 : vector<1x1xf32> to vector<1x1xf32>
    %404 = vector.broadcast %403 : vector<1x1xf32> to vector<8x1xf32>
    %405 = arith.select %399, %404, %374 : vector<8x1xi1>, vector<8x1xf32>
    %406 = vector.extract_strided_slice %275 {offsets = [4, 0], sizes = [1, 1], strides = [1, 1]} : vector<8x1xf32> to vector<1x1xf32>
    %407 = vector.shape_cast %406 : vector<1x1xf32> to vector<1x1x1xf32>
    %cst_81 = arith.constant dense<0.000000e+00> : vector<1xf32>
    %408 = vector.multi_reduction <add>, %407, %cst_81 [1, 2] : vector<1x1x1xf32> to vector<1xf32>
    %409 = vector.shape_cast %408 : vector<1xf32> to vector<1x1x1xf32>
    %410 = vector.extract %409[0, 0, 0] : f32 from vector<1x1x1xf32>
    %411 = vector.broadcast %410 : f32 to vector<1x1xf32>
    %412 = vector.extract_strided_slice %278 {offsets = [4, 0], sizes = [1, 1], strides = [1, 1]} : vector<8x1xf32> to vector<1x1xf32>
    %413 = vector.shape_cast %412 : vector<1x1xf32> to vector<1x1x1xf32>
    %cst_82 = arith.constant dense<0.000000e+00> : vector<1xf32>
    %414 = vector.multi_reduction <add>, %413, %cst_82 [1, 2] : vector<1x1x1xf32> to vector<1xf32>
    %415 = vector.shape_cast %414 : vector<1xf32> to vector<1x1x1xf32>
    %416 = vector.extract %415[0, 0, 0] : f32 from vector<1x1x1xf32>
    %417 = vector.broadcast %416 : f32 to vector<1x1xf32>
    %cst_83 = arith.constant 1.280000e+02 : f32
    %418 = vector.broadcast %cst_83 : f32 to vector<1x1xf32>
    %419 = arith.divf %411, %418 : vector<1x1xf32>
    %cst_84 = arith.constant 1.280000e+02 : f32
    %420 = vector.broadcast %cst_84 : f32 to vector<1x1xf32>
    %421 = arith.divf %417, %420 : vector<1x1xf32>
    %422 = arith.mulf %419, %419 : vector<1x1xf32>
    %423 = arith.subf %421, %422 : vector<1x1xf32>
    %cst_85 = arith.constant 0.000000e+00 : f32
    %424 = vector.broadcast %cst_85 : f32 to vector<1x1xf32>
    %425 = arith.maximumf %423, %424 : vector<1x1xf32>
    %c4_i32_86 = arith.constant 4 : i32
    %426 = vector.broadcast %c4_i32_86 : i32 to vector<8x1xi32>
    %427 = arith.cmpi sge, %279, %426 : vector<8x1xi32>
    %c5_i32 = arith.constant 5 : i32
    %428 = vector.broadcast %c5_i32 : i32 to vector<8x1xi32>
    %429 = arith.cmpi slt, %279, %428 : vector<8x1xi32>
    %430 = arith.andi %427, %429 : vector<8x1xi1>
    %431 = vector.shape_cast %419 : vector<1x1xf32> to vector<1x1xf32>
    %432 = vector.broadcast %431 : vector<1x1xf32> to vector<8x1xf32>
    %433 = arith.select %430, %432, %402 : vector<8x1xi1>, vector<8x1xf32>
    %434 = vector.shape_cast %425 : vector<1x1xf32> to vector<1x1xf32>
    %435 = vector.broadcast %434 : vector<1x1xf32> to vector<8x1xf32>
    %436 = arith.select %430, %435, %405 : vector<8x1xi1>, vector<8x1xf32>
    %437 = vector.extract_strided_slice %275 {offsets = [5, 0], sizes = [1, 1], strides = [1, 1]} : vector<8x1xf32> to vector<1x1xf32>
    %438 = vector.shape_cast %437 : vector<1x1xf32> to vector<1x1x1xf32>
    %cst_87 = arith.constant dense<0.000000e+00> : vector<1xf32>
    %439 = vector.multi_reduction <add>, %438, %cst_87 [1, 2] : vector<1x1x1xf32> to vector<1xf32>
    %440 = vector.shape_cast %439 : vector<1xf32> to vector<1x1x1xf32>
    %441 = vector.extract %440[0, 0, 0] : f32 from vector<1x1x1xf32>
    %442 = vector.broadcast %441 : f32 to vector<1x1xf32>
    %443 = vector.extract_strided_slice %278 {offsets = [5, 0], sizes = [1, 1], strides = [1, 1]} : vector<8x1xf32> to vector<1x1xf32>
    %444 = vector.shape_cast %443 : vector<1x1xf32> to vector<1x1x1xf32>
    %cst_88 = arith.constant dense<0.000000e+00> : vector<1xf32>
    %445 = vector.multi_reduction <add>, %444, %cst_88 [1, 2] : vector<1x1x1xf32> to vector<1xf32>
    %446 = vector.shape_cast %445 : vector<1xf32> to vector<1x1x1xf32>
    %447 = vector.extract %446[0, 0, 0] : f32 from vector<1x1x1xf32>
    %448 = vector.broadcast %447 : f32 to vector<1x1xf32>
    %cst_89 = arith.constant 1.280000e+02 : f32
    %449 = vector.broadcast %cst_89 : f32 to vector<1x1xf32>
    %450 = arith.divf %442, %449 : vector<1x1xf32>
    %cst_90 = arith.constant 1.280000e+02 : f32
    %451 = vector.broadcast %cst_90 : f32 to vector<1x1xf32>
    %452 = arith.divf %448, %451 : vector<1x1xf32>
    %453 = arith.mulf %450, %450 : vector<1x1xf32>
    %454 = arith.subf %452, %453 : vector<1x1xf32>
    %cst_91 = arith.constant 0.000000e+00 : f32
    %455 = vector.broadcast %cst_91 : f32 to vector<1x1xf32>
    %456 = arith.maximumf %454, %455 : vector<1x1xf32>
    %c5_i32_92 = arith.constant 5 : i32
    %457 = vector.broadcast %c5_i32_92 : i32 to vector<8x1xi32>
    %458 = arith.cmpi sge, %279, %457 : vector<8x1xi32>
    %c6_i32 = arith.constant 6 : i32
    %459 = vector.broadcast %c6_i32 : i32 to vector<8x1xi32>
    %460 = arith.cmpi slt, %279, %459 : vector<8x1xi32>
    %461 = arith.andi %458, %460 : vector<8x1xi1>
    %462 = vector.shape_cast %450 : vector<1x1xf32> to vector<1x1xf32>
    %463 = vector.broadcast %462 : vector<1x1xf32> to vector<8x1xf32>
    %464 = arith.select %461, %463, %433 : vector<8x1xi1>, vector<8x1xf32>
    %465 = vector.shape_cast %456 : vector<1x1xf32> to vector<1x1xf32>
    %466 = vector.broadcast %465 : vector<1x1xf32> to vector<8x1xf32>
    %467 = arith.select %461, %466, %436 : vector<8x1xi1>, vector<8x1xf32>
    %468 = vector.extract_strided_slice %275 {offsets = [6, 0], sizes = [1, 1], strides = [1, 1]} : vector<8x1xf32> to vector<1x1xf32>
    %469 = vector.shape_cast %468 : vector<1x1xf32> to vector<1x1x1xf32>
    %cst_93 = arith.constant dense<0.000000e+00> : vector<1xf32>
    %470 = vector.multi_reduction <add>, %469, %cst_93 [1, 2] : vector<1x1x1xf32> to vector<1xf32>
    %471 = vector.shape_cast %470 : vector<1xf32> to vector<1x1x1xf32>
    %472 = vector.extract %471[0, 0, 0] : f32 from vector<1x1x1xf32>
    %473 = vector.broadcast %472 : f32 to vector<1x1xf32>
    %474 = vector.extract_strided_slice %278 {offsets = [6, 0], sizes = [1, 1], strides = [1, 1]} : vector<8x1xf32> to vector<1x1xf32>
    %475 = vector.shape_cast %474 : vector<1x1xf32> to vector<1x1x1xf32>
    %cst_94 = arith.constant dense<0.000000e+00> : vector<1xf32>
    %476 = vector.multi_reduction <add>, %475, %cst_94 [1, 2] : vector<1x1x1xf32> to vector<1xf32>
    %477 = vector.shape_cast %476 : vector<1xf32> to vector<1x1x1xf32>
    %478 = vector.extract %477[0, 0, 0] : f32 from vector<1x1x1xf32>
    %479 = vector.broadcast %478 : f32 to vector<1x1xf32>
    %cst_95 = arith.constant 1.280000e+02 : f32
    %480 = vector.broadcast %cst_95 : f32 to vector<1x1xf32>
    %481 = arith.divf %473, %480 : vector<1x1xf32>
    %cst_96 = arith.constant 1.280000e+02 : f32
    %482 = vector.broadcast %cst_96 : f32 to vector<1x1xf32>
    %483 = arith.divf %479, %482 : vector<1x1xf32>
    %484 = arith.mulf %481, %481 : vector<1x1xf32>
    %485 = arith.subf %483, %484 : vector<1x1xf32>
    %cst_97 = arith.constant 0.000000e+00 : f32
    %486 = vector.broadcast %cst_97 : f32 to vector<1x1xf32>
    %487 = arith.maximumf %485, %486 : vector<1x1xf32>
    %c6_i32_98 = arith.constant 6 : i32
    %488 = vector.broadcast %c6_i32_98 : i32 to vector<8x1xi32>
    %489 = arith.cmpi sge, %279, %488 : vector<8x1xi32>
    %c7_i32_99 = arith.constant 7 : i32
    %490 = vector.broadcast %c7_i32_99 : i32 to vector<8x1xi32>
    %491 = arith.cmpi slt, %279, %490 : vector<8x1xi32>
    %492 = arith.andi %489, %491 : vector<8x1xi1>
    %493 = vector.shape_cast %481 : vector<1x1xf32> to vector<1x1xf32>
    %494 = vector.broadcast %493 : vector<1x1xf32> to vector<8x1xf32>
    %495 = arith.select %492, %494, %464 : vector<8x1xi1>, vector<8x1xf32>
    %496 = vector.shape_cast %487 : vector<1x1xf32> to vector<1x1xf32>
    %497 = vector.broadcast %496 : vector<1x1xf32> to vector<8x1xf32>
    %498 = arith.select %492, %497, %467 : vector<8x1xi1>, vector<8x1xf32>
    %499 = vector.extract_strided_slice %275 {offsets = [7, 0], sizes = [1, 1], strides = [1, 1]} : vector<8x1xf32> to vector<1x1xf32>
    %500 = vector.shape_cast %499 : vector<1x1xf32> to vector<1x1x1xf32>
    %cst_100 = arith.constant dense<0.000000e+00> : vector<1xf32>
    %501 = vector.multi_reduction <add>, %500, %cst_100 [1, 2] : vector<1x1x1xf32> to vector<1xf32>
    %502 = vector.shape_cast %501 : vector<1xf32> to vector<1x1x1xf32>
    %503 = vector.extract %502[0, 0, 0] : f32 from vector<1x1x1xf32>
    %504 = vector.broadcast %503 : f32 to vector<1x1xf32>
    %505 = vector.extract_strided_slice %278 {offsets = [7, 0], sizes = [1, 1], strides = [1, 1]} : vector<8x1xf32> to vector<1x1xf32>
    %506 = vector.shape_cast %505 : vector<1x1xf32> to vector<1x1x1xf32>
    %cst_101 = arith.constant dense<0.000000e+00> : vector<1xf32>
    %507 = vector.multi_reduction <add>, %506, %cst_101 [1, 2] : vector<1x1x1xf32> to vector<1xf32>
    %508 = vector.shape_cast %507 : vector<1xf32> to vector<1x1x1xf32>
    %509 = vector.extract %508[0, 0, 0] : f32 from vector<1x1x1xf32>
    %510 = vector.broadcast %509 : f32 to vector<1x1xf32>
    %cst_102 = arith.constant 1.280000e+02 : f32
    %511 = vector.broadcast %cst_102 : f32 to vector<1x1xf32>
    %512 = arith.divf %504, %511 : vector<1x1xf32>
    %cst_103 = arith.constant 1.280000e+02 : f32
    %513 = vector.broadcast %cst_103 : f32 to vector<1x1xf32>
    %514 = arith.divf %510, %513 : vector<1x1xf32>
    %515 = arith.mulf %512, %512 : vector<1x1xf32>
    %516 = arith.subf %514, %515 : vector<1x1xf32>
    %cst_104 = arith.constant 0.000000e+00 : f32
    %517 = vector.broadcast %cst_104 : f32 to vector<1x1xf32>
    %518 = arith.maximumf %516, %517 : vector<1x1xf32>
    %c7_i32_105 = arith.constant 7 : i32
    %519 = vector.broadcast %c7_i32_105 : i32 to vector<8x1xi32>
    %520 = arith.cmpi sge, %279, %519 : vector<8x1xi32>
    %c8_i32_106 = arith.constant 8 : i32
    %521 = vector.broadcast %c8_i32_106 : i32 to vector<8x1xi32>
    %522 = arith.cmpi slt, %279, %521 : vector<8x1xi32>
    %523 = arith.andi %520, %522 : vector<8x1xi1>
    %524 = vector.shape_cast %512 : vector<1x1xf32> to vector<1x1xf32>
    %525 = vector.broadcast %524 : vector<1x1xf32> to vector<8x1xf32>
    %526 = arith.select %523, %525, %495 : vector<8x1xi1>, vector<8x1xf32>
    %527 = vector.shape_cast %518 : vector<1x1xf32> to vector<1x1xf32>
    %528 = vector.broadcast %527 : vector<1x1xf32> to vector<8x1xf32>
    %529 = arith.select %523, %528, %498 : vector<8x1xi1>, vector<8x1xf32>
    %530 = vector.broadcast %526 : vector<8x1xf32> to vector<8x128xf32>
    %531 = arith.subf %273, %530 : vector<8x128xf32>
    %cst_107 = arith.constant 9.99999974E-6 : f32
    %532 = vector.broadcast %cst_107 : f32 to vector<8x1xf32>
    %533 = arith.addf %529, %532 : vector<8x1xf32>
    %534 = math.rsqrt %533 : vector<8x1xf32>
    %535 = vector.broadcast %534 : vector<8x1xf32> to vector<8x128xf32>
    %536 = arith.mulf %531, %535 : vector<8x128xf32>
    %c0_108 = arith.constant 0 : index
    %c0_109 = arith.constant 0 : index
    %537 = vector.load %arg12[%c0_108, %c0_109] : memref<8x1xf32, #tpu.memory_space<vmem>>, vector<8x1xf32>
    %538 = vector.broadcast %537 : vector<8x1xf32> to vector<8x128xf32>
    %539 = arith.mulf %536, %538 : vector<8x128xf32>
    %c0_110 = arith.constant 0 : index
    %c0_111 = arith.constant 0 : index
    %540 = vector.load %arg13[%c0_110, %c0_111] : memref<8x1xf32, #tpu.memory_space<vmem>>, vector<8x1xf32>
    %541 = vector.broadcast %540 : vector<8x1xf32> to vector<8x128xf32>
    %542 = arith.addf %539, %541 : vector<8x128xf32>
    %543 = arith.negf %542 : vector<8x128xf32>
    %544 = math.exp %543 : vector<8x128xf32>
    %cst_112 = arith.constant 1.000000e+00 : f32
    %545 = vector.broadcast %cst_112 : f32 to vector<8x128xf32>
    %546 = arith.addf %545, %544 : vector<8x128xf32>
    %547 = arith.divf %545, %546 : vector<8x128xf32>
    %548 = arith.mulf %542, %547 : vector<8x128xf32>
    %c511_i32_113 = arith.constant 511 : i32
    %549 = tpu.dynamic_rotate %267 by %c511_i32_113 dim 1 : vector<8x512xf32>, i32 -> vector<8x512xf32>
    %c504_i32_114 = arith.constant 504 : i32
    %550 = tpu.dynamic_rotate %267 by %c504_i32_114 dim 1 : vector<8x512xf32>, i32 -> vector<8x512xf32>
    %c503_i32_115 = arith.constant 503 : i32
    %551 = tpu.dynamic_rotate %267 by %c503_i32_115 dim 1 : vector<8x512xf32>, i32 -> vector<8x512xf32>
    %c448_i32_116 = arith.constant 448 : i32
    %552 = tpu.dynamic_rotate %267 by %c448_i32_116 dim 1 : vector<8x512xf32>, i32 -> vector<8x512xf32>
    %c447_i32_117 = arith.constant 447 : i32
    %553 = tpu.dynamic_rotate %267 by %c447_i32_117 dim 1 : vector<8x512xf32>, i32 -> vector<8x512xf32>
    %c440_i32_118 = arith.constant 440 : i32
    %554 = tpu.dynamic_rotate %267 by %c440_i32_118 dim 1 : vector<8x512xf32>, i32 -> vector<8x512xf32>
    %c439_i32_119 = arith.constant 439 : i32
    %555 = tpu.dynamic_rotate %267 by %c439_i32_119 dim 1 : vector<8x512xf32>, i32 -> vector<8x512xf32>
    %556 = tpu.concatenate %267, %549, %550, %551, %552, %553, %554, %555 in 0 : vector<8x512xf32>, vector<8x512xf32>, vector<8x512xf32>, vector<8x512xf32>, vector<8x512xf32>, vector<8x512xf32>, vector<8x512xf32>, vector<8x512xf32> -> vector<64x512xf32>
    %557 = arith.truncf %556 : vector<64x512xf32> to vector<64x512xbf16>
    %558 = tpu.iota {dimensions = array<i32: 0>} : vector<512x128xi32>
    %c0_120 = arith.constant 0 : index
    %c0_121 = arith.constant 0 : index
    %c0_122 = arith.constant 0 : index
    %559 = vector.load %arg3[%c0_120, %c0_121, %c0_122] : memref<1x1x128xi32, #tpu.memory_space<vmem>>, vector<1x1x128xi32>
    %560 = vector.shape_cast %559 : vector<1x1x128xi32> to vector<1x128xi32>
    %561 = vector.broadcast %560 : vector<1x128xi32> to vector<512x128xi32>
    %562 = arith.cmpi eq, %558, %561 : vector<512x128xi32>
    %563 = arith.extui %562 : vector<512x128xi1> to vector<512x128xi32>
    %564 = arith.sitofp %563 : vector<512x128xi32> to vector<512x128xf32>
    %565 = arith.truncf %564 : vector<512x128xf32> to vector<512x128xbf16>
    %cst_123 = arith.constant dense<0.000000e+00> : vector<64x128xf32>
    %566 = tpu.matmul %557, %565, %cst_123 {dimension_numbers = #tpu.dot_dimension_numbers<[1], [0], [0], [1], [0, 0, 1, 1], [], []>} : vector<64x512xbf16>, vector<512x128xbf16>, vector<64x128xf32> -> vector<64x128xf32>
    %cst_124 = arith.constant 0.000000e+00 : f32
    %567 = vector.broadcast %cst_124 : f32 to vector<8x128xf32>
    %568 = vector.extract_strided_slice %566 {offsets = [0, 0], sizes = [8, 128], strides = [1, 1]} : vector<64x128xf32> to vector<8x128xf32>
    %c0_125 = arith.constant 0 : index
    %c0_126 = arith.constant 0 : index
    %c0_127 = arith.constant 0 : index
    %569 = vector.load %arg4[%c0_125, %c0_126, %c0_127] : memref<1x8x128xf32, #tpu.memory_space<vmem>>, vector<1x1x128xf32>
    %570 = vector.shape_cast %569 : vector<1x1x128xf32> to vector<1x128xf32>
    %571 = vector.broadcast %570 : vector<1x128xf32> to vector<8x128xf32>
    %572 = arith.mulf %568, %571 : vector<8x128xf32>
    %573 = arith.addf %567, %572 : vector<8x128xf32>
    %574 = vector.extract_strided_slice %566 {offsets = [8, 0], sizes = [8, 128], strides = [1, 1]} : vector<64x128xf32> to vector<8x128xf32>
    %c0_128 = arith.constant 0 : index
    %c1 = arith.constant 1 : index
    %c0_129 = arith.constant 0 : index
    %575 = vector.load %arg4[%c0_128, %c1, %c0_129] : memref<1x8x128xf32, #tpu.memory_space<vmem>>, vector<1x1x128xf32>
    %576 = vector.shape_cast %575 : vector<1x1x128xf32> to vector<1x128xf32>
    %577 = vector.broadcast %576 : vector<1x128xf32> to vector<8x128xf32>
    %578 = arith.mulf %574, %577 : vector<8x128xf32>
    %579 = arith.addf %573, %578 : vector<8x128xf32>
    %580 = vector.extract_strided_slice %566 {offsets = [16, 0], sizes = [8, 128], strides = [1, 1]} : vector<64x128xf32> to vector<8x128xf32>
    %c0_130 = arith.constant 0 : index
    %c2 = arith.constant 2 : index
    %c0_131 = arith.constant 0 : index
    %581 = vector.load %arg4[%c0_130, %c2, %c0_131] : memref<1x8x128xf32, #tpu.memory_space<vmem>>, vector<1x1x128xf32>
    %582 = vector.shape_cast %581 : vector<1x1x128xf32> to vector<1x128xf32>
    %583 = vector.broadcast %582 : vector<1x128xf32> to vector<8x128xf32>
    %584 = arith.mulf %580, %583 : vector<8x128xf32>
    %585 = arith.addf %579, %584 : vector<8x128xf32>
    %586 = vector.extract_strided_slice %566 {offsets = [24, 0], sizes = [8, 128], strides = [1, 1]} : vector<64x128xf32> to vector<8x128xf32>
    %c0_132 = arith.constant 0 : index
    %c3 = arith.constant 3 : index
    %c0_133 = arith.constant 0 : index
    %587 = vector.load %arg4[%c0_132, %c3, %c0_133] : memref<1x8x128xf32, #tpu.memory_space<vmem>>, vector<1x1x128xf32>
    %588 = vector.shape_cast %587 : vector<1x1x128xf32> to vector<1x128xf32>
    %589 = vector.broadcast %588 : vector<1x128xf32> to vector<8x128xf32>
    %590 = arith.mulf %586, %589 : vector<8x128xf32>
    %591 = arith.addf %585, %590 : vector<8x128xf32>
    %592 = vector.extract_strided_slice %566 {offsets = [32, 0], sizes = [8, 128], strides = [1, 1]} : vector<64x128xf32> to vector<8x128xf32>
    %c0_134 = arith.constant 0 : index
    %c4 = arith.constant 4 : index
    %c0_135 = arith.constant 0 : index
    %593 = vector.load %arg4[%c0_134, %c4, %c0_135] : memref<1x8x128xf32, #tpu.memory_space<vmem>>, vector<1x1x128xf32>
    %594 = vector.shape_cast %593 : vector<1x1x128xf32> to vector<1x128xf32>
    %595 = vector.broadcast %594 : vector<1x128xf32> to vector<8x128xf32>
    %596 = arith.mulf %592, %595 : vector<8x128xf32>
    %597 = arith.addf %591, %596 : vector<8x128xf32>
    %598 = vector.extract_strided_slice %566 {offsets = [40, 0], sizes = [8, 128], strides = [1, 1]} : vector<64x128xf32> to vector<8x128xf32>
    %c0_136 = arith.constant 0 : index
    %c5 = arith.constant 5 : index
    %c0_137 = arith.constant 0 : index
    %599 = vector.load %arg4[%c0_136, %c5, %c0_137] : memref<1x8x128xf32, #tpu.memory_space<vmem>>, vector<1x1x128xf32>
    %600 = vector.shape_cast %599 : vector<1x1x128xf32> to vector<1x128xf32>
    %601 = vector.broadcast %600 : vector<1x128xf32> to vector<8x128xf32>
    %602 = arith.mulf %598, %601 : vector<8x128xf32>
    %603 = arith.addf %597, %602 : vector<8x128xf32>
    %604 = vector.extract_strided_slice %566 {offsets = [48, 0], sizes = [8, 128], strides = [1, 1]} : vector<64x128xf32> to vector<8x128xf32>
    %c0_138 = arith.constant 0 : index
    %c6 = arith.constant 6 : index
    %c0_139 = arith.constant 0 : index
    %605 = vector.load %arg4[%c0_138, %c6, %c0_139] : memref<1x8x128xf32, #tpu.memory_space<vmem>>, vector<1x1x128xf32>
    %606 = vector.shape_cast %605 : vector<1x1x128xf32> to vector<1x128xf32>
    %607 = vector.broadcast %606 : vector<1x128xf32> to vector<8x128xf32>
    %608 = arith.mulf %604, %607 : vector<8x128xf32>
    %609 = arith.addf %603, %608 : vector<8x128xf32>
    %610 = vector.extract_strided_slice %566 {offsets = [56, 0], sizes = [8, 128], strides = [1, 1]} : vector<64x128xf32> to vector<8x128xf32>
    %c0_140 = arith.constant 0 : index
    %c7 = arith.constant 7 : index
    %c0_141 = arith.constant 0 : index
    %611 = vector.load %arg4[%c0_140, %c7, %c0_141] : memref<1x8x128xf32, #tpu.memory_space<vmem>>, vector<1x1x128xf32>
    %612 = vector.shape_cast %611 : vector<1x1x128xf32> to vector<1x128xf32>
    %613 = vector.broadcast %612 : vector<1x128xf32> to vector<8x128xf32>
    %614 = arith.mulf %610, %613 : vector<8x128xf32>
    %615 = arith.addf %609, %614 : vector<8x128xf32>
    %616 = arith.addf %615, %548 : vector<8x128xf32>
    %c0_142 = arith.constant 0 : index
    %c0_143 = arith.constant 0 : index
    %c0_144 = arith.constant 0 : index
    %617 = vector.load %arg14[%c0_142, %c0_143, %c0_144] : memref<1x8x128xf32, #tpu.memory_space<vmem>>, vector<1x8x128xf32>
    %618 = vector.shape_cast %617 : vector<1x8x128xf32> to vector<8x128xf32>
    %619 = vector.shape_cast %616 : vector<8x128xf32> to vector<1x8x128xf32>
    tpu.vector_store %arg14[%c0_142, %c0_143, %c0_144], %619 {strides = array<i32>} : memref<1x8x128xf32, #tpu.memory_space<vmem>>, vector<1x8x128xf32>,
    return
  }
  func.func @transform_0(%arg0: i32) -> (i32, i32, i32) {
    %c0_i32 = arith.constant 0 : i32
    %c0_i32_0 = arith.constant 0 : i32
    %c0_i32_1 = arith.constant 0 : i32
    return %arg0, %c0_i32, %c0_i32_0 : i32, i32, i32
  }
  func.func @transform_1(%arg0: i32) -> (i32, i32, i32) {
    %c0_i32 = arith.constant 0 : i32
    %c0_i32_0 = arith.constant 0 : i32
    %c0_i32_1 = arith.constant 0 : i32
    return %arg0, %c0_i32, %c0_i32_0 : i32, i32, i32
  }
  func.func @transform_2(%arg0: i32) -> (i32, i32, i32) {
    %c0_i32 = arith.constant 0 : i32
    %c0_i32_0 = arith.constant 0 : i32
    %c0_i32_1 = arith.constant 0 : i32
    return %arg0, %c0_i32, %c0_i32_0 : i32, i32, i32
  }
  func.func @transform_3(%arg0: i32) -> (i32, i32, i32) {
    %c0_i32 = arith.constant 0 : i32
    %c0_i32_0 = arith.constant 0 : i32
    %c0_i32_1 = arith.constant 0 : i32
    return %arg0, %c0_i32, %c0_i32_0 : i32, i32, i32
  }
  func.func @transform_4(%arg0: i32) -> (i32, i32) {
    %c0_i32 = arith.constant 0 : i32
    %c0_i32_0 = arith.constant 0 : i32
    %c0_i32_1 = arith.constant 0 : i32
    return %c0_i32, %c0_i32_0 : i32, i32
  }
  func.func @transform_5(%arg0: i32) -> (i32, i32) {
    %c0_i32 = arith.constant 0 : i32
    %c0_i32_0 = arith.constant 0 : i32
    %c0_i32_1 = arith.constant 0 : i32
    return %c0_i32, %c0_i32_0 : i32, i32
  }
  func.func @transform_6(%arg0: i32) -> (i32, i32) {
    %c0_i32 = arith.constant 0 : i32
    %c0_i32_0 = arith.constant 0 : i32
    %c0_i32_1 = arith.constant 0 : i32
    return %c0_i32, %c0_i32_0 : i32, i32
  }
  func.func @transform_7(%arg0: i32) -> (i32, i32) {
    %c0_i32 = arith.constant 0 : i32
    %c0_i32_0 = arith.constant 0 : i32
    %c0_i32_1 = arith.constant 0 : i32
    return %c0_i32, %c0_i32_0 : i32, i32
  }
  func.func @transform_8(%arg0: i32) -> (i32, i32) {
    %c0_i32 = arith.constant 0 : i32
    %c0_i32_0 = arith.constant 0 : i32
    %c0_i32_1 = arith.constant 0 : i32
    return %c0_i32, %c0_i32_0 : i32, i32
  }
  func.func @transform_9(%arg0: i32) -> (i32, i32) {
    %c0_i32 = arith.constant 0 : i32
    %c0_i32_0 = arith.constant 0 : i32
    %c0_i32_1 = arith.constant 0 : i32
    return %c0_i32, %c0_i32_0 : i32, i32
  }
  func.func @transform_10(%arg0: i32) -> (i32, i32) {
    %c0_i32 = arith.constant 0 : i32
    %c0_i32_0 = arith.constant 0 : i32
    %c0_i32_1 = arith.constant 0 : i32
    return %c0_i32, %c0_i32_0 : i32, i32
  }
  func.func @transform_11(%arg0: i32) -> (i32, i32) {
    %c0_i32 = arith.constant 0 : i32
    %c0_i32_0 = arith.constant 0 : i32
    %c0_i32_1 = arith.constant 0 : i32
    return %c0_i32, %c0_i32_0 : i32, i32
  }
  func.func @transform_12(%arg0: i32) -> (i32, i32) {
    %c0_i32 = arith.constant 0 : i32
    %c0_i32_0 = arith.constant 0 : i32
    %c0_i32_1 = arith.constant 0 : i32
    return %c0_i32, %c0_i32_0 : i32, i32
  }
  func.func @transform_13(%arg0: i32) -> (i32, i32, i32) {
    %c0_i32 = arith.constant 0 : i32
    %c0_i32_0 = arith.constant 0 : i32
    %c0_i32_1 = arith.constant 0 : i32
    return %arg0, %c0_i32, %c0_i32_0 : i32, i32, i32
  }
}

</mosaic_0001>

<llo_original>
// kernel: tpu_custom_call.1
$region0: #{tpu_custom_call.1}
  #allocation0 [shape = 'u32[]', space=smem, size = 0x4, offset = 0x4, fixed_abs, tag = 'smem constant byte address 0x4 - core index']
  #allocation1 [shape = 'u32[144,128]{1,0:T(1,128)}', space=vmem, size = 0x12000, scoped, tag = 'internal scratch']
  %s0 = inlined_call_operand.vmem [shape: f32[2,9,128], index: 0, kind: input, shape index: {}]
  %s1 = inlined_call_operand.vmem [shape: s32[2,128,1], index: 1, kind: input, shape index: {}]
  %s2 = inlined_call_operand.vmem [shape: s32[2,1,128], index: 2, kind: input, shape index: {}]
  %s3 = inlined_call_operand.vmem [shape: f32[2,8,128], index: 3, kind: input, shape index: {}]
  %s4 = inlined_call_operand.vmem [shape: f32[27,512], index: 4, kind: input, shape index: {}]
  %s5 = inlined_call_operand.vmem [shape: bf16[8,216], index: 5, kind: input, shape index: {}]
  %s6 = inlined_call_operand.vmem [shape: f32[8,1], index: 6, kind: input, shape index: {}]
  %s7 = inlined_call_operand.vmem [shape: bf16[8,216], index: 7, kind: input, shape index: {}]
  %s8 = inlined_call_operand.vmem [shape: f32[8,1], index: 8, kind: input, shape index: {}]
  %s9 = inlined_call_operand.vmem [shape: bf16[8,8], index: 9, kind: input, shape index: {}]
  %s10 = inlined_call_operand.vmem [shape: f32[8,1], index: 10, kind: input, shape index: {}]
  %s11 = inlined_call_operand.vmem [shape: f32[8,1], index: 11, kind: input, shape index: {}]
  %s12 = inlined_call_operand.vmem [shape: f32[8,1], index: 12, kind: input, shape index: {}]
  %s13 = inlined_call_operand.hbm [shape: f32[2,8,128], index: 13, kind: output, shape index: {}]
  %s14 = sld [smem:[#allocation0]]
  $region85: #{tpu_custom_call.1} parent=0
    _
  %s16 = ssub.s32 1, %s14
  %s17 = scalar_select 0, %s16, %s14
  $region1: #{tpu_custom_call.1} parent=0
    #allocation2 [shape = 'u8[8192]{0}', space=vmem, size = 0x2000, scoped, tag = 'output window, operand 0']
    #allocation3 [shape = 's32[2]{0}', space=sflag, size = 0x8, scoped, tag = 'scoped memory for tpu_custom_call.1']
    %18 = vsyncpa [#allocation3], 0
    %s19 = scalar_lea.sflag [#allocation3], 1
    %20 = vsyncpa %s19, 0
    loop: start=0, step=1, limit=4
    $region2: #{tpu_custom_call.1} parent=1 // loop_pre_header
      _
    $region3: #{tpu_custom_call.1} parent=1 // loop_header
      %s22 = sphi 0, %s26
      %p23 = scmp.ge.s32.totalorder %s22, 4
      %s32 = sphi 0, %s34
      %s35 = sphi 0, %s32
      %s36 = sphi 0, %s35
      %s52 = sphi 0, %s36
      %s58 = sphi 0, %s60
      %s61 = sphi 0, %s58
      %s62 = sphi 0, %s61
      %s78 = sphi 0, %s62
      %s84 = sphi 0, %s86
      %s87 = sphi 0, %s84
      %s88 = sphi 0, %s87
      %s104 = sphi 0, %s88
      %s110 = sphi 0, %s112
      %s113 = sphi 0, %s110
      %s114 = sphi 0, %s113
      %s130 = sphi 0, %s114
      %s134 = sphi 0, %s134
      %s136 = sphi 0, %s134
      %s137 = sphi 0, %s136
      %s151 = sphi 0, %s137
      %s155 = sphi 0, %s155
      %s157 = sphi 0, %s155
      %s158 = sphi 0, %s157
      %s172 = sphi 0, %s158
      %s176 = sphi 0, %s176
      %s178 = sphi 0, %s176
      %s179 = sphi 0, %s178
      %s193 = sphi 0, %s179
      %s197 = sphi 0, %s197
      %s199 = sphi 0, %s197
      %s200 = sphi 0, %s199
      %s214 = sphi 0, %s200
      %s218 = sphi 0, %s218
      %s220 = sphi 0, %s218
      %s221 = sphi 0, %s220
      %s235 = sphi 0, %s221
      %s239 = sphi 0, %s239
      %s241 = sphi 0, %s239
      %s242 = sphi 0, %s241
      %s256 = sphi 0, %s242
      %s260 = sphi 0, %s260
      %s262 = sphi 0, %s260
      %s263 = sphi 0, %s262
      %s277 = sphi 0, %s263
      %s281 = sphi 0, %s281
      %s283 = sphi 0, %s281
      %s284 = sphi 0, %s283
      %s298 = sphi 0, %s284
      %s302 = sphi 0, %s302
      %s304 = sphi 0, %s302
      %s305 = sphi 0, %s304
      %s319 = sphi 0, %s305
      %s325 = sphi 0, %s327
      %s328 = sphi 0, %s325
      %s329 = sphi 0, %s328
      %s345 = sphi 0, %s329
    $region4: #{tpu_custom_call.1} parent=1 // loop_header_branch
      %25 = sbr.rel (%p23) target = $region8
    $region5: #{tpu_custom_call.1} parent=1 // loop_body
      %s27 = ssub.s32 %s22, 1
      %s28 = ssub.s32 %s22, 2
      %s29 = sadd.s32 %s22, 1
      %s30 = ssub.s32 %s22, %s29
      %p31 = scmp.eq.s32.totalorder %s30, 0
      %s33 = sadd.s32 %s32, 1
      %s34 = scalar_select %p31, %s32, %s33
      %p37 = pneg %p31
      %p38 = scmp.eq.s32.totalorder %s22, 1
      %p39 = por %p37, %p38
      %p40 = scmp.ne.s32.totalorder %s32, %s35
      %p41 = scmp.eq.s32.totalorder %s22, 0
      %p42 = por %p40, %p41
      %p43 = scmp.ne.s32.totalorder %s32, %s35
      %p44 = scmp.eq.s32.totalorder %s27, 1
      %p45 = por %p43, %p44
      %p46 = scmp.ne.s32.totalorder %s35, %s36
      %p47 = scmp.eq.s32.totalorder %s27, 0
      %p48 = por %p46, %p47
      %p49 = scmp.ne.s32.totalorder %s35, %s36
      %p50 = scmp.eq.s32.totalorder %s28, 1
      %p51 = por %p49, %p50
      %p53 = scmp.ne.s32.totalorder %s36, %s52
      %p54 = scmp.eq.s32.totalorder %s28, 0
      %p55 = por %p53, %p54
      %s56 = ssub.s32 %s22, %s29
      %p57 = scmp.eq.s32.totalorder %s56, 0
      %s59 = sadd.s32 %s58, 1
      %s60 = scalar_select %p57, %s58, %s59
      %p63 = pneg %p57
      %p64 = scmp.eq.s32.totalorder %s22, 1
      %p65 = por %p63, %p64
      %p66 = scmp.ne.s32.totalorder %s58, %s61
      %p67 = scmp.eq.s32.totalorder %s22, 0
      %p68 = por %p66, %p67
      %p69 = scmp.ne.s32.totalorder %s58, %s61
      %p70 = scmp.eq.s32.totalorder %s27, 1
      %p71 = por %p69, %p70
      %p72 = scmp.ne.s32.totalorder %s61, %s62
      %p73 = scmp.eq.s32.totalorder %s27, 0
      %p74 = por %p72, %p73
      %p75 = scmp.ne.s32.totalorder %s61, %s62
      %p76 = scmp.eq.s32.totalorder %s28, 1
      %p77 = por %p75, %p76
      %p79 = scmp.ne.s32.totalorder %s62, %s78
      %p80 = scmp.eq.s32.totalorder %s28, 0
      %p81 = por %p79, %p80
      %s82 = ssub.s32 %s22, %s29
      %p83 = scmp.eq.s32.totalorder %s82, 0
      %s85 = sadd.s32 %s84, 1
      %s86 = scalar_select %p83, %s84, %s85
      %p89 = pneg %p83
      %p90 = scmp.eq.s32.totalorder %s22, 1
      %p91 = por %p89, %p90
      %p92 = scmp.ne.s32.totalorder %s84, %s87
      %p93 = scmp.eq.s32.totalorder %s22, 0
      %p94 = por %p92, %p93
      %p95 = scmp.ne.s32.totalorder %s84, %s87
      %p96 = scmp.eq.s32.totalorder %s27, 1
      %p97 = por %p95, %p96
      %p98 = scmp.ne.s32.totalorder %s87, %s88
      %p99 = scmp.eq.s32.totalorder %s27, 0
      %p100 = por %p98, %p99
      %p101 = scmp.ne.s32.totalorder %s87, %s88
      %p102 = scmp.eq.s32.totalorder %s28, 1
      %p103 = por %p101, %p102
      %p105 = scmp.ne.s32.totalorder %s88, %s104
      %p106 = scmp.eq.s32.totalorder %s28, 0
      %p107 = por %p105, %p106
      %s108 = ssub.s32 %s22, %s29
      %p109 = scmp.eq.s32.totalorder %s108, 0
      %s111 = sadd.s32 %s110, 1
      %s112 = scalar_select %p109, %s110, %s111
      %p115 = pneg %p109
      %p116 = scmp.eq.s32.totalorder %s22, 1
      %p117 = por %p115, %p116
      %p118 = scmp.ne.s32.totalorder %s110, %s113
      %p119 = scmp.eq.s32.totalorder %s22, 0
      %p120 = por %p118, %p119
      %p121 = scmp.ne.s32.totalorder %s110, %s113
      %p122 = scmp.eq.s32.totalorder %s27, 1
      %p123 = por %p121, %p122
      %p124 = scmp.ne.s32.totalorder %s113, %s114
      %p125 = scmp.eq.s32.totalorder %s27, 0
      %p126 = por %p124, %p125
      %p127 = scmp.ne.s32.totalorder %s113, %s114
      %p128 = scmp.eq.s32.totalorder %s28, 1
      %p129 = por %p127, %p128
      %p131 = scmp.ne.s32.totalorder %s114, %s130
      %p132 = scmp.eq.s32.totalorder %s28, 0
      %p133 = por %p131, %p132
      %s135 = sadd.s32 %s134, 1
      %p138 = scmp.eq.s32.totalorder %s22, 1
      %p139 = scmp.ne.s32.totalorder %s134, %s136
      %p140 = scmp.eq.s32.totalorder %s22, 0
      %p141 = por %p139, %p140
      %p142 = scmp.ne.s32.totalorder %s134, %s136
      %p143 = scmp.eq.s32.totalorder %s27, 1
      %p144 = por %p142, %p143
      %p145 = scmp.ne.s32.totalorder %s136, %s137
      %p146 = scmp.eq.s32.totalorder %s27, 0
      %p147 = por %p145, %p146
      %p148 = scmp.ne.s32.totalorder %s136, %s137
      %p149 = scmp.eq.s32.totalorder %s28, 1
      %p150 = por %p148, %p149
      %p152 = scmp.ne.s32.totalorder %s137, %s151
      %p153 = scmp.eq.s32.totalorder %s28, 0
      %p154 = por %p152, %p153
      %s156 = sadd.s32 %s155, 1
      %p159 = scmp.eq.s32.totalorder %s22, 1
      %p160 = scmp.ne.s32.totalorder %s155, %s157
      %p161 = scmp.eq.s32.totalorder %s22, 0
      %p162 = por %p160, %p161
      %p163 = scmp.ne.s32.totalorder %s155, %s157
      %p164 = scmp.eq.s32.totalorder %s27, 1
      %p165 = por %p163, %p164
      %p166 = scmp.ne.s32.totalorder %s157, %s158
      %p167 = scmp.eq.s32.totalorder %s27, 0
      %p168 = por %p166, %p167
      %p169 = scmp.ne.s32.totalorder %s157, %s158
      %p170 = scmp.eq.s32.totalorder %s28, 1
      %p171 = por %p169, %p170
      %p173 = scmp.ne.s32.totalorder %s158, %s172
      %p174 = scmp.eq.s32.totalorder %s28, 0
      %p175 = por %p173, %p174
      %s177 = sadd.s32 %s176, 1
      %p180 = scmp.eq.s32.totalorder %s22, 1
      %p181 = scmp.ne.s32.totalorder %s176, %s178
      %p182 = scmp.eq.s32.totalorder %s22, 0
      %p183 = por %p181, %p182
      %p184 = scmp.ne.s32.totalorder %s176, %s178
      %p185 = scmp.eq.s32.totalorder %s27, 1
      %p186 = por %p184, %p185
      %p187 = scmp.ne.s32.totalorder %s178, %s179
      %p188 = scmp.eq.s32.totalorder %s27, 0
      %p189 = por %p187, %p188
      %p190 = scmp.ne.s32.totalorder %s178, %s179
      %p191 = scmp.eq.s32.totalorder %s28, 1
      %p192 = por %p190, %p191
      %p194 = scmp.ne.s32.totalorder %s179, %s193
      %p195 = scmp.eq.s32.totalorder %s28, 0
      %p196 = por %p194, %p195
      %s198 = sadd.s32 %s197, 1
      %p201 = scmp.eq.s32.totalorder %s22, 1
      %p202 = scmp.ne.s32.totalorder %s197, %s199
      %p203 = scmp.eq.s32.totalorder %s22, 0
      %p204 = por %p202, %p203
      %p205 = scmp.ne.s32.totalorder %s197, %s199
      %p206 = scmp.eq.s32.totalorder %s27, 1
      %p207 = por %p205, %p206
      %p208 = scmp.ne.s32.totalorder %s199, %s200
      %p209 = scmp.eq.s32.totalorder %s27, 0
      %p210 = por %p208, %p209
      %p211 = scmp.ne.s32.totalorder %s199, %s200
      %p212 = scmp.eq.s32.totalorder %s28, 1
      %p213 = por %p211, %p212
      %p215 = scmp.ne.s32.totalorder %s200, %s214
      %p216 = scmp.eq.s32.totalorder %s28, 0
      %p217 = por %p215, %p216
      %s219 = sadd.s32 %s218, 1
      %p222 = scmp.eq.s32.totalorder %s22, 1
      %p223 = scmp.ne.s32.totalorder %s218, %s220
      %p224 = scmp.eq.s32.totalorder %s22, 0
      %p225 = por %p223, %p224
      %p226 = scmp.ne.s32.totalorder %s218, %s220
      %p227 = scmp.eq.s32.totalorder %s27, 1
      %p228 = por %p226, %p227
      %p229 = scmp.ne.s32.totalorder %s220, %s221
      %p230 = scmp.eq.s32.totalorder %s27, 0
      %p231 = por %p229, %p230
      %p232 = scmp.ne.s32.totalorder %s220, %s221
      %p233 = scmp.eq.s32.totalorder %s28, 1
      %p234 = por %p232, %p233
      %p236 = scmp.ne.s32.totalorder %s221, %s235
      %p237 = scmp.eq.s32.totalorder %s28, 0
      %p238 = por %p236, %p237
      %s240 = sadd.s32 %s239, 1
      %p243 = scmp.eq.s32.totalorder %s22, 1
      %p244 = scmp.ne.s32.totalorder %s239, %s241
      %p245 = scmp.eq.s32.totalorder %s22, 0
      %p246 = por %p244, %p245
      %p247 = scmp.ne.s32.totalorder %s239, %s241
      %p248 = scmp.eq.s32.totalorder %s27, 1
      %p249 = por %p247, %p248
      %p250 = scmp.ne.s32.totalorder %s241, %s242
      %p251 = scmp.eq.s32.totalorder %s27, 0
      %p252 = por %p250, %p251
      %p253 = scmp.ne.s32.totalorder %s241, %s242
      %p254 = scmp.eq.s32.totalorder %s28, 1
      %p255 = por %p253, %p254
      %p257 = scmp.ne.s32.totalorder %s242, %s256
      %p258 = scmp.eq.s32.totalorder %s28, 0
      %p259 = por %p257, %p258
      %s261 = sadd.s32 %s260, 1
      %p264 = scmp.eq.s32.totalorder %s22, 1
      %p265 = scmp.ne.s32.totalorder %s260, %s262
      %p266 = scmp.eq.s32.totalorder %s22, 0
      %p267 = por %p265, %p266
      %p268 = scmp.ne.s32.totalorder %s260, %s262
      %p269 = scmp.eq.s32.totalorder %s27, 1
      %p270 = por %p268, %p269
      %p271 = scmp.ne.s32.totalorder %s262, %s263
      %p272 = scmp.eq.s32.totalorder %s27, 0
      %p273 = por %p271, %p272
      %p274 = scmp.ne.s32.totalorder %s262, %s263
      %p275 = scmp.eq.s32.totalorder %s28, 1
      %p276 = por %p274, %p275
      %p278 = scmp.ne.s32.totalorder %s263, %s277
      %p279 = scmp.eq.s32.totalorder %s28, 0
      %p280 = por %p278, %p279
      %s282 = sadd.s32 %s281, 1
      %p285 = scmp.eq.s32.totalorder %s22, 1
      %p286 = scmp.ne.s32.totalorder %s281, %s283
      %p287 = scmp.eq.s32.totalorder %s22, 0
      %p288 = por %p286, %p287
      %p289 = scmp.ne.s32.totalorder %s281, %s283
      %p290 = scmp.eq.s32.totalorder %s27, 1
      %p291 = por %p289, %p290
      %p292 = scmp.ne.s32.totalorder %s283, %s284
      %p293 = scmp.eq.s32.totalorder %s27, 0
      %p294 = por %p292, %p293
      %p295 = scmp.ne.s32.totalorder %s283, %s284
      %p296 = scmp.eq.s32.totalorder %s28, 1
      %p297 = por %p295, %p296
      %p299 = scmp.ne.s32.totalorder %s284, %s298
      %p300 = scmp.eq.s32.totalorder %s28, 0
      %p301 = por %p299, %p300
      %s303 = sadd.s32 %s302, 1
      %p306 = scmp.eq.s32.totalorder %s22, 1
      %p307 = scmp.ne.s32.totalorder %s302, %s304
      %p308 = scmp.eq.s32.totalorder %s22, 0
      %p309 = por %p307, %p308
      %p310 = scmp.ne.s32.totalorder %s302, %s304
      %p311 = scmp.eq.s32.totalorder %s27, 1
      %p312 = por %p310, %p311
      %p313 = scmp.ne.s32.totalorder %s304, %s305
      %p314 = scmp.eq.s32.totalorder %s27, 0
      %p315 = por %p313, %p314
      %p316 = scmp.ne.s32.totalorder %s304, %s305
      %p317 = scmp.eq.s32.totalorder %s28, 1
      %p318 = por %p316, %p317
      %p320 = scmp.ne.s32.totalorder %s305, %s319
      %p321 = scmp.eq.s32.totalorder %s28, 0
      %p322 = por %p320, %p321
      %s323 = ssub.s32 %s22, %s29
      %p324 = scmp.eq.s32.totalorder %s323, 0
      %s326 = sadd.s32 %s325, 1
      %s327 = scalar_select %p324, %s325, %s326
      %p330 = pneg %p324
      %p331 = scmp.eq.s32.totalorder %s22, 1
      %p332 = por %p330, %p331
      %p333 = scmp.ne.s32.totalorder %s325, %s328
      %p334 = scmp.eq.s32.totalorder %s22, 0
      %p335 = por %p333, %p334
      %p336 = scmp.ne.s32.totalorder %s325, %s328
      %p337 = scmp.eq.s32.totalorder %s27, 1
      %p338 = por %p336, %p337
      %p339 = scmp.ne.s32.totalorder %s328, %s329
      %p340 = scmp.eq.s32.totalorder %s27, 0
      %p341 = por %p339, %p340
      %p342 = scmp.ne.s32.totalorder %s328, %s329
      %p343 = scmp.eq.s32.totalorder %s28, 1
      %p344 = por %p342, %p343
      %p346 = scmp.ne.s32.totalorder %s329, %s345
      %p347 = scmp.eq.s32.totalorder %s28, 0
      %p348 = por %p346, %p347
      %p349 = scmp.le.s32.totalorder 1, %s22
      %p350 = scmp.lt.s32.totalorder %s22, 3
      %p351 = pnand %p349, %p350
      %p352 = pneg %p351
      // Predicated region
      $region9: #{tpu_custom_call.1} parent=5 // pred_check
        _
      $region10: #{tpu_custom_call.1} parent=5 // pred_check_branch
        %354 = sbr.rel (%p351) target = $region12
      $region11: #{tpu_custom_call.1} parent=5 // pred_region
        %s355 = ssub.s32 %s22, 1
        // Predicated region
        $region13: #{tpu_custom_call.1} parent=11 // pred_check
          %p356 = pneg %p147
        $region14: #{tpu_custom_call.1} parent=11 // pred_check_branch
          %358 = sbr.rel (%p356) target = $region16
        $region15: #{tpu_custom_call.1} parent=11 // pred_region
          _
        $region16: #{tpu_custom_call.1} parent=11 // pred_fallthru
          _
        // Predicated region
        $region17: #{tpu_custom_call.1} parent=11 // pred_check
          %p359 = pneg %p168
        $region18: #{tpu_custom_call.1} parent=11 // pred_check_branch
          %361 = sbr.rel (%p359) target = $region20
        $region19: #{tpu_custom_call.1} parent=11 // pred_region
          _
        $region20: #{tpu_custom_call.1} parent=11 // pred_fallthru
          _
        // Predicated region
        $region21: #{tpu_custom_call.1} parent=11 // pred_check
          %p362 = pneg %p189
        $region22: #{tpu_custom_call.1} parent=11 // pred_check_branch
          %364 = sbr.rel (%p362) target = $region24
        $region23: #{tpu_custom_call.1} parent=11 // pred_region
          _
        $region24: #{tpu_custom_call.1} parent=11 // pred_fallthru
          _
        // Predicated region
        $region25: #{tpu_custom_call.1} parent=11 // pred_check
          %p365 = pneg %p210
        $region26: #{tpu_custom_call.1} parent=11 // pred_check_branch
          %367 = sbr.rel (%p365) target = $region28
        $region27: #{tpu_custom_call.1} parent=11 // pred_region
          _
        $region28: #{tpu_custom_call.1} parent=11 // pred_fallthru
          _
        // Predicated region
        $region29: #{tpu_custom_call.1} parent=11 // pred_check
          %p368 = pneg %p231
        $region30: #{tpu_custom_call.1} parent=11 // pred_check_branch
          %370 = sbr.rel (%p368) target = $region32
        $region31: #{tpu_custom_call.1} parent=11 // pred_region
          _
        $region32: #{tpu_custom_call.1} parent=11 // pred_fallthru
          _
        // Predicated region
        $region33: #{tpu_custom_call.1} parent=11 // pred_check
          %p371 = pneg %p252
        $region34: #{tpu_custom_call.1} parent=11 // pred_check_branch
          %373 = sbr.rel (%p371) target = $region36
        $region35: #{tpu_custom_call.1} parent=11 // pred_region
          _
        $region36: #{tpu_custom_call.1} parent=11 // pred_fallthru
          _
        // Predicated region
        $region37: #{tpu_custom_call.1} parent=11 // pred_check
          %p374 = pneg %p273
        $region38: #{tpu_custom_call.1} parent=11 // pred_check_branch
          %376 = sbr.rel (%p374) target = $region40
        $region39: #{tpu_custom_call.1} parent=11 // pred_region
          _
        $region40: #{tpu_custom_call.1} parent=11 // pred_fallthru
          _
        // Predicated region
        $region41: #{tpu_custom_call.1} parent=11 // pred_check
          %p377 = pneg %p294
        $region42: #{tpu_custom_call.1} parent=11 // pred_check_branch
          %379 = sbr.rel (%p377) target = $region44
        $region43: #{tpu_custom_call.1} parent=11 // pred_region
          _
        $region44: #{tpu_custom_call.1} parent=11 // pred_fallthru
          _
        // Predicated region
        $region45: #{tpu_custom_call.1} parent=11 // pred_check
          %p380 = pneg %p315
        $region46: #{tpu_custom_call.1} parent=11 // pred_check_branch
          %382 = sbr.rel (%p380) target = $region48
        $region47: #{tpu_custom_call.1} parent=11 // pred_region
          _
        $region48: #{tpu_custom_call.1} parent=11 // pred_fallthru
          _
      $region12: #{tpu_custom_call.1} parent=5 // pred_fallthru
        _
      %p383 = scmp.lt.s32.totalorder %s22, 2
      // Predicated region
      $region49: #{tpu_custom_call.1} parent=5 // pred_check
        %p384 = pneg %p383
      $region50: #{tpu_custom_call.1} parent=5 // pred_check_branch
        %386 = sbr.rel (%p384) target = $region52
      $region51: #{tpu_custom_call.1} parent=5 // pred_region
        // Predicated region
        $region53: #{tpu_custom_call.1} parent=51 // pred_check
          %p387 = pneg %p42
        $region54: #{tpu_custom_call.1} parent=51 // pred_check_branch
          %389 = sbr.rel (%p387) target = $region56
        $region55: #{tpu_custom_call.1} parent=51 // pred_region
          %p390 = scmp.lt.s32.totalorder %s22, 1
          %s391 = scalar_select %p390, %s22, 1
          %s392 = smul.addr %s391, 2
          %s393 = smul.addr %s392, 8
          %s394 = scalar_lea.vmem %s0, %s393
        $region56: #{tpu_custom_call.1} parent=51 // pred_fallthru
          _
        // Predicated region
        $region57: #{tpu_custom_call.1} parent=51 // pred_check
          %p395 = pneg %p68
        $region58: #{tpu_custom_call.1} parent=51 // pred_check_branch
          %397 = sbr.rel (%p395) target = $region60
        $region59: #{tpu_custom_call.1} parent=51 // pred_region
          %p398 = scmp.lt.s32.totalorder %s22, 1
          %s399 = scalar_select %p398, %s22, 1
          %s400 = smul.addr %s399, 16
          %s401 = smul.addr %s400, 8
          %s402 = scalar_lea.vmem %s1, %s401
        $region60: #{tpu_custom_call.1} parent=51 // pred_fallthru
          _
        // Predicated region
        $region61: #{tpu_custom_call.1} parent=51 // pred_check
          %p403 = pneg %p94
        $region62: #{tpu_custom_call.1} parent=51 // pred_check_branch
          %405 = sbr.rel (%p403) target = $region64
        $region63: #{tpu_custom_call.1} parent=51 // pred_region
          %p406 = scmp.lt.s32.totalorder %s22, 1
          %s407 = scalar_select %p406, %s22, 1
          %s408 = scalar_lea.vmem %s2, %s407
        $region64: #{tpu_custom_call.1} parent=51 // pred_fallthru
          _
        // Predicated region
        $region65: #{tpu_custom_call.1} parent=51 // pred_check
          %p409 = pneg %p120
        $region66: #{tpu_custom_call.1} parent=51 // pred_check_branch
          %411 = sbr.rel (%p409) target = $region68
        $region67: #{tpu_custom_call.1} parent=51 // pred_region
          %p412 = scmp.lt.s32.totalorder %s22, 1
          %s413 = scalar_select %p412, %s22, 1
          %s414 = smul.addr %s413, 8
          %s415 = scalar_lea.vmem %s3, %s414
        $region68: #{tpu_custom_call.1} parent=51 // pred_fallthru
          _
      $region52: #{tpu_custom_call.1} parent=5 // pred_fallthru
        _
      %p416 = scmp.le.s32.totalorder 1, %s22
      %p417 = scmp.lt.s32.totalorder %s22, 3
      %p418 = pnand %p416, %p417
      %p419 = pneg %p418
      // Predicated region
      $region69: #{tpu_custom_call.1} parent=5 // pred_check
        _
      $region70: #{tpu_custom_call.1} parent=5 // pred_check_branch
        %421 = sbr.rel (%p418) target = $region72
      $region71: #{tpu_custom_call.1} parent=5 // pred_region
        %s422 = ssub.s32 %s22, 1
        %p423 = scmp.lt.s32.totalorder %s27, 1
        %s424 = scalar_select %p423, %s27, 1
        %s425 = smul.addr %s424, 2
        %s426 = smul.addr %s425, 8
        %s427 = scalar_lea.vmem %s0, %s426
        %p428 = pneg %p48
        %p429 = pneg %p45
        %p430 = scmp.lt.s32.totalorder %s27, 1
        %s431 = scalar_select %p430, %s27, 1
        %s432 = smul.addr %s431, 16
        %s433 = smul.addr %s432, 8
        %s434 = scalar_lea.vmem %s1, %s433
        %p435 = pneg %p74
        %p436 = pneg %p71
        %p437 = scmp.lt.s32.totalorder %s27, 1
        %s438 = scalar_select %p437, %s27, 1
        %s439 = scalar_lea.vmem %s2, %s438
        %p440 = pneg %p100
        %p441 = pneg %p97
        %p442 = scmp.lt.s32.totalorder %s27, 1
        %s443 = scalar_select %p442, %s27, 1
        %s444 = smul.addr %s443, 8
        %s445 = scalar_lea.vmem %s3, %s444
        %p446 = pneg %p126
        %p447 = pneg %p123
        %p448 = pneg %p147
        %p449 = pneg %p144
        %p450 = pneg %p168
        %p451 = pneg %p165
        %p452 = pneg %p189
        %p453 = pneg %p186
        %p454 = pneg %p210
        %p455 = pneg %p207
        %p456 = pneg %p231
        %p457 = pneg %p228
        %p458 = pneg %p252
        %p459 = pneg %p249
        %p460 = pneg %p273
        %p461 = pneg %p270
        %p462 = pneg %p294
        %p463 = pneg %p291
        %p464 = pneg %p315
        %p465 = pneg %p312
        %p466 = pneg %p341
        %p467 = pneg %p338
        %s468 = sand.u32 %s328, 1
        %s469 = scalar_lea.sflag [#allocation3], %s468
        %s470 = sand.u32 %s328, 1
        %s471 = smul.addr %s470, 8
        %s472 = scalar_lea.vmem [#allocation2], %s471
        %p473 = scmp.lt.s32.totalorder %s27, 1
        %s474 = scalar_select %p473, %s27, 1
        %s475 = smul.addr %s474, 2
        %s476 = smul.addr %s475, 8
        %s477 = scalar_lea.vmem %s0, %s476
        %p478 = scmp.lt.s32.totalorder %s27, 1
        %s479 = scalar_select %p478, %s27, 1
        %s480 = smul.addr %s479, 16
        %s481 = smul.addr %s480, 8
        %s482 = scalar_lea.vmem %s1, %s481
        %p483 = scmp.lt.s32.totalorder %s27, 1
        %s484 = scalar_select %p483, %s27, 1
        %s485 = scalar_lea.vmem %s2, %s484
        %p486 = scmp.lt.s32.totalorder %s27, 1
        %s487 = scalar_select %p486, %s27, 1
        %s488 = smul.addr %s487, 8
        %s489 = scalar_lea.vmem %s3, %s488
        %v491 = vld [vmem:[%s477] sm:$0xff]
        %v492 = vld [vmem:[%s477 + $0x8] sm:$0x1]
        %v493 = vpack.c.bf16 %v492, %v491
        %v494 = vlaneseq
        %v495 = vand.u32 %v494, 127
        %v496 = vadd.s32 %v495, 128
        %v497 = vadd.s32 %v495, 256
        %v498 = vadd.s32 %v495, 384
        %v499 = vld [vmem:[%s482] sm:$0xff]
        %v500 = vld [vmem:[%s482 + $0x8] sm:$0xff]
        %v501 = vld [vmem:[%s482 + $0x10] sm:$0xff]
        %v502 = vld [vmem:[%s482 + $0x18] sm:$0xff]
        %v503 = vld [vmem:[%s482 + $0x20] sm:$0xff]
        %v504 = vld [vmem:[%s482 + $0x28] sm:$0xff]
        %v505 = vld [vmem:[%s482 + $0x30] sm:$0xff]
        %v506 = vld [vmem:[%s482 + $0x38] sm:$0xff]
        %v507 = vld [vmem:[%s482 + $0x40] sm:$0xff]
        %v508 = vld [vmem:[%s482 + $0x48] sm:$0xff]
        %v509 = vld [vmem:[%s482 + $0x50] sm:$0xff]
        %v510 = vld [vmem:[%s482 + $0x58] sm:$0xff]
        %v511 = vld [vmem:[%s482 + $0x60] sm:$0xff]
        %v512 = vld [vmem:[%s482 + $0x68] sm:$0xff]
        %v513 = vld [vmem:[%s482 + $0x70] sm:$0xff]
        %v514 = vld [vmem:[%s482 + $0x78] sm:$0xff]
        %515 = vset.pattern.permute.xlu0 0
        %516 = vperm.xlu0 %515, %v499
        %v517 = vpop.permute.xlu0 %516
        %518 = vset.pattern.permute.xlu0 0
        %519 = vperm.xlu0 %518, %v500
        %v520 = vpop.permute.xlu0 %519
        %521 = vset.pattern.permute.xlu0 0
        %522 = vperm.xlu0 %521, %v501
        %v523 = vpop.permute.xlu0 %522
        %524 = vset.pattern.permute.xlu0 0
        %525 = vperm.xlu0 %524, %v502
        %v526 = vpop.permute.xlu0 %525
        %527 = vset.pattern.permute.xlu0 0
        %528 = vperm.xlu0 %527, %v503
        %v529 = vpop.permute.xlu0 %528
        %530 = vset.pattern.permute.xlu0 0
        %531 = vperm.xlu0 %530, %v504
        %v532 = vpop.permute.xlu0 %531
        %533 = vset.pattern.permute.xlu0 0
        %534 = vperm.xlu0 %533, %v505
        %v535 = vpop.permute.xlu0 %534
        %536 = vset.pattern.permute.xlu0 0
        %537 = vperm.xlu0 %536, %v506
        %v538 = vpop.permute.xlu0 %537
        %539 = vset.pattern.permute.xlu0 0
        %540 = vperm.xlu0 %539, %v507
        %v541 = vpop.permute.xlu0 %540
        %542 = vset.pattern.permute.xlu0 0
        %543 = vperm.xlu0 %542, %v508
        %v544 = vpop.permute.xlu0 %543
        %545 = vset.pattern.permute.xlu0 0
        %546 = vperm.xlu0 %545, %v509
        %v547 = vpop.permute.xlu0 %546
        %548 = vset.pattern.permute.xlu0 0
        %549 = vperm.xlu0 %548, %v510
        %v550 = vpop.permute.xlu0 %549
        %551 = vset.pattern.permute.xlu0 0
        %552 = vperm.xlu0 %551, %v511
        %v553 = vpop.permute.xlu0 %552
        %554 = vset.pattern.permute.xlu0 0
        %555 = vperm.xlu0 %554, %v512
        %v556 = vpop.permute.xlu0 %555
        %557 = vset.pattern.permute.xlu0 0
        %558 = vperm.xlu0 %557, %v513
        %v559 = vpop.permute.xlu0 %558
        %560 = vset.pattern.permute.xlu0 0
        %561 = vperm.xlu0 %560, %v514
        %v562 = vpop.permute.xlu0 %561
        %vm563 = vcmp.eq.s32.totalorder %v495, %v517
        %vm564 = vcmp.eq.s32.totalorder %v496, %v517
        %vm565 = vcmp.eq.s32.totalorder %v497, %v517
        %vm566 = vcmp.eq.s32.totalorder %v498, %v517
        %vm567 = vcmp.eq.s32.totalorder %v495, %v520
        %vm568 = vcmp.eq.s32.totalorder %v496, %v520
        %vm569 = vcmp.eq.s32.totalorder %v497, %v520
        %vm570 = vcmp.eq.s32.totalorder %v498, %v520
        %vm571 = vcmp.eq.s32.totalorder %v495, %v523
        %vm572 = vcmp.eq.s32.totalorder %v496, %v523
        %vm573 = vcmp.eq.s32.totalorder %v497, %v523
        %vm574 = vcmp.eq.s32.totalorder %v498, %v523
        %vm575 = vcmp.eq.s32.totalorder %v495, %v526
        %vm576 = vcmp.eq.s32.totalorder %v496, %v526
        %vm577 = vcmp.eq.s32.totalorder %v497, %v526
        %vm578 = vcmp.eq.s32.totalorder %v498, %v526
        %vm579 = vcmp.eq.s32.totalorder %v495, %v529
        %vm580 = vcmp.eq.s32.totalorder %v496, %v529
        %vm581 = vcmp.eq.s32.totalorder %v497, %v529
        %vm582 = vcmp.eq.s32.totalorder %v498, %v529
        %vm583 = vcmp.eq.s32.totalorder %v495, %v532
        %vm584 = vcmp.eq.s32.totalorder %v496, %v532
        %vm585 = vcmp.eq.s32.totalorder %v497, %v532
        %vm586 = vcmp.eq.s32.totalorder %v498, %v532
        %vm587 = vcmp.eq.s32.totalorder %v495, %v535
        %vm588 = vcmp.eq.s32.totalorder %v496, %v535
        %vm589 = vcmp.eq.s32.totalorder %v497, %v535
        %vm590 = vcmp.eq.s32.totalorder %v498, %v535
        %vm591 = vcmp.eq.s32.totalorder %v495, %v538
        %vm592 = vcmp.eq.s32.totalorder %v496, %v538
        %vm593 = vcmp.eq.s32.totalorder %v497, %v538
        %vm594 = vcmp.eq.s32.totalorder %v498, %v538
        %vm595 = vcmp.eq.s32.totalorder %v495, %v541
        %vm596 = vcmp.eq.s32.totalorder %v496, %v541
        %vm597 = vcmp.eq.s32.totalorder %v497, %v541
        %vm598 = vcmp.eq.s32.totalorder %v498, %v541
        %vm599 = vcmp.eq.s32.totalorder %v495, %v544
        %vm600 = vcmp.eq.s32.totalorder %v496, %v544
        %vm601 = vcmp.eq.s32.totalorder %v497, %v544
        %vm602 = vcmp.eq.s32.totalorder %v498, %v544
        %vm603 = vcmp.eq.s32.totalorder %v495, %v547
        %vm604 = vcmp.eq.s32.totalorder %v496, %v547
        %vm605 = vcmp.eq.s32.totalorder %v497, %v547
        %vm606 = vcmp.eq.s32.totalorder %v498, %v547
        %vm607 = vcmp.eq.s32.totalorder %v495, %v550
        %vm608 = vcmp.eq.s32.totalorder %v496, %v550
        %vm609 = vcmp.eq.s32.totalorder %v497, %v550
        %vm610 = vcmp.eq.s32.totalorder %v498, %v550
        %vm611 = vcmp.eq.s32.totalorder %v495, %v553
        %vm612 = vcmp.eq.s32.totalorder %v496, %v553
        %vm613 = vcmp.eq.s32.totalorder %v497, %v553
        %vm614 = vcmp.eq.s32.totalorder %v498, %v553
        %vm615 = vcmp.eq.s32.totalorder %v495, %v556
        %vm616 = vcmp.eq.s32.totalorder %v496, %v556
        %vm617 = vcmp.eq.s32.totalorder %v497, %v556
        %vm618 = vcmp.eq.s32.totalorder %v498, %v556
        %vm619 = vcmp.eq.s32.totalorder %v495, %v559
        %vm620 = vcmp.eq.s32.totalorder %v496, %v559
        %vm621 = vcmp.eq.s32.totalorder %v497, %v559
        %vm622 = vcmp.eq.s32.totalorder %v498, %v559
        %vm623 = vcmp.eq.s32.totalorder %v495, %v562
        %vm624 = vcmp.eq.s32.totalorder %v496, %v562
        %vm625 = vcmp.eq.s32.totalorder %v497, %v562
        %vm626 = vcmp.eq.s32.totalorder %v498, %v562
        %v627 = vsel %vm563, 1, 0
        %v628 = vsel %vm564, 1, 0
        %v629 = vsel %vm565, 1, 0
        %v630 = vsel %vm566, 1, 0
        %v631 = vsel %vm567, 1, 0
        %v632 = vsel %vm568, 1, 0
        %v633 = vsel %vm569, 1, 0
        %v634 = vsel %vm570, 1, 0
        %v635 = vsel %vm571, 1, 0
        %v636 = vsel %vm572, 1, 0
        %v637 = vsel %vm573, 1, 0
        %v638 = vsel %vm574, 1, 0
        %v639 = vsel %vm575, 1, 0
        %v640 = vsel %vm576, 1, 0
        %v641 = vsel %vm577, 1, 0
        %v642 = vsel %vm578, 1, 0
        %v643 = vsel %vm579, 1, 0
        %v644 = vsel %vm580, 1, 0
        %v645 = vsel %vm581, 1, 0
        %v646 = vsel %vm582, 1, 0
        %v647 = vsel %vm583, 1, 0
        %v648 = vsel %vm584, 1, 0
        %v649 = vsel %vm585, 1, 0
        %v650 = vsel %vm586, 1, 0
        %v651 = vsel %vm587, 1, 0
        %v652 = vsel %vm588, 1, 0
        %v653 = vsel %vm589, 1, 0
        %v654 = vsel %vm590, 1, 0
        %v655 = vsel %vm591, 1, 0
        %v656 = vsel %vm592, 1, 0
        %v657 = vsel %vm593, 1, 0
        %v658 = vsel %vm594, 1, 0
        %v659 = vsel %vm595, 1, 0
        %v660 = vsel %vm596, 1, 0
        %v661 = vsel %vm597, 1, 0
        %v662 = vsel %vm598, 1, 0
        %v663 = vsel %vm599, 1, 0
        %v664 = vsel %vm600, 1, 0
        %v665 = vsel %vm601, 1, 0
        %v666 = vsel %vm602, 1, 0
        %v667 = vsel %vm603, 1, 0
        %v668 = vsel %vm604, 1, 0
        %v669 = vsel %vm605, 1, 0
        %v670 = vsel %vm606, 1, 0
        %v671 = vsel %vm607, 1, 0
        %v672 = vsel %vm608, 1, 0
        %v673 = vsel %vm609, 1, 0
        %v674 = vsel %vm610, 1, 0
        %v675 = vsel %vm611, 1, 0
        %v676 = vsel %vm612, 1, 0
        %v677 = vsel %vm613, 1, 0
        %v678 = vsel %vm614, 1, 0
        %v679 = vsel %vm615, 1, 0
        %v680 = vsel %vm616, 1, 0
        %v681 = vsel %vm617, 1, 0
        %v682 = vsel %vm618, 1, 0
        %v683 = vsel %vm619, 1, 0
        %v684 = vsel %vm620, 1, 0
        %v685 = vsel %vm621, 1, 0
        %v686 = vsel %vm622, 1, 0
        %v687 = vsel %vm623, 1, 0
        %v688 = vsel %vm624, 1, 0
        %v689 = vsel %vm625, 1, 0
        %v690 = vsel %vm626, 1, 0
        %v691 = vcvt.s32.f32 %v627
        %v692 = vcvt.s32.f32 %v628
        %v693 = vcvt.s32.f32 %v629
        %v694 = vcvt.s32.f32 %v630
        %v695 = vcvt.s32.f32 %v631
        %v696 = vcvt.s32.f32 %v632
        %v697 = vcvt.s32.f32 %v633
        %v698 = vcvt.s32.f32 %v634
        %v699 = vcvt.s32.f32 %v635
        %v700 = vcvt.s32.f32 %v636
        %v701 = vcvt.s32.f32 %v637
        %v702 = vcvt.s32.f32 %v638
        %v703 = vcvt.s32.f32 %v639
        %v704 = vcvt.s32.f32 %v640
        %v705 = vcvt.s32.f32 %v641
        %v706 = vcvt.s32.f32 %v642
        %v707 = vcvt.s32.f32 %v643
        %v708 = vcvt.s32.f32 %v644
        %v709 = vcvt.s32.f32 %v645
        %v710 = vcvt.s32.f32 %v646
        %v711 = vcvt.s32.f32 %v647
        %v712 = vcvt.s32.f32 %v648
        %v713 = vcvt.s32.f32 %v649
        %v714 = vcvt.s32.f32 %v650
        %v715 = vcvt.s32.f32 %v651
        %v716 = vcvt.s32.f32 %v652
        %v717 = vcvt.s32.f32 %v653
        %v718 = vcvt.s32.f32 %v654
        %v719 = vcvt.s32.f32 %v655
        %v720 = vcvt.s32.f32 %v656
        %v721 = vcvt.s32.f32 %v657
        %v722 = vcvt.s32.f32 %v658
        %v723 = vcvt.s32.f32 %v659
        %v724 = vcvt.s32.f32 %v660
        %v725 = vcvt.s32.f32 %v661
        %v726 = vcvt.s32.f32 %v662
        %v727 = vcvt.s32.f32 %v663
        %v728 = vcvt.s32.f32 %v664
        %v729 = vcvt.s32.f32 %v665
        %v730 = vcvt.s32.f32 %v666
        %v731 = vcvt.s32.f32 %v667
        %v732 = vcvt.s32.f32 %v668
        %v733 = vcvt.s32.f32 %v669
        %v734 = vcvt.s32.f32 %v670
        %v735 = vcvt.s32.f32 %v671
        %v736 = vcvt.s32.f32 %v672
        %v737 = vcvt.s32.f32 %v673
        %v738 = vcvt.s32.f32 %v674
        %v739 = vcvt.s32.f32 %v675
        %v740 = vcvt.s32.f32 %v676
        %v741 = vcvt.s32.f32 %v677
        %v742 = vcvt.s32.f32 %v678
        %v743 = vcvt.s32.f32 %v679
        %v744 = vcvt.s32.f32 %v680
        %v745 = vcvt.s32.f32 %v681
        %v746 = vcvt.s32.f32 %v682
        %v747 = vcvt.s32.f32 %v683
        %v748 = vcvt.s32.f32 %v684
        %v749 = vcvt.s32.f32 %v685
        %v750 = vcvt.s32.f32 %v686
        %v751 = vcvt.s32.f32 %v687
        %v752 = vcvt.s32.f32 %v688
        %v753 = vcvt.s32.f32 %v689
        %v754 = vcvt.s32.f32 %v690
        %v755 = vpack.c.bf16 %v695, %v691
        %v756 = vpack.c.bf16 %v696, %v692
        %v757 = vpack.c.bf16 %v697, %v693
        %v758 = vpack.c.bf16 %v698, %v694
        %v759 = vpack.c.bf16 %v703, %v699
        %v760 = vpack.c.bf16 %v704, %v700
        %v761 = vpack.c.bf16 %v705, %v701
        %v762 = vpack.c.bf16 %v706, %v702
        %v763 = vpack.c.bf16 %v711, %v707
        %v764 = vpack.c.bf16 %v712, %v708
        %v765 = vpack.c.bf16 %v713, %v709
        %v766 = vpack.c.bf16 %v714, %v710
        %v767 = vpack.c.bf16 %v719, %v715
        %v768 = vpack.c.bf16 %v720, %v716
        %v769 = vpack.c.bf16 %v721, %v717
        %v770 = vpack.c.bf16 %v722, %v718
        %v771 = vpack.c.bf16 %v727, %v723
        %v772 = vpack.c.bf16 %v728, %v724
        %v773 = vpack.c.bf16 %v729, %v725
        %v774 = vpack.c.bf16 %v730, %v726
        %v775 = vpack.c.bf16 %v735, %v731
        %v776 = vpack.c.bf16 %v736, %v732
        %v777 = vpack.c.bf16 %v737, %v733
        %v778 = vpack.c.bf16 %v738, %v734
        %v779 = vpack.c.bf16 %v743, %v739
        %v780 = vpack.c.bf16 %v744, %v740
        %v781 = vpack.c.bf16 %v745, %v741
        %v782 = vpack.c.bf16 %v746, %v742
        %v783 = vpack.c.bf16 %v751, %v747
        %v784 = vpack.c.bf16 %v752, %v748
        %v785 = vpack.c.bf16 %v753, %v749
        %v786 = vpack.c.bf16 %v754, %v750
        %787 = vmatprep.subr.bf16.mxu0 %v784
        %788 = vmatpush1.bf16.msra.mxu0 %v783
        %789 = vmatprep.subr.bf16.mxu0 %v780
        %790 = vmatpush1.bf16.msra.mxu0 %v779
        %791 = vmatprep.subr.bf16.mxu0 %v776
        %792 = vmatpush1.bf16.msra.mxu0 %v775
        %793 = vmatprep.subr.bf16.mxu0 %v772
        %794 = vmatpush1.bf16.msra.mxu0 %v771
        %795 = vmatprep.subr.bf16.mxu0 %v768
        %796 = vmatpush1.bf16.msra.mxu0 %v767
        %797 = vmatprep.subr.bf16.mxu0 %v764
        %798 = vmatpush1.bf16.msra.mxu0 %v763
        %799 = vmatprep.subr.bf16.mxu0 %v760
        %800 = vmatpush1.bf16.msra.mxu0 %v759
        %801 = vmatprep.subr.bf16.mxu0 %v756
        %802 = vmatpush1.bf16.msra.mxu0 %v755
        %803 = vmatprep.subr.bf16.mxu0 0
        %804 = vmatpush2.bf16.msra.mxu0 0
        %805 = vmatprep.subr.bf16.mxu0 0
        %806 = vmatpush2.bf16.msra.mxu0 0
        %807 = vmatprep.subr.bf16.mxu0 0
        %808 = vmatpush2.bf16.msra.mxu0 0
        %809 = vmatprep.subr.bf16.mxu0 0
        %810 = vmatpush2.bf16.msra.mxu0 0
        %811 = vmatprep.subr.bf16.mxu0 0
        %812 = vmatpush2.bf16.msra.mxu0 0
        %813 = vmatprep.subr.bf16.mxu0 0
        %814 = vmatpush2.bf16.msra.mxu0 0
        %815 = vmatprep.subr.bf16.mxu0 0
        %816 = vmatpush2.bf16.msra.mxu0 0
        %817 = vmatprep.subr.bf16.mxu0 0
        %818 = vmatpush2.bf16.msra.mxu0 0
        %819 = vmatprep.mubr.bf16.mxu0 0
        %820 = vmatmul.mubr.bf16.gmra.mxu0 %v493
        %v821 = vpop.f32.mrf.mxu0
        %v822 = vadd.f32 0.0, %v821
        %v823 = vpop.f32.mrf.mxu0
        %v824 = vadd.f32 0.0, %v823
        %v825 = vpop.f32.mrf.mxu0
        %v826 = vadd.f32 0.0, %v825
        %v827 = vpop.f32.mrf.mxu0
        %v828 = vadd.f32 0.0, %v827
        %829 = vdwg.mxu0
        %830 = vmatprep.subr.bf16.mxu0 %v786
        %831 = vmatpush1.bf16.msra.mxu0 %v785
        %832 = vmatprep.subr.bf16.mxu0 %v782
        %833 = vmatpush1.bf16.msra.mxu0 %v781
        %834 = vmatprep.subr.bf16.mxu0 %v778
        %835 = vmatpush1.bf16.msra.mxu0 %v777
        %836 = vmatprep.subr.bf16.mxu0 %v774
        %837 = vmatpush1.bf16.msra.mxu0 %v773
        %838 = vmatprep.subr.bf16.mxu0 %v770
        %839 = vmatpush1.bf16.msra.mxu0 %v769
        %840 = vmatprep.subr.bf16.mxu0 %v766
        %841 = vmatpush1.bf16.msra.mxu0 %v765
        %842 = vmatprep.subr.bf16.mxu0 %v762
        %843 = vmatpush1.bf16.msra.mxu0 %v761
        %844 = vmatprep.subr.bf16.mxu0 %v758
        %845 = vmatpush1.bf16.msra.mxu0 %v757
        %846 = vmatprep.subr.bf16.mxu0 0
        %847 = vmatpush2.bf16.msra.mxu0 0
        %848 = vmatprep.subr.bf16.mxu0 0
        %849 = vmatpush2.bf16.msra.mxu0 0
        %850 = vmatprep.subr.bf16.mxu0 0
        %851 = vmatpush2.bf16.msra.mxu0 0
        %852 = vmatprep.subr.bf16.mxu0 0
        %853 = vmatpush2.bf16.msra.mxu0 0
        %854 = vmatprep.subr.bf16.mxu0 0
        %855 = vmatpush2.bf16.msra.mxu0 0
        %856 = vmatprep.subr.bf16.mxu0 0
        %857 = vmatpush2.bf16.msra.mxu0 0
        %858 = vmatprep.subr.bf16.mxu0 0
        %859 = vmatpush2.bf16.msra.mxu0 0
        %860 = vmatprep.subr.bf16.mxu0 0
        %861 = vmatpush2.bf16.msra.mxu0 0
        %862 = vmatprep.mubr.bf16.mxu0 0
        %863 = vmatmul.mubr.bf16.gmra.mxu0 %v493
        %v864 = vpop.f32.mrf.mxu0
        %v865 = vadd.f32 0.0, %v864
        %v866 = vpop.f32.mrf.mxu0
        %v867 = vadd.f32 0.0, %v866
        %v868 = vpop.f32.mrf.mxu0
        %v869 = vadd.f32 0.0, %v868
        %v870 = vpop.f32.mrf.mxu0
        %v871 = vadd.f32 0.0, %v870
        %872 = vdwg.mxu0
        %vm873 = vcmp.gt.f32.partialorder %v826, 0.5
        %vm874 = vcmp.gt.f32.partialorder %v828, 0.5
        %vm875 = vcmp.gt.f32.partialorder %v869, 0.5
        %vm876 = vcmp.gt.f32.partialorder %v871, 0.5
        %v877 = vmax.f32 %v826, 1.0
        %v878 = vmax.f32 %v828, 1.0
        %v879 = vmax.f32 %v869, 1.0
        %v880 = vmax.f32 %v871, 1.0
        %v881 = vrcp.pop %v877
        %v882 = vrcp.pop %v878
        %v883 = vrcp.pop %v879
        %v884 = vrcp.pop %v880
        %v885 = vsel %vm873, %v881, 0.0
        %v886 = vsel %vm874, %v882, 0.0
        %v887 = vsel %vm875, %v883, 0.0
        %v888 = vsel %vm876, %v884, 0.0
        %v889 = vlaneseq
        %v890 = vshrl.u32 %v889, 7
        %v891 = vsub.s32 0, %v890
        %v892 = vrot.slane %v885, %v891
        %v893 = vlaneseq
        %v894 = vshrl.u32 %v893, 7
        %v895 = vsub.s32 0, %v894
        %v896 = vrot.slane %v886, %v895
        %v897 = vlaneseq
        %v898 = vshrl.u32 %v897, 7
        %v899 = vsub.s32 0, %v898
        %v900 = vrot.slane %v887, %v899
        %v901 = vlaneseq
        %v902 = vshrl.u32 %v901, 7
        %v903 = vsub.s32 0, %v902
        %v904 = vrot.slane %v888, %v903
        %v905 = vmul.f32 %v822, %v892
        %v906 = vmul.f32 %v824, %v896
        %v907 = vmul.f32 %v865, %v900
        %v908 = vmul.f32 %v867, %v904
        %v909 = vld [vmem:[%s4] sm:$0xff]
        %v910 = vld [vmem:[%s4 + $0x8] sm:$0xff]
        %v911 = vld [vmem:[%s4 + $0x10] sm:$0xff]
        %v912 = vld [vmem:[%s4 + $0x18] sm:$0xff]
        %v913 = vld [vmem:[%s4 + $0x20] sm:$0xff]
        %v914 = vld [vmem:[%s4 + $0x28] sm:$0xff]
        %v915 = vld [vmem:[%s4 + $0x30] sm:$0xff]
        %v916 = vld [vmem:[%s4 + $0x38] sm:$0xff]
        %v917 = vld [vmem:[%s4 + $0x40] sm:$0xff]
        %v918 = vld [vmem:[%s4 + $0x48] sm:$0xff]
        %v919 = vld [vmem:[%s4 + $0x50] sm:$0xff]
        %v920 = vld [vmem:[%s4 + $0x58] sm:$0xff]
        %v921 = vld [vmem:[%s4 + $0x60] sm:$0x7]
        %v922 = vld [vmem:[%s4 + $0x68] sm:$0x7]
        %v923 = vld [vmem:[%s4 + $0x70] sm:$0x7]
        %v924 = vld [vmem:[%s4 + $0x78] sm:$0x7]
        %v925 = vld [vmem:[%s6] sm:$0xff]
        %926 = vrot.lane.b32.xlu0 %v905, 73
        %v927 = vpop.permute.xlu0 %926
        %928 = vrot.lane.b32.xlu0 %v906, 73
        %v929 = vpop.permute.xlu0 %928
        %930 = vrot.lane.b32.xlu0 %v907, 73
        %v931 = vpop.permute.xlu0 %930
        %932 = vrot.lane.b32.xlu0 %v908, 73
        %v933 = vpop.permute.xlu0 %932
        %vm934 = vcmp.lt.s32.totalorder %v495, 73
        %v935 = vsel %vm934, %v931, %v933
        %v936 = vsel %vm934, %v929, %v931
        %v937 = vsel %vm934, %v927, %v929
        %v938 = vsel %vm934, %v933, %v927
        %v939 = vlaneseq
        %v940 = vshrl.u32 %v939, 7
        %v941 = vsub.s32 0, %v940
        %v942 = vrot.slane %v909, %v941
        %v943 = vlaneseq
        %v944 = vshrl.u32 %v943, 7
        %v945 = vsub.s32 0, %v944
        %v946 = vrot.slane %v910, %v945
        %v947 = vlaneseq
        %v948 = vshrl.u32 %v947, 7
        %v949 = vsub.s32 0, %v948
        %v950 = vrot.slane %v911, %v949
        %v951 = vlaneseq
        %v952 = vshrl.u32 %v951, 7
        %v953 = vsub.s32 0, %v952
        %v954 = vrot.slane %v912, %v953
        %v955 = vmul.f32 %v938, %v942
        %v956 = vmul.f32 %v937, %v946
        %v957 = vmul.f32 %v936, %v950
        %v958 = vmul.f32 %v935, %v954
        %959 = vrot.lane.b32.xlu0 %v905, 72
        %v960 = vpop.permute.xlu0 %959
        %961 = vrot.lane.b32.xlu0 %v906, 72
        %v962 = vpop.permute.xlu0 %961
        %963 = vrot.lane.b32.xlu0 %v907, 72
        %v964 = vpop.permute.xlu0 %963
        %965 = vrot.lane.b32.xlu0 %v908, 72
        %v966 = vpop.permute.xlu0 %965
        %vm967 = vcmp.lt.s32.totalorder %v495, 72
        %v968 = vsel %vm967, %v964, %v966
        %v969 = vsel %vm967, %v962, %v964
        %v970 = vsel %vm967, %v960, %v962
        %v971 = vsel %vm967, %v966, %v960
        %v972 = vlaneseq
        %v973 = vshrl.u32 %v972, 7
        %v974 = vsub.s32 1, %v973
        %v975 = vrot.slane %v909, %v974
        %v976 = vlaneseq
        %v977 = vshrl.u32 %v976, 7
        %v978 = vsub.s32 1, %v977
        %v979 = vrot.slane %v910, %v978
        %v980 = vlaneseq
        %v981 = vshrl.u32 %v980, 7
        %v982 = vsub.s32 1, %v981
        %v983 = vrot.slane %v911, %v982
        %v984 = vlaneseq
        %v985 = vshrl.u32 %v984, 7
        %v986 = vsub.s32 1, %v985
        %v987 = vrot.slane %v912, %v986
        %v988 = vmul.f32 %v971, %v975
        %v989 = vmul.f32 %v970, %v979
        %v990 = vmul.f32 %v969, %v983
        %v991 = vmul.f32 %v968, %v987
        %992 = vrot.lane.b32.xlu0 %v905, 71
        %v993 = vpop.permute.xlu0 %992
        %994 = vrot.lane.b32.xlu0 %v906, 71
        %v995 = vpop.permute.xlu0 %994
        %996 = vrot.lane.b32.xlu0 %v907, 71
        %v997 = vpop.permute.xlu0 %996
        %998 = vrot.lane.b32.xlu0 %v908, 71
        %v999 = vpop.permute.xlu0 %998
        %vm1000 = vcmp.lt.s32.totalorder %v495, 71
        %v1001 = vsel %vm1000, %v997, %v999
        %v1002 = vsel %vm1000, %v995, %v997
        %v1003 = vsel %vm1000, %v993, %v995
        %v1004 = vsel %vm1000, %v999, %v993
        %v1005 = vlaneseq
        %v1006 = vshrl.u32 %v1005, 7
        %v1007 = vsub.s32 2, %v1006
        %v1008 = vrot.slane %v909, %v1007
        %v1009 = vlaneseq
        %v1010 = vshrl.u32 %v1009, 7
        %v1011 = vsub.s32 2, %v1010
        %v1012 = vrot.slane %v910, %v1011
        %v1013 = vlaneseq
        %v1014 = vshrl.u32 %v1013, 7
        %v1015 = vsub.s32 2, %v1014
        %v1016 = vrot.slane %v911, %v1015
        %v1017 = vlaneseq
        %v1018 = vshrl.u32 %v1017, 7
        %v1019 = vsub.s32 2, %v1018
        %v1020 = vrot.slane %v912, %v1019
        %v1021 = vmul.f32 %v1004, %v1008
        %v1022 = vmul.f32 %v1003, %v1012
        %v1023 = vmul.f32 %v1002, %v1016
        %v1024 = vmul.f32 %v1001, %v1020
        %1025 = vrot.lane.b32.xlu0 %v905, 65
        %v1026 = vpop.permute.xlu0 %1025
        %1027 = vrot.lane.b32.xlu0 %v906, 65
        %v1028 = vpop.permute.xlu0 %1027
        %1029 = vrot.lane.b32.xlu0 %v907, 65
        %v1030 = vpop.permute.xlu0 %1029
        %1031 = vrot.lane.b32.xlu0 %v908, 65
        %v1032 = vpop.permute.xlu0 %1031
        %vm1033 = vcmp.lt.s32.totalorder %v495, 65
        %v1034 = vsel %vm1033, %v1030, %v1032
        %v1035 = vsel %vm1033, %v1028, %v1030
        %v1036 = vsel %vm1033, %v1026, %v1028
        %v1037 = vsel %vm1033, %v1032, %v1026
        %v1038 = vlaneseq
        %v1039 = vshrl.u32 %v1038, 7
        %v1040 = vsub.s32 3, %v1039
        %v1041 = vrot.slane %v909, %v1040
        %v1042 = vlaneseq
        %v1043 = vshrl.u32 %v1042, 7
        %v1044 = vsub.s32 3, %v1043
        %v1045 = vrot.slane %v910, %v1044
        %v1046 = vlaneseq
        %v1047 = vshrl.u32 %v1046, 7
        %v1048 = vsub.s32 3, %v1047
        %v1049 = vrot.slane %v911, %v1048
        %v1050 = vlaneseq
        %v1051 = vshrl.u32 %v1050, 7
        %v1052 = vsub.s32 3, %v1051
        %v1053 = vrot.slane %v912, %v1052
        %v1054 = vmul.f32 %v1037, %v1041
        %v1055 = vmul.f32 %v1036, %v1045
        %v1056 = vmul.f32 %v1035, %v1049
        %v1057 = vmul.f32 %v1034, %v1053
        %1058 = vrot.lane.b32.xlu0 %v905, 64
        %v1059 = vpop.permute.xlu0 %1058
        %1060 = vrot.lane.b32.xlu0 %v906, 64
        %v1061 = vpop.permute.xlu0 %1060
        %1062 = vrot.lane.b32.xlu0 %v907, 64
        %v1063 = vpop.permute.xlu0 %1062
        %1064 = vrot.lane.b32.xlu0 %v908, 64
        %v1065 = vpop.permute.xlu0 %1064
        %vm1066 = vcmp.lt.s32.totalorder %v495, 64
        %v1067 = vsel %vm1066, %v1063, %v1065
        %v1068 = vsel %vm1066, %v1061, %v1063
        %v1069 = vsel %vm1066, %v1059, %v1061
        %v1070 = vsel %vm1066, %v1065, %v1059
        %v1071 = vlaneseq
        %v1072 = vshrl.u32 %v1071, 7
        %v1073 = vsub.s32 4, %v1072
        %v1074 = vrot.slane %v909, %v1073
        %v1075 = vlaneseq
        %v1076 = vshrl.u32 %v1075, 7
        %v1077 = vsub.s32 4, %v1076
        %v1078 = vrot.slane %v910, %v1077
        %v1079 = vlaneseq
        %v1080 = vshrl.u32 %v1079, 7
        %v1081 = vsub.s32 4, %v1080
        %v1082 = vrot.slane %v911, %v1081
        %v1083 = vlaneseq
        %v1084 = vshrl.u32 %v1083, 7
        %v1085 = vsub.s32 4, %v1084
        %v1086 = vrot.slane %v912, %v1085
        %v1087 = vmul.f32 %v1070, %v1074
        %v1088 = vmul.f32 %v1069, %v1078
        %v1089 = vmul.f32 %v1068, %v1082
        %v1090 = vmul.f32 %v1067, %v1086
        %1091 = vrot.lane.b32.xlu0 %v905, 63
        %v1092 = vpop.permute.xlu0 %1091
        %1093 = vrot.lane.b32.xlu0 %v906, 63
        %v1094 = vpop.permute.xlu0 %1093
        %1095 = vrot.lane.b32.xlu0 %v907, 63
        %v1096 = vpop.permute.xlu0 %1095
        %1097 = vrot.lane.b32.xlu0 %v908, 63
        %v1098 = vpop.permute.xlu0 %1097
        %vm1099 = vcmp.lt.s32.totalorder %v495, 63
        %v1100 = vsel %vm1099, %v1096, %v1098
        %v1101 = vsel %vm1099, %v1094, %v1096
        %v1102 = vsel %vm1099, %v1092, %v1094
        %v1103 = vsel %vm1099, %v1098, %v1092
        %v1104 = vlaneseq
        %v1105 = vshrl.u32 %v1104, 7
        %v1106 = vsub.s32 5, %v1105
        %v1107 = vrot.slane %v909, %v1106
        %v1108 = vlaneseq
        %v1109 = vshrl.u32 %v1108, 7
        %v1110 = vsub.s32 5, %v1109
        %v1111 = vrot.slane %v910, %v1110
        %v1112 = vlaneseq
        %v1113 = vshrl.u32 %v1112, 7
        %v1114 = vsub.s32 5, %v1113
        %v1115 = vrot.slane %v911, %v1114
        %v1116 = vlaneseq
        %v1117 = vshrl.u32 %v1116, 7
        %v1118 = vsub.s32 5, %v1117
        %v1119 = vrot.slane %v912, %v1118
        %v1120 = vmul.f32 %v1103, %v1107
        %v1121 = vmul.f32 %v1102, %v1111
        %v1122 = vmul.f32 %v1101, %v1115
        %v1123 = vmul.f32 %v1100, %v1119
        %1124 = vrot.lane.b32.xlu0 %v905, 57
        %v1125 = vpop.permute.xlu0 %1124
        %1126 = vrot.lane.b32.xlu0 %v906, 57
        %v1127 = vpop.permute.xlu0 %1126
        %1128 = vrot.lane.b32.xlu0 %v907, 57
        %v1129 = vpop.permute.xlu0 %1128
        %1130 = vrot.lane.b32.xlu0 %v908, 57
        %v1131 = vpop.permute.xlu0 %1130
        %vm1132 = vcmp.lt.s32.totalorder %v495, 57
        %v1133 = vsel %vm1132, %v1129, %v1131
        %v1134 = vsel %vm1132, %v1127, %v1129
        %v1135 = vsel %vm1132, %v1125, %v1127
        %v1136 = vsel %vm1132, %v1131, %v1125
        %v1137 = vlaneseq
        %v1138 = vshrl.u32 %v1137, 7
        %v1139 = vsub.s32 6, %v1138
        %v1140 = vrot.slane %v909, %v1139
        %v1141 = vlaneseq
        %v1142 = vshrl.u32 %v1141, 7
        %v1143 = vsub.s32 6, %v1142
        %v1144 = vrot.slane %v910, %v1143
        %v1145 = vlaneseq
        %v1146 = vshrl.u32 %v1145, 7
        %v1147 = vsub.s32 6, %v1146
        %v1148 = vrot.slane %v911, %v1147
        %v1149 = vlaneseq
        %v1150 = vshrl.u32 %v1149, 7
        %v1151 = vsub.s32 6, %v1150
        %v1152 = vrot.slane %v912, %v1151
        %v1153 = vmul.f32 %v1136, %v1140
        %v1154 = vmul.f32 %v1135, %v1144
        %v1155 = vmul.f32 %v1134, %v1148
        %v1156 = vmul.f32 %v1133, %v1152
        %1157 = vrot.lane.b32.xlu0 %v905, 56
        %v1158 = vpop.permute.xlu0 %1157
        %1159 = vrot.lane.b32.xlu0 %v906, 56
        %v1160 = vpop.permute.xlu0 %1159
        %1161 = vrot.lane.b32.xlu0 %v907, 56
        %v1162 = vpop.permute.xlu0 %1161
        %1163 = vrot.lane.b32.xlu0 %v908, 56
        %v1164 = vpop.permute.xlu0 %1163
        %vm1165 = vcmp.lt.s32.totalorder %v495, 56
        %v1166 = vsel %vm1165, %v1162, %v1164
        %v1167 = vsel %vm1165, %v1160, %v1162
        %v1168 = vsel %vm1165, %v1158, %v1160
        %v1169 = vsel %vm1165, %v1164, %v1158
        %v1170 = vlaneseq
        %v1171 = vshrl.u32 %v1170, 7
        %v1172 = vsub.s32 7, %v1171
        %v1173 = vrot.slane %v909, %v1172
        %v1174 = vlaneseq
        %v1175 = vshrl.u32 %v1174, 7
        %v1176 = vsub.s32 7, %v1175
        %v1177 = vrot.slane %v910, %v1176
        %v1178 = vlaneseq
        %v1179 = vshrl.u32 %v1178, 7
        %v1180 = vsub.s32 7, %v1179
        %v1181 = vrot.slane %v911, %v1180
        %v1182 = vlaneseq
        %v1183 = vshrl.u32 %v1182, 7
        %v1184 = vsub.s32 7, %v1183
        %v1185 = vrot.slane %v912, %v1184
        %v1186 = vmul.f32 %v1169, %v1173
        %v1187 = vmul.f32 %v1168, %v1177
        %v1188 = vmul.f32 %v1167, %v1181
        %v1189 = vmul.f32 %v1166, %v1185
        %1190 = vrot.lane.b32.xlu0 %v905, 55
        %v1191 = vpop.permute.xlu0 %1190
        %1192 = vrot.lane.b32.xlu0 %v906, 55
        %v1193 = vpop.permute.xlu0 %1192
        %1194 = vrot.lane.b32.xlu0 %v907, 55
        %v1195 = vpop.permute.xlu0 %1194
        %1196 = vrot.lane.b32.xlu0 %v908, 55
        %v1197 = vpop.permute.xlu0 %1196
        %vm1198 = vcmp.lt.s32.totalorder %v495, 55
        %v1199 = vsel %vm1198, %v1195, %v1197
        %v1200 = vsel %vm1198, %v1193, %v1195
        %v1201 = vsel %vm1198, %v1191, %v1193
        %v1202 = vsel %vm1198, %v1197, %v1191
        %v1203 = vlaneseq
        %v1204 = vshrl.u32 %v1203, 7
        %v1205 = vsub.s32 0, %v1204
        %v1206 = vrot.slane %v913, %v1205
        %v1207 = vlaneseq
        %v1208 = vshrl.u32 %v1207, 7
        %v1209 = vsub.s32 0, %v1208
        %v1210 = vrot.slane %v914, %v1209
        %v1211 = vlaneseq
        %v1212 = vshrl.u32 %v1211, 7
        %v1213 = vsub.s32 0, %v1212
        %v1214 = vrot.slane %v915, %v1213
        %v1215 = vlaneseq
        %v1216 = vshrl.u32 %v1215, 7
        %v1217 = vsub.s32 0, %v1216
        %v1218 = vrot.slane %v916, %v1217
        %v1219 = vmul.f32 %v1202, %v1206
        %v1220 = vmul.f32 %v1201, %v1210
        %v1221 = vmul.f32 %v1200, %v1214
        %v1222 = vmul.f32 %v1199, %v1218
        %1223 = vrot.lane.b32.xlu0 %v905, 9
        %v1224 = vpop.permute.xlu0 %1223
        %1225 = vrot.lane.b32.xlu0 %v906, 9
        %v1226 = vpop.permute.xlu0 %1225
        %1227 = vrot.lane.b32.xlu0 %v907, 9
        %v1228 = vpop.permute.xlu0 %1227
        %1229 = vrot.lane.b32.xlu0 %v908, 9
        %v1230 = vpop.permute.xlu0 %1229
        %vm1231 = vcmp.lt.s32.totalorder %v495, 9
        %v1232 = vsel %vm1231, %v1228, %v1230
        %v1233 = vsel %vm1231, %v1226, %v1228
        %v1234 = vsel %vm1231, %v1224, %v1226
        %v1235 = vsel %vm1231, %v1230, %v1224
        %v1236 = vlaneseq
        %v1237 = vshrl.u32 %v1236, 7
        %v1238 = vsub.s32 1, %v1237
        %v1239 = vrot.slane %v913, %v1238
        %v1240 = vlaneseq
        %v1241 = vshrl.u32 %v1240, 7
        %v1242 = vsub.s32 1, %v1241
        %v1243 = vrot.slane %v914, %v1242
        %v1244 = vlaneseq
        %v1245 = vshrl.u32 %v1244, 7
        %v1246 = vsub.s32 1, %v1245
        %v1247 = vrot.slane %v915, %v1246
        %v1248 = vlaneseq
        %v1249 = vshrl.u32 %v1248, 7
        %v1250 = vsub.s32 1, %v1249
        %v1251 = vrot.slane %v916, %v1250
        %v1252 = vmul.f32 %v1235, %v1239
        %v1253 = vmul.f32 %v1234, %v1243
        %v1254 = vmul.f32 %v1233, %v1247
        %v1255 = vmul.f32 %v1232, %v1251
        %1256 = vrot.lane.b32.xlu0 %v905, 8
        %v1257 = vpop.permute.xlu0 %1256
        %1258 = vrot.lane.b32.xlu0 %v906, 8
        %v1259 = vpop.permute.xlu0 %1258
        %1260 = vrot.lane.b32.xlu0 %v907, 8
        %v1261 = vpop.permute.xlu0 %1260
        %1262 = vrot.lane.b32.xlu0 %v908, 8
        %v1263 = vpop.permute.xlu0 %1262
        %vm1264 = vcmp.lt.s32.totalorder %v495, 8
        %v1265 = vsel %vm1264, %v1261, %v1263
        %v1266 = vsel %vm1264, %v1259, %v1261
        %v1267 = vsel %vm1264, %v1257, %v1259
        %v1268 = vsel %vm1264, %v1263, %v1257
        %v1269 = vlaneseq
        %v1270 = vshrl.u32 %v1269, 7
        %v1271 = vsub.s32 2, %v1270
        %v1272 = vrot.slane %v913, %v1271
        %v1273 = vlaneseq
        %v1274 = vshrl.u32 %v1273, 7
        %v1275 = vsub.s32 2, %v1274
        %v1276 = vrot.slane %v914, %v1275
        %v1277 = vlaneseq
        %v1278 = vshrl.u32 %v1277, 7
        %v1279 = vsub.s32 2, %v1278
        %v1280 = vrot.slane %v915, %v1279
        %v1281 = vlaneseq
        %v1282 = vshrl.u32 %v1281, 7
        %v1283 = vsub.s32 2, %v1282
        %v1284 = vrot.slane %v916, %v1283
        %v1285 = vmul.f32 %v1268, %v1272
        %v1286 = vmul.f32 %v1267, %v1276
        %v1287 = vmul.f32 %v1266, %v1280
        %v1288 = vmul.f32 %v1265, %v1284
        %1289 = vrot.lane.b32.xlu0 %v905, 7
        %v1290 = vpop.permute.xlu0 %1289
        %1291 = vrot.lane.b32.xlu0 %v906, 7
        %v1292 = vpop.permute.xlu0 %1291
        %1293 = vrot.lane.b32.xlu0 %v907, 7
        %v1294 = vpop.permute.xlu0 %1293
        %1295 = vrot.lane.b32.xlu0 %v908, 7
        %v1296 = vpop.permute.xlu0 %1295
        %vm1297 = vcmp.lt.s32.totalorder %v495, 7
        %v1298 = vsel %vm1297, %v1294, %v1296
        %v1299 = vsel %vm1297, %v1292, %v1294
        %v1300 = vsel %vm1297, %v1290, %v1292
        %v1301 = vsel %vm1297, %v1296, %v1290
        %v1302 = vlaneseq
        %v1303 = vshrl.u32 %v1302, 7
        %v1304 = vsub.s32 3, %v1303
        %v1305 = vrot.slane %v913, %v1304
        %v1306 = vlaneseq
        %v1307 = vshrl.u32 %v1306, 7
        %v1308 = vsub.s32 3, %v1307
        %v1309 = vrot.slane %v914, %v1308
        %v1310 = vlaneseq
        %v1311 = vshrl.u32 %v1310, 7
        %v1312 = vsub.s32 3, %v1311
        %v1313 = vrot.slane %v915, %v1312
        %v1314 = vlaneseq
        %v1315 = vshrl.u32 %v1314, 7
        %v1316 = vsub.s32 3, %v1315
        %v1317 = vrot.slane %v916, %v1316
        %v1318 = vmul.f32 %v1301, %v1305
        %v1319 = vmul.f32 %v1300, %v1309
        %v1320 = vmul.f32 %v1299, %v1313
        %v1321 = vmul.f32 %v1298, %v1317
        %1322 = vrot.lane.b32.xlu0 %v905, 1
        %v1323 = vpop.permute.xlu0 %1322
        %1324 = vrot.lane.b32.xlu0 %v906, 1
        %v1325 = vpop.permute.xlu0 %1324
        %1326 = vrot.lane.b32.xlu0 %v907, 1
        %v1327 = vpop.permute.xlu0 %1326
        %1328 = vrot.lane.b32.xlu0 %v908, 1
        %v1329 = vpop.permute.xlu0 %1328
        %vm1330 = vcmp.lt.s32.totalorder %v495, 1
        %v1331 = vsel %vm1330, %v1327, %v1329
        %v1332 = vsel %vm1330, %v1325, %v1327
        %v1333 = vsel %vm1330, %v1323, %v1325
        %v1334 = vsel %vm1330, %v1329, %v1323
        %v1335 = vlaneseq
        %v1336 = vshrl.u32 %v1335, 7
        %v1337 = vsub.s32 4, %v1336
        %v1338 = vrot.slane %v913, %v1337
        %v1339 = vlaneseq
        %v1340 = vshrl.u32 %v1339, 7
        %v1341 = vsub.s32 4, %v1340
        %v1342 = vrot.slane %v914, %v1341
        %v1343 = vlaneseq
        %v1344 = vshrl.u32 %v1343, 7
        %v1345 = vsub.s32 4, %v1344
        %v1346 = vrot.slane %v915, %v1345
        %v1347 = vlaneseq
        %v1348 = vshrl.u32 %v1347, 7
        %v1349 = vsub.s32 4, %v1348
        %v1350 = vrot.slane %v916, %v1349
        %v1351 = vmul.f32 %v1334, %v1338
        %v1352 = vmul.f32 %v1333, %v1342
        %v1353 = vmul.f32 %v1332, %v1346
        %v1354 = vmul.f32 %v1331, %v1350
        %v1355 = vlaneseq
        %v1356 = vshrl.u32 %v1355, 7
        %v1357 = vsub.s32 5, %v1356
        %v1358 = vrot.slane %v913, %v1357
        %v1359 = vlaneseq
        %v1360 = vshrl.u32 %v1359, 7
        %v1361 = vsub.s32 5, %v1360
        %v1362 = vrot.slane %v914, %v1361
        %v1363 = vlaneseq
        %v1364 = vshrl.u32 %v1363, 7
        %v1365 = vsub.s32 5, %v1364
        %v1366 = vrot.slane %v915, %v1365
        %v1367 = vlaneseq
        %v1368 = vshrl.u32 %v1367, 7
        %v1369 = vsub.s32 5, %v1368
        %v1370 = vrot.slane %v916, %v1369
        %v1371 = vmul.f32 %v905, %v1358
        %v1372 = vmul.f32 %v906, %v1362
        %v1373 = vmul.f32 %v907, %v1366
        %v1374 = vmul.f32 %v908, %v1370
        %1375 = vrot.lane.b32.xlu0 %v905, 127
        %v1376 = vpop.permute.xlu0 %1375
        %1377 = vrot.lane.b32.xlu0 %v906, 127
        %v1378 = vpop.permute.xlu0 %1377
        %1379 = vrot.lane.b32.xlu0 %v907, 127
        %v1380 = vpop.permute.xlu0 %1379
        %1381 = vrot.lane.b32.xlu0 %v908, 127
        %v1382 = vpop.permute.xlu0 %1381
        %vm1383 = vcmp.lt.s32.totalorder %v495, 127
        %v1384 = vsel %vm1383, %v1380, %v1382
        %v1385 = vsel %vm1383, %v1378, %v1380
        %v1386 = vsel %vm1383, %v1376, %v1378
        %v1387 = vsel %vm1383, %v1382, %v1376
        %v1388 = vlaneseq
        %v1389 = vshrl.u32 %v1388, 7
        %v1390 = vsub.s32 6, %v1389
        %v1391 = vrot.slane %v913, %v1390
        %v1392 = vlaneseq
        %v1393 = vshrl.u32 %v1392, 7
        %v1394 = vsub.s32 6, %v1393
        %v1395 = vrot.slane %v914, %v1394
        %v1396 = vlaneseq
        %v1397 = vshrl.u32 %v1396, 7
        %v1398 = vsub.s32 6, %v1397
        %v1399 = vrot.slane %v915, %v1398
        %v1400 = vlaneseq
        %v1401 = vshrl.u32 %v1400, 7
        %v1402 = vsub.s32 6, %v1401
        %v1403 = vrot.slane %v916, %v1402
        %v1404 = vmul.f32 %v1386, %v1391
        %v1405 = vmul.f32 %v1385, %v1395
        %v1406 = vmul.f32 %v1384, %v1399
        %v1407 = vmul.f32 %v1387, %v1403
        %1408 = vrot.lane.b32.xlu0 %v905, 121
        %v1409 = vpop.permute.xlu0 %1408
        %1410 = vrot.lane.b32.xlu0 %v906, 121
        %v1411 = vpop.permute.xlu0 %1410
        %1412 = vrot.lane.b32.xlu0 %v907, 121
        %v1413 = vpop.permute.xlu0 %1412
        %1414 = vrot.lane.b32.xlu0 %v908, 121
        %v1415 = vpop.permute.xlu0 %1414
        %vm1416 = vcmp.lt.s32.totalorder %v495, 121
        %v1417 = vsel %vm1416, %v1413, %v1415
        %v1418 = vsel %vm1416, %v1411, %v1413
        %v1419 = vsel %vm1416, %v1409, %v1411
        %v1420 = vsel %vm1416, %v1415, %v1409
        %v1421 = vlaneseq
        %v1422 = vshrl.u32 %v1421, 7
        %v1423 = vsub.s32 7, %v1422
        %v1424 = vrot.slane %v913, %v1423
        %v1425 = vlaneseq
        %v1426 = vshrl.u32 %v1425, 7
        %v1427 = vsub.s32 7, %v1426
        %v1428 = vrot.slane %v914, %v1427
        %v1429 = vlaneseq
        %v1430 = vshrl.u32 %v1429, 7
        %v1431 = vsub.s32 7, %v1430
        %v1432 = vrot.slane %v915, %v1431
        %v1433 = vlaneseq
        %v1434 = vshrl.u32 %v1433, 7
        %v1435 = vsub.s32 7, %v1434
        %v1436 = vrot.slane %v916, %v1435
        %v1437 = vmul.f32 %v1419, %v1424
        %v1438 = vmul.f32 %v1418, %v1428
        %v1439 = vmul.f32 %v1417, %v1432
        %v1440 = vmul.f32 %v1420, %v1436
        %1441 = vrot.lane.b32.xlu0 %v905, 120
        %v1442 = vpop.permute.xlu0 %1441
        %1443 = vrot.lane.b32.xlu0 %v906, 120
        %v1444 = vpop.permute.xlu0 %1443
        %1445 = vrot.lane.b32.xlu0 %v907, 120
        %v1446 = vpop.permute.xlu0 %1445
        %1447 = vrot.lane.b32.xlu0 %v908, 120
        %v1448 = vpop.permute.xlu0 %1447
        %vm1449 = vcmp.lt.s32.totalorder %v495, 120
        %v1450 = vsel %vm1449, %v1446, %v1448
        %v1451 = vsel %vm1449, %v1444, %v1446
        %v1452 = vsel %vm1449, %v1442, %v1444
        %v1453 = vsel %vm1449, %v1448, %v1442
        %v1454 = vlaneseq
        %v1455 = vshrl.u32 %v1454, 7
        %v1456 = vsub.s32 0, %v1455
        %v1457 = vrot.slane %v917, %v1456
        %v1458 = vlaneseq
        %v1459 = vshrl.u32 %v1458, 7
        %v1460 = vsub.s32 0, %v1459
        %v1461 = vrot.slane %v918, %v1460
        %v1462 = vlaneseq
        %v1463 = vshrl.u32 %v1462, 7
        %v1464 = vsub.s32 0, %v1463
        %v1465 = vrot.slane %v919, %v1464
        %v1466 = vlaneseq
        %v1467 = vshrl.u32 %v1466, 7
        %v1468 = vsub.s32 0, %v1467
        %v1469 = vrot.slane %v920, %v1468
        %v1470 = vmul.f32 %v1452, %v1457
        %v1471 = vmul.f32 %v1451, %v1461
        %v1472 = vmul.f32 %v1450, %v1465
        %v1473 = vmul.f32 %v1453, %v1469
        %1474 = vrot.lane.b32.xlu0 %v905, 119
        %v1475 = vpop.permute.xlu0 %1474
        %1476 = vrot.lane.b32.xlu0 %v906, 119
        %v1477 = vpop.permute.xlu0 %1476
        %1478 = vrot.lane.b32.xlu0 %v907, 119
        %v1479 = vpop.permute.xlu0 %1478
        %1480 = vrot.lane.b32.xlu0 %v908, 119
        %v1481 = vpop.permute.xlu0 %1480
        %vm1482 = vcmp.lt.s32.totalorder %v495, 119
        %v1483 = vsel %vm1482, %v1479, %v1481
        %v1484 = vsel %vm1482, %v1477, %v1479
        %v1485 = vsel %vm1482, %v1475, %v1477
        %v1486 = vsel %vm1482, %v1481, %v1475
        %v1487 = vlaneseq
        %v1488 = vshrl.u32 %v1487, 7
        %v1489 = vsub.s32 1, %v1488
        %v1490 = vrot.slane %v917, %v1489
        %v1491 = vlaneseq
        %v1492 = vshrl.u32 %v1491, 7
        %v1493 = vsub.s32 1, %v1492
        %v1494 = vrot.slane %v918, %v1493
        %v1495 = vlaneseq
        %v1496 = vshrl.u32 %v1495, 7
        %v1497 = vsub.s32 1, %v1496
        %v1498 = vrot.slane %v919, %v1497
        %v1499 = vlaneseq
        %v1500 = vshrl.u32 %v1499, 7
        %v1501 = vsub.s32 1, %v1500
        %v1502 = vrot.slane %v920, %v1501
        %v1503 = vmul.f32 %v1485, %v1490
        %v1504 = vmul.f32 %v1484, %v1494
        %v1505 = vmul.f32 %v1483, %v1498
        %v1506 = vmul.f32 %v1486, %v1502
        %v1507 = vlaneseq
        %v1508 = vshrl.u32 %v1507, 7
        %v1509 = vsub.s32 2, %v1508
        %v1510 = vrot.slane %v917, %v1509
        %v1511 = vlaneseq
        %v1512 = vshrl.u32 %v1511, 7
        %v1513 = vsub.s32 2, %v1512
        %v1514 = vrot.slane %v918, %v1513
        %v1515 = vlaneseq
        %v1516 = vshrl.u32 %v1515, 7
        %v1517 = vsub.s32 2, %v1516
        %v1518 = vrot.slane %v919, %v1517
        %v1519 = vlaneseq
        %v1520 = vshrl.u32 %v1519, 7
        %v1521 = vsub.s32 2, %v1520
        %v1522 = vrot.slane %v920, %v1521
        %v1523 = vmul.f32 %v937, %v1510
        %v1524 = vmul.f32 %v936, %v1514
        %v1525 = vmul.f32 %v935, %v1518
        %v1526 = vmul.f32 %v938, %v1522
        %v1527 = vlaneseq
        %v1528 = vshrl.u32 %v1527, 7
        %v1529 = vsub.s32 3, %v1528
        %v1530 = vrot.slane %v917, %v1529
        %v1531 = vlaneseq
        %v1532 = vshrl.u32 %v1531, 7
        %v1533 = vsub.s32 3, %v1532
        %v1534 = vrot.slane %v918, %v1533
        %v1535 = vlaneseq
        %v1536 = vshrl.u32 %v1535, 7
        %v1537 = vsub.s32 3, %v1536
        %v1538 = vrot.slane %v919, %v1537
        %v1539 = vlaneseq
        %v1540 = vshrl.u32 %v1539, 7
        %v1541 = vsub.s32 3, %v1540
        %v1542 = vrot.slane %v920, %v1541
        %v1543 = vmul.f32 %v970, %v1530
        %v1544 = vmul.f32 %v969, %v1534
        %v1545 = vmul.f32 %v968, %v1538
        %v1546 = vmul.f32 %v971, %v1542
        %v1547 = vlaneseq
        %v1548 = vshrl.u32 %v1547, 7
        %v1549 = vsub.s32 4, %v1548
        %v1550 = vrot.slane %v917, %v1549
        %v1551 = vlaneseq
        %v1552 = vshrl.u32 %v1551, 7
        %v1553 = vsub.s32 4, %v1552
        %v1554 = vrot.slane %v918, %v1553
        %v1555 = vlaneseq
        %v1556 = vshrl.u32 %v1555, 7
        %v1557 = vsub.s32 4, %v1556
        %v1558 = vrot.slane %v919, %v1557
        %v1559 = vlaneseq
        %v1560 = vshrl.u32 %v1559, 7
        %v1561 = vsub.s32 4, %v1560
        %v1562 = vrot.slane %v920, %v1561
        %v1563 = vmul.f32 %v1003, %v1550
        %v1564 = vmul.f32 %v1002, %v1554
        %v1565 = vmul.f32 %v1001, %v1558
        %v1566 = vmul.f32 %v1004, %v1562
        %v1567 = vlaneseq
        %v1568 = vshrl.u32 %v1567, 7
        %v1569 = vsub.s32 5, %v1568
        %v1570 = vrot.slane %v917, %v1569
        %v1571 = vlaneseq
        %v1572 = vshrl.u32 %v1571, 7
        %v1573 = vsub.s32 5, %v1572
        %v1574 = vrot.slane %v918, %v1573
        %v1575 = vlaneseq
        %v1576 = vshrl.u32 %v1575, 7
        %v1577 = vsub.s32 5, %v1576
        %v1578 = vrot.slane %v919, %v1577
        %v1579 = vlaneseq
        %v1580 = vshrl.u32 %v1579, 7
        %v1581 = vsub.s32 5, %v1580
        %v1582 = vrot.slane %v920, %v1581
        %v1583 = vmul.f32 %v1036, %v1570
        %v1584 = vmul.f32 %v1035, %v1574
        %v1585 = vmul.f32 %v1034, %v1578
        %v1586 = vmul.f32 %v1037, %v1582
        %v1587 = vlaneseq
        %v1588 = vshrl.u32 %v1587, 7
        %v1589 = vsub.s32 6, %v1588
        %v1590 = vrot.slane %v917, %v1589
        %v1591 = vlaneseq
        %v1592 = vshrl.u32 %v1591, 7
        %v1593 = vsub.s32 6, %v1592
        %v1594 = vrot.slane %v918, %v1593
        %v1595 = vlaneseq
        %v1596 = vshrl.u32 %v1595, 7
        %v1597 = vsub.s32 6, %v1596
        %v1598 = vrot.slane %v919, %v1597
        %v1599 = vlaneseq
        %v1600 = vshrl.u32 %v1599, 7
        %v1601 = vsub.s32 6, %v1600
        %v1602 = vrot.slane %v920, %v1601
        %v1603 = vmul.f32 %v1069, %v1590
        %v1604 = vmul.f32 %v1068, %v1594
        %v1605 = vmul.f32 %v1067, %v1598
        %v1606 = vmul.f32 %v1070, %v1602
        %v1607 = vlaneseq
        %v1608 = vshrl.u32 %v1607, 7
        %v1609 = vsub.s32 7, %v1608
        %v1610 = vrot.slane %v917, %v1609
        %v1611 = vlaneseq
        %v1612 = vshrl.u32 %v1611, 7
        %v1613 = vsub.s32 7, %v1612
        %v1614 = vrot.slane %v918, %v1613
        %v1615 = vlaneseq
        %v1616 = vshrl.u32 %v1615, 7
        %v1617 = vsub.s32 7, %v1616
        %v1618 = vrot.slane %v919, %v1617
        %v1619 = vlaneseq
        %v1620 = vshrl.u32 %v1619, 7
        %v1621 = vsub.s32 7, %v1620
        %v1622 = vrot.slane %v920, %v1621
        %v1623 = vmul.f32 %v1102, %v1610
        %v1624 = vmul.f32 %v1101, %v1614
        %v1625 = vmul.f32 %v1100, %v1618
        %v1626 = vmul.f32 %v1103, %v1622
        %v1627 = vlaneseq
        %v1628 = vshrl.u32 %v1627, 7
        %v1629 = vsub.s32 0, %v1628
        %v1630 = vrot.slane %v921, %v1629
        %v1631 = vlaneseq
        %v1632 = vshrl.u32 %v1631, 7
        %v1633 = vsub.s32 0, %v1632
        %v1634 = vrot.slane %v922, %v1633
        %v1635 = vlaneseq
        %v1636 = vshrl.u32 %v1635, 7
        %v1637 = vsub.s32 0, %v1636
        %v1638 = vrot.slane %v923, %v1637
        %v1639 = vlaneseq
        %v1640 = vshrl.u32 %v1639, 7
        %v1641 = vsub.s32 0, %v1640
        %v1642 = vrot.slane %v924, %v1641
        %v1643 = vmul.f32 %v1135, %v1630
        %v1644 = vmul.f32 %v1134, %v1634
        %v1645 = vmul.f32 %v1133, %v1638
        %v1646 = vmul.f32 %v1136, %v1642
        %v1647 = vlaneseq
        %v1648 = vshrl.u32 %v1647, 7
        %v1649 = vsub.s32 1, %v1648
        %v1650 = vrot.slane %v921, %v1649
        %v1651 = vlaneseq
        %v1652 = vshrl.u32 %v1651, 7
        %v1653 = vsub.s32 1, %v1652
        %v1654 = vrot.slane %v922, %v1653
        %v1655 = vlaneseq
        %v1656 = vshrl.u32 %v1655, 7
        %v1657 = vsub.s32 1, %v1656
        %v1658 = vrot.slane %v923, %v1657
        %v1659 = vlaneseq
        %v1660 = vshrl.u32 %v1659, 7
        %v1661 = vsub.s32 1, %v1660
        %v1662 = vrot.slane %v924, %v1661
        %v1663 = vmul.f32 %v1168, %v1650
        %v1664 = vmul.f32 %v1167, %v1654
        %v1665 = vmul.f32 %v1166, %v1658
        %v1666 = vmul.f32 %v1169, %v1662
        %v1667 = vlaneseq
        %v1668 = vshrl.u32 %v1667, 7
        %v1669 = vsub.s32 2, %v1668
        %v1670 = vrot.slane %v921, %v1669
        %v1671 = vlaneseq
        %v1672 = vshrl.u32 %v1671, 7
        %v1673 = vsub.s32 2, %v1672
        %v1674 = vrot.slane %v922, %v1673
        %v1675 = vlaneseq
        %v1676 = vshrl.u32 %v1675, 7
        %v1677 = vsub.s32 2, %v1676
        %v1678 = vrot.slane %v923, %v1677
        %v1679 = vlaneseq
        %v1680 = vshrl.u32 %v1679, 7
        %v1681 = vsub.s32 2, %v1680
        %v1682 = vrot.slane %v924, %v1681
        %v1683 = vmul.f32 %v1201, %v1670
        %v1684 = vmul.f32 %v1200, %v1674
        %v1685 = vmul.f32 %v1199, %v1678
        %v1686 = vmul.f32 %v1202, %v1682
        %v1687 = vpack.c.bf16 %v988, %v955
        %v1688 = vpack.c.bf16 %v989, %v956
        %v1689 = vpack.c.bf16 %v990, %v957
        %v1690 = vpack.c.bf16 %v991, %v958
        %v1691 = vpack.c.bf16 %v1054, %v1021
        %v1692 = vpack.c.bf16 %v1055, %v1022
        %v1693 = vpack.c.bf16 %v1056, %v1023
        %v1694 = vpack.c.bf16 %v1057, %v1024
        %v1695 = vpack.c.bf16 %v1120, %v1087
        %v1696 = vpack.c.bf16 %v1121, %v1088
        %v1697 = vpack.c.bf16 %v1122, %v1089
        %v1698 = vpack.c.bf16 %v1123, %v1090
        %v1699 = vpack.c.bf16 %v1186, %v1153
        %v1700 = vpack.c.bf16 %v1187, %v1154
        %v1701 = vpack.c.bf16 %v1188, %v1155
        %v1702 = vpack.c.bf16 %v1189, %v1156
        %v1703 = vpack.c.bf16 %v1252, %v1219
        %v1704 = vpack.c.bf16 %v1253, %v1220
        %v1705 = vpack.c.bf16 %v1254, %v1221
        %v1706 = vpack.c.bf16 %v1255, %v1222
        %v1707 = vpack.c.bf16 %v1318, %v1285
        %v1708 = vpack.c.bf16 %v1319, %v1286
        %v1709 = vpack.c.bf16 %v1320, %v1287
        %v1710 = vpack.c.bf16 %v1321, %v1288
        %v1711 = vpack.c.bf16 %v1371, %v1351
        %v1712 = vpack.c.bf16 %v1372, %v1352
        %v1713 = vpack.c.bf16 %v1373, %v1353
        %v1714 = vpack.c.bf16 %v1374, %v1354
        %v1715 = vpack.c.bf16 %v1437, %v1404
        %v1716 = vpack.c.bf16 %v1438, %v1405
        %v1717 = vpack.c.bf16 %v1439, %v1406
        %v1718 = vpack.c.bf16 %v1440, %v1407
        %v1719 = vpack.c.bf16 %v1503, %v1470
        %v1720 = vpack.c.bf16 %v1504, %v1471
        %v1721 = vpack.c.bf16 %v1505, %v1472
        %v1722 = vpack.c.bf16 %v1506, %v1473
        %v1723 = vpack.c.bf16 %v1543, %v1523
        %v1724 = vpack.c.bf16 %v1544, %v1524
        %v1725 = vpack.c.bf16 %v1545, %v1525
        %v1726 = vpack.c.bf16 %v1546, %v1526
        %v1727 = vpack.c.bf16 %v1583, %v1563
        %v1728 = vpack.c.bf16 %v1584, %v1564
        %v1729 = vpack.c.bf16 %v1585, %v1565
        %v1730 = vpack.c.bf16 %v1586, %v1566
        %v1731 = vpack.c.bf16 %v1623, %v1603
        %v1732 = vpack.c.bf16 %v1624, %v1604
        %v1733 = vpack.c.bf16 %v1625, %v1605
        %v1734 = vpack.c.bf16 %v1626, %v1606
        %v1735 = vpack.c.bf16 %v1663, %v1643
        %v1736 = vpack.c.bf16 %v1664, %v1644
        %v1737 = vpack.c.bf16 %v1665, %v1645
        %v1738 = vpack.c.bf16 %v1666, %v1646
        %v1739 = vpack.c.bf16 %v1683, %v1683
        %v1740 = vpack.c.bf16 %v1684, %v1684
        %v1741 = vpack.c.bf16 %v1685, %v1685
        %v1742 = vpack.c.bf16 %v1686, %v1686
        %v1743 = vld [vmem:[%s5] sm:$0xff]
        %1745 = vset.pattern.permute.xlu0 0
        %1746 = vperm.xlu0 %1745, %v925
        %v1747 = vpop.permute.xlu0 %1746
        %v1750 = vunpack.c.l.b16 %v1743
        %v1751 = vunpack.c.h.b16 %v1743
        %v1752 = vpack.c.b16 %v1750, %v1750
        %v1753 = vpack.c.b16 %v1751, %v1751
        %vm1755 = vcmask 719872
        %v1757 = vsel %vm1755, %v1753, 0
        %vm1759 = vcmask 1043456
        %v1761 = vsel %vm1759, %v1739, 0
        %v1764 = vsel %vm1759, %v1740, 0
        %v1767 = vsel %vm1759, %v1741, 0
        %v1770 = vsel %vm1759, %v1742, 0
        %1772 = vmatprep.subr.bf16.mxu0 %v1716
        %1773 = vmatpush1.bf16.msra.mxu0 %v1715
        %1774 = vmatprep.subr.bf16.mxu0 %v1712
        %1775 = vmatpush1.bf16.msra.mxu0 %v1711
        %1776 = vmatprep.subr.bf16.mxu0 %v1708
        %1777 = vmatpush1.bf16.msra.mxu0 %v1707
        %1778 = vmatprep.subr.bf16.mxu0 %v1704
        %1779 = vmatpush1.bf16.msra.mxu0 %v1703
        %1780 = vmatprep.subr.bf16.mxu0 %v1700
        %1781 = vmatpush1.bf16.msra.mxu0 %v1699
        %1782 = vmatprep.subr.bf16.mxu0 %v1696
        %1783 = vmatpush1.bf16.msra.mxu0 %v1695
        %1784 = vmatprep.subr.bf16.mxu0 %v1692
        %1785 = vmatpush1.bf16.msra.mxu0 %v1691
        %1786 = vmatprep.subr.bf16.mxu0 %v1688
        %1787 = vmatpush1.bf16.msra.mxu0 %v1687
        %1788 = vmatprep.subr.bf16.mxu0 0
        %1789 = vmatpush2.bf16.msra.mxu0 0
        %1790 = vmatprep.subr.bf16.mxu0 0
        %1791 = vmatpush2.bf16.msra.mxu0 0
        %1792 = vmatprep.subr.bf16.mxu0 %v1764
        %1793 = vmatpush2.bf16.msra.mxu0 %v1761
        %1794 = vmatprep.subr.bf16.mxu0 %v1736
        %1795 = vmatpush2.bf16.msra.mxu0 %v1735
        %1796 = vmatprep.subr.bf16.mxu0 %v1732
        %1797 = vmatpush2.bf16.msra.mxu0 %v1731
        %1798 = vmatprep.subr.bf16.mxu0 %v1728
        %1799 = vmatpush2.bf16.msra.mxu0 %v1727
        %1800 = vmatprep.subr.bf16.mxu0 %v1724
        %1801 = vmatpush2.bf16.msra.mxu0 %v1723
        %1802 = vmatprep.subr.bf16.mxu0 %v1720
        %1803 = vmatpush2.bf16.msra.mxu0 %v1719
        %1804 = vmatprep.mubr.bf16.mxu0 %v1757
        %1805 = vmatmul.mubr.bf16.gmra.mxu0 %v1752
        %v1806 = vpop.f32.mrf.mxu0
        %v1807 = vadd.f32 %v1747, %v1806
        %v1808 = vpop.f32.mrf.mxu0
        %v1809 = vadd.f32 %v1747, %v1808
        %v1810 = vpop.f32.mrf.mxu0
        %v1811 = vpop.f32.mrf.mxu0
        %1812 = vdwg.mxu0
        %1813 = vmatprep.subr.bf16.mxu0 %v1718
        %1814 = vmatpush1.bf16.msra.mxu0 %v1717
        %1815 = vmatprep.subr.bf16.mxu0 %v1714
        %1816 = vmatpush1.bf16.msra.mxu0 %v1713
        %1817 = vmatprep.subr.bf16.mxu0 %v1710
        %1818 = vmatpush1.bf16.msra.mxu0 %v1709
        %1819 = vmatprep.subr.bf16.mxu0 %v1706
        %1820 = vmatpush1.bf16.msra.mxu0 %v1705
        %1821 = vmatprep.subr.bf16.mxu0 %v1702
        %1822 = vmatpush1.bf16.msra.mxu0 %v1701
        %1823 = vmatprep.subr.bf16.mxu0 %v1698
        %1824 = vmatpush1.bf16.msra.mxu0 %v1697
        %1825 = vmatprep.subr.bf16.mxu0 %v1694
        %1826 = vmatpush1.bf16.msra.mxu0 %v1693
        %1827 = vmatprep.subr.bf16.mxu0 %v1690
        %1828 = vmatpush1.bf16.msra.mxu0 %v1689
        %1829 = vmatprep.subr.bf16.mxu0 0
        %1830 = vmatpush2.bf16.msra.mxu0 0
        %1831 = vmatprep.subr.bf16.mxu0 0
        %1832 = vmatpush2.bf16.msra.mxu0 0
        %1833 = vmatprep.subr.bf16.mxu0 %v1770
        %1834 = vmatpush2.bf16.msra.mxu0 %v1767
        %1835 = vmatprep.subr.bf16.mxu0 %v1738
        %1836 = vmatpush2.bf16.msra.mxu0 %v1737
        %1837 = vmatprep.subr.bf16.mxu0 %v1734
        %1838 = vmatpush2.bf16.msra.mxu0 %v1733
        %1839 = vmatprep.subr.bf16.mxu0 %v1730
        %1840 = vmatpush2.bf16.msra.mxu0 %v1729
        %1841 = vmatprep.subr.bf16.mxu0 %v1726
        %1842 = vmatpush2.bf16.msra.mxu0 %v1725
        %1843 = vmatprep.subr.bf16.mxu0 %v1722
        %1844 = vmatpush2.bf16.msra.mxu0 %v1721
        %1845 = vmatprep.mubr.bf16.mxu0 %v1757
        %1846 = vmatmul.mubr.bf16.gmra.mxu0 %v1752
        %v1847 = vpop.f32.mrf.mxu0
        %v1848 = vadd.f32 %v1747, %v1847
        %v1849 = vpop.f32.mrf.mxu0
        %v1850 = vadd.f32 %v1747, %v1849
        %v1851 = vpop.f32.mrf.mxu0
        %v1852 = vpop.f32.mrf.mxu0
        %1853 = vdwg.mxu0
        %v1854 = vxor.u32 %v1807, 2147483648
        %v1855 = vxor.u32 %v1809, 2147483648
        %v1856 = vxor.u32 %v1848, 2147483648
        %v1857 = vxor.u32 %v1850, 2147483648
        %v1858 = vmul.f32 %v1854, 1.442695
        %v1859 = vpow.pop %v1858
        %v1860 = vmul.f32 %v1855, 1.442695
        %v1861 = vpow.pop %v1860
        %v1862 = vmul.f32 %v1856, 1.442695
        %v1863 = vpow.pop %v1862
        %v1864 = vmul.f32 %v1857, 1.442695
        %v1865 = vpow.pop %v1864
        %v1866 = vadd.f32 %v1859, 1.0
        %v1867 = vadd.f32 %v1861, 1.0
        %v1868 = vadd.f32 %v1863, 1.0
        %v1869 = vadd.f32 %v1865, 1.0
        %v1870 = vrcp.pop %v1866
        %v1871 = vmul.f32 1.0, %v1870
        %v1872 = vrcp.pop %v1867
        %v1873 = vmul.f32 1.0, %v1872
        %v1874 = vrcp.pop %v1868
        %v1875 = vmul.f32 1.0, %v1874
        %v1876 = vrcp.pop %v1869
        %v1877 = vmul.f32 1.0, %v1876
        %v1878 = vmul.f32 %v1807, %v1871
        %v1879 = vmul.f32 %v1809, %v1873
        %v1880 = vmul.f32 %v1848, %v1875
        %v1881 = vmul.f32 %v1850, %v1877
        %v1882 = vld [vmem:[%s8] sm:$0xff]
        %1883 = vrot.lane.b32.xlu0 %v1878, 73
        %v1884 = vpop.permute.xlu0 %1883
        %1885 = vrot.lane.b32.xlu0 %v1879, 73
        %v1886 = vpop.permute.xlu0 %1885
        %1887 = vrot.lane.b32.xlu0 %v1880, 73
        %v1888 = vpop.permute.xlu0 %1887
        %1889 = vrot.lane.b32.xlu0 %v1881, 73
        %v1890 = vpop.permute.xlu0 %1889
        %v1891 = vsel %vm934, %v1888, %v1890
        %v1892 = vsel %vm934, %v1886, %v1888
        %v1893 = vsel %vm934, %v1884, %v1886
        %v1894 = vsel %vm934, %v1890, %v1884
        %v1895 = vmul.f32 %v1894, %v942
        %v1896 = vmul.f32 %v1893, %v946
        %v1897 = vmul.f32 %v1892, %v950
        %v1898 = vmul.f32 %v1891, %v954
        %1899 = vrot.lane.b32.xlu0 %v1878, 72
        %v1900 = vpop.permute.xlu0 %1899
        %1901 = vrot.lane.b32.xlu0 %v1879, 72
        %v1902 = vpop.permute.xlu0 %1901
        %1903 = vrot.lane.b32.xlu0 %v1880, 72
        %v1904 = vpop.permute.xlu0 %1903
        %1905 = vrot.lane.b32.xlu0 %v1881, 72
        %v1906 = vpop.permute.xlu0 %1905
        %v1907 = vsel %vm967, %v1904, %v1906
        %v1908 = vsel %vm967, %v1902, %v1904
        %v1909 = vsel %vm967, %v1900, %v1902
        %v1910 = vsel %vm967, %v1906, %v1900
        %v1911 = vmul.f32 %v1910, %v975
        %v1912 = vmul.f32 %v1909, %v979
        %v1913 = vmul.f32 %v1908, %v983
        %v1914 = vmul.f32 %v1907, %v987
        %1915 = vrot.lane.b32.xlu0 %v1878, 71
        %v1916 = vpop.permute.xlu0 %1915
        %1917 = vrot.lane.b32.xlu0 %v1879, 71
        %v1918 = vpop.permute.xlu0 %1917
        %1919 = vrot.lane.b32.xlu0 %v1880, 71
        %v1920 = vpop.permute.xlu0 %1919
        %1921 = vrot.lane.b32.xlu0 %v1881, 71
        %v1922 = vpop.permute.xlu0 %1921
        %v1923 = vsel %vm1000, %v1920, %v1922
        %v1924 = vsel %vm1000, %v1918, %v1920
        %v1925 = vsel %vm1000, %v1916, %v1918
        %v1926 = vsel %vm1000, %v1922, %v1916
        %v1927 = vmul.f32 %v1926, %v1008
        %v1928 = vmul.f32 %v1925, %v1012
        %v1929 = vmul.f32 %v1924, %v1016
        %v1930 = vmul.f32 %v1923, %v1020
        %1931 = vrot.lane.b32.xlu0 %v1878, 65
        %v1932 = vpop.permute.xlu0 %1931
        %1933 = vrot.lane.b32.xlu0 %v1879, 65
        %v1934 = vpop.permute.xlu0 %1933
        %1935 = vrot.lane.b32.xlu0 %v1880, 65
        %v1936 = vpop.permute.xlu0 %1935
        %1937 = vrot.lane.b32.xlu0 %v1881, 65
        %v1938 = vpop.permute.xlu0 %1937
        %v1939 = vsel %vm1033, %v1936, %v1938
        %v1940 = vsel %vm1033, %v1934, %v1936
        %v1941 = vsel %vm1033, %v1932, %v1934
        %v1942 = vsel %vm1033, %v1938, %v1932
        %v1943 = vmul.f32 %v1942, %v1041
        %v1944 = vmul.f32 %v1941, %v1045
        %v1945 = vmul.f32 %v1940, %v1049
        %v1946 = vmul.f32 %v1939, %v1053
        %1947 = vrot.lane.b32.xlu0 %v1878, 64
        %v1948 = vpop.permute.xlu0 %1947
        %1949 = vrot.lane.b32.xlu0 %v1879, 64
        %v1950 = vpop.permute.xlu0 %1949
        %1951 = vrot.lane.b32.xlu0 %v1880, 64
        %v1952 = vpop.permute.xlu0 %1951
        %1953 = vrot.lane.b32.xlu0 %v1881, 64
        %v1954 = vpop.permute.xlu0 %1953
        %v1955 = vsel %vm1066, %v1952, %v1954
        %v1956 = vsel %vm1066, %v1950, %v1952
        %v1957 = vsel %vm1066, %v1948, %v1950
        %v1958 = vsel %vm1066, %v1954, %v1948
        %v1959 = vmul.f32 %v1958, %v1074
        %v1960 = vmul.f32 %v1957, %v1078
        %v1961 = vmul.f32 %v1956, %v1082
        %v1962 = vmul.f32 %v1955, %v1086
        %1963 = vrot.lane.b32.xlu0 %v1878, 63
        %v1964 = vpop.permute.xlu0 %1963
        %1965 = vrot.lane.b32.xlu0 %v1879, 63
        %v1966 = vpop.permute.xlu0 %1965
        %1967 = vrot.lane.b32.xlu0 %v1880, 63
        %v1968 = vpop.permute.xlu0 %1967
        %1969 = vrot.lane.b32.xlu0 %v1881, 63
        %v1970 = vpop.permute.xlu0 %1969
        %v1971 = vsel %vm1099, %v1968, %v1970
        %v1972 = vsel %vm1099, %v1966, %v1968
        %v1973 = vsel %vm1099, %v1964, %v1966
        %v1974 = vsel %vm1099, %v1970, %v1964
        %v1975 = vmul.f32 %v1974, %v1107
        %v1976 = vmul.f32 %v1973, %v1111
        %v1977 = vmul.f32 %v1972, %v1115
        %v1978 = vmul.f32 %v1971, %v1119
        %1979 = vrot.lane.b32.xlu0 %v1878, 57
        %v1980 = vpop.permute.xlu0 %1979
        %1981 = vrot.lane.b32.xlu0 %v1879, 57
        %v1982 = vpop.permute.xlu0 %1981
        %1983 = vrot.lane.b32.xlu0 %v1880, 57
        %v1984 = vpop.permute.xlu0 %1983
        %1985 = vrot.lane.b32.xlu0 %v1881, 57
        %v1986 = vpop.permute.xlu0 %1985
        %v1987 = vsel %vm1132, %v1984, %v1986
        %v1988 = vsel %vm1132, %v1982, %v1984
        %v1989 = vsel %vm1132, %v1980, %v1982
        %v1990 = vsel %vm1132, %v1986, %v1980
        %v1991 = vmul.f32 %v1990, %v1140
        %v1992 = vmul.f32 %v1989, %v1144
        %v1993 = vmul.f32 %v1988, %v1148
        %v1994 = vmul.f32 %v1987, %v1152
        %1995 = vrot.lane.b32.xlu0 %v1878, 56
        %v1996 = vpop.permute.xlu0 %1995
        %1997 = vrot.lane.b32.xlu0 %v1879, 56
        %v1998 = vpop.permute.xlu0 %1997
        %1999 = vrot.lane.b32.xlu0 %v1880, 56
        %v2000 = vpop.permute.xlu0 %1999
        %2001 = vrot.lane.b32.xlu0 %v1881, 56
        %v2002 = vpop.permute.xlu0 %2001
        %v2003 = vsel %vm1165, %v2000, %v2002
        %v2004 = vsel %vm1165, %v1998, %v2000
        %v2005 = vsel %vm1165, %v1996, %v1998
        %v2006 = vsel %vm1165, %v2002, %v1996
        %v2007 = vmul.f32 %v2006, %v1173
        %v2008 = vmul.f32 %v2005, %v1177
        %v2009 = vmul.f32 %v2004, %v1181
        %v2010 = vmul.f32 %v2003, %v1185
        %2011 = vrot.lane.b32.xlu0 %v1878, 55
        %v2012 = vpop.permute.xlu0 %2011
        %2013 = vrot.lane.b32.xlu0 %v1879, 55
        %v2014 = vpop.permute.xlu0 %2013
        %2015 = vrot.lane.b32.xlu0 %v1880, 55
        %v2016 = vpop.permute.xlu0 %2015
        %2017 = vrot.lane.b32.xlu0 %v1881, 55
        %v2018 = vpop.permute.xlu0 %2017
        %v2019 = vsel %vm1198, %v2016, %v2018
        %v2020 = vsel %vm1198, %v2014, %v2016
        %v2021 = vsel %vm1198, %v2012, %v2014
        %v2022 = vsel %vm1198, %v2018, %v2012
        %v2023 = vmul.f32 %v2022, %v1206
        %v2024 = vmul.f32 %v2021, %v1210
        %v2025 = vmul.f32 %v2020, %v1214
        %v2026 = vmul.f32 %v2019, %v1218
        %2027 = vrot.lane.b32.xlu0 %v1878, 9
        %v2028 = vpop.permute.xlu0 %2027
        %2029 = vrot.lane.b32.xlu0 %v1879, 9
        %v2030 = vpop.permute.xlu0 %2029
        %2031 = vrot.lane.b32.xlu0 %v1880, 9
        %v2032 = vpop.permute.xlu0 %2031
        %2033 = vrot.lane.b32.xlu0 %v1881, 9
        %v2034 = vpop.permute.xlu0 %2033
        %v2035 = vsel %vm1231, %v2032, %v2034
        %v2036 = vsel %vm1231, %v2030, %v2032
        %v2037 = vsel %vm1231, %v2028, %v2030
        %v2038 = vsel %vm1231, %v2034, %v2028
        %v2039 = vmul.f32 %v2038, %v1239
        %v2040 = vmul.f32 %v2037, %v1243
        %v2041 = vmul.f32 %v2036, %v1247
        %v2042 = vmul.f32 %v2035, %v1251
        %2043 = vrot.lane.b32.xlu0 %v1878, 8
        %v2044 = vpop.permute.xlu0 %2043
        %2045 = vrot.lane.b32.xlu0 %v1879, 8
        %v2046 = vpop.permute.xlu0 %2045
        %2047 = vrot.lane.b32.xlu0 %v1880, 8
        %v2048 = vpop.permute.xlu0 %2047
        %2049 = vrot.lane.b32.xlu0 %v1881, 8
        %v2050 = vpop.permute.xlu0 %2049
        %v2051 = vsel %vm1264, %v2048, %v2050
        %v2052 = vsel %vm1264, %v2046, %v2048
        %v2053 = vsel %vm1264, %v2044, %v2046
        %v2054 = vsel %vm1264, %v2050, %v2044
        %v2055 = vmul.f32 %v2054, %v1272
        %v2056 = vmul.f32 %v2053, %v1276
        %v2057 = vmul.f32 %v2052, %v1280
        %v2058 = vmul.f32 %v2051, %v1284
        %2059 = vrot.lane.b32.xlu0 %v1878, 7
        %v2060 = vpop.permute.xlu0 %2059
        %2061 = vrot.lane.b32.xlu0 %v1879, 7
        %v2062 = vpop.permute.xlu0 %2061
        %2063 = vrot.lane.b32.xlu0 %v1880, 7
        %v2064 = vpop.permute.xlu0 %2063
        %2065 = vrot.lane.b32.xlu0 %v1881, 7
        %v2066 = vpop.permute.xlu0 %2065
        %v2067 = vsel %vm1297, %v2064, %v2066
        %v2068 = vsel %vm1297, %v2062, %v2064
        %v2069 = vsel %vm1297, %v2060, %v2062
        %v2070 = vsel %vm1297, %v2066, %v2060
        %v2071 = vmul.f32 %v2070, %v1305
        %v2072 = vmul.f32 %v2069, %v1309
        %v2073 = vmul.f32 %v2068, %v1313
        %v2074 = vmul.f32 %v2067, %v1317
        %2075 = vrot.lane.b32.xlu0 %v1878, 1
        %v2076 = vpop.permute.xlu0 %2075
        %2077 = vrot.lane.b32.xlu0 %v1879, 1
        %v2078 = vpop.permute.xlu0 %2077
        %2079 = vrot.lane.b32.xlu0 %v1880, 1
        %v2080 = vpop.permute.xlu0 %2079
        %2081 = vrot.lane.b32.xlu0 %v1881, 1
        %v2082 = vpop.permute.xlu0 %2081
        %v2083 = vsel %vm1330, %v2080, %v2082
        %v2084 = vsel %vm1330, %v2078, %v2080
        %v2085 = vsel %vm1330, %v2076, %v2078
        %v2086 = vsel %vm1330, %v2082, %v2076
        %v2087 = vmul.f32 %v2086, %v1338
        %v2088 = vmul.f32 %v2085, %v1342
        %v2089 = vmul.f32 %v2084, %v1346
        %v2090 = vmul.f32 %v2083, %v1350
        %v2091 = vmul.f32 %v1878, %v1358
        %v2092 = vmul.f32 %v1879, %v1362
        %v2093 = vmul.f32 %v1880, %v1366
        %v2094 = vmul.f32 %v1881, %v1370
        %2095 = vrot.lane.b32.xlu0 %v1878, 127
        %v2096 = vpop.permute.xlu0 %2095
        %2097 = vrot.lane.b32.xlu0 %v1879, 127
        %v2098 = vpop.permute.xlu0 %2097
        %2099 = vrot.lane.b32.xlu0 %v1880, 127
        %v2100 = vpop.permute.xlu0 %2099
        %2101 = vrot.lane.b32.xlu0 %v1881, 127
        %v2102 = vpop.permute.xlu0 %2101
        %v2103 = vsel %vm1383, %v2100, %v2102
        %v2104 = vsel %vm1383, %v2098, %v2100
        %v2105 = vsel %vm1383, %v2096, %v2098
        %v2106 = vsel %vm1383, %v2102, %v2096
        %v2107 = vmul.f32 %v2105, %v1391
        %v2108 = vmul.f32 %v2104, %v1395
        %v2109 = vmul.f32 %v2103, %v1399
        %v2110 = vmul.f32 %v2106, %v1403
        %2111 = vrot.lane.b32.xlu0 %v1878, 121
        %v2112 = vpop.permute.xlu0 %2111
        %2113 = vrot.lane.b32.xlu0 %v1879, 121
        %v2114 = vpop.permute.xlu0 %2113
        %2115 = vrot.lane.b32.xlu0 %v1880, 121
        %v2116 = vpop.permute.xlu0 %2115
        %2117 = vrot.lane.b32.xlu0 %v1881, 121
        %v2118 = vpop.permute.xlu0 %2117
        %v2119 = vsel %vm1416, %v2116, %v2118
        %v2120 = vsel %vm1416, %v2114, %v2116
        %v2121 = vsel %vm1416, %v2112, %v2114
        %v2122 = vsel %vm1416, %v2118, %v2112
        %v2123 = vmul.f32 %v2121, %v1424
        %v2124 = vmul.f32 %v2120, %v1428
        %v2125 = vmul.f32 %v2119, %v1432
        %v2126 = vmul.f32 %v2122, %v1436
        %2127 = vrot.lane.b32.xlu0 %v1878, 120
        %v2128 = vpop.permute.xlu0 %2127
        %2129 = vrot.lane.b32.xlu0 %v1879, 120
        %v2130 = vpop.permute.xlu0 %2129
        %2131 = vrot.lane.b32.xlu0 %v1880, 120
        %v2132 = vpop.permute.xlu0 %2131
        %2133 = vrot.lane.b32.xlu0 %v1881, 120
        %v2134 = vpop.permute.xlu0 %2133
        %v2135 = vsel %vm1449, %v2132, %v2134
        %v2136 = vsel %vm1449, %v2130, %v2132
        %v2137 = vsel %vm1449, %v2128, %v2130
        %v2138 = vsel %vm1449, %v2134, %v2128
        %v2139 = vmul.f32 %v2137, %v1457
        %v2140 = vmul.f32 %v2136, %v1461
        %v2141 = vmul.f32 %v2135, %v1465
        %v2142 = vmul.f32 %v2138, %v1469
        %2143 = vrot.lane.b32.xlu0 %v1878, 119
        %v2144 = vpop.permute.xlu0 %2143
        %2145 = vrot.lane.b32.xlu0 %v1879, 119
        %v2146 = vpop.permute.xlu0 %2145
        %2147 = vrot.lane.b32.xlu0 %v1880, 119
        %v2148 = vpop.permute.xlu0 %2147
        %2149 = vrot.lane.b32.xlu0 %v1881, 119
        %v2150 = vpop.permute.xlu0 %2149
        %v2151 = vsel %vm1482, %v2148, %v2150
        %v2152 = vsel %vm1482, %v2146, %v2148
        %v2153 = vsel %vm1482, %v2144, %v2146
        %v2154 = vsel %vm1482, %v2150, %v2144
        %v2155 = vmul.f32 %v2153, %v1490
        %v2156 = vmul.f32 %v2152, %v1494
        %v2157 = vmul.f32 %v2151, %v1498
        %v2158 = vmul.f32 %v2154, %v1502
        %v2159 = vmul.f32 %v1893, %v1510
        %v2160 = vmul.f32 %v1892, %v1514
        %v2161 = vmul.f32 %v1891, %v1518
        %v2162 = vmul.f32 %v1894, %v1522
        %v2163 = vmul.f32 %v1909, %v1530
        %v2164 = vmul.f32 %v1908, %v1534
        %v2165 = vmul.f32 %v1907, %v1538
        %v2166 = vmul.f32 %v1910, %v1542
        %v2167 = vmul.f32 %v1925, %v1550
        %v2168 = vmul.f32 %v1924, %v1554
        %v2169 = vmul.f32 %v1923, %v1558
        %v2170 = vmul.f32 %v1926, %v1562
        %v2171 = vmul.f32 %v1941, %v1570
        %v2172 = vmul.f32 %v1940, %v1574
        %v2173 = vmul.f32 %v1939, %v1578
        %v2174 = vmul.f32 %v1942, %v1582
        %v2175 = vmul.f32 %v1957, %v1590
        %v2176 = vmul.f32 %v1956, %v1594
        %v2177 = vmul.f32 %v1955, %v1598
        %v2178 = vmul.f32 %v1958, %v1602
        %v2179 = vmul.f32 %v1973, %v1610
        %v2180 = vmul.f32 %v1972, %v1614
        %v2181 = vmul.f32 %v1971, %v1618
        %v2182 = vmul.f32 %v1974, %v1622
        %v2183 = vmul.f32 %v1989, %v1630
        %v2184 = vmul.f32 %v1988, %v1634
        %v2185 = vmul.f32 %v1987, %v1638
        %v2186 = vmul.f32 %v1990, %v1642
        %v2187 = vmul.f32 %v2005, %v1650
        %v2188 = vmul.f32 %v2004, %v1654
        %v2189 = vmul.f32 %v2003, %v1658
        %v2190 = vmul.f32 %v2006, %v1662
        %v2191 = vmul.f32 %v2021, %v1670
        %v2192 = vmul.f32 %v2020, %v1674
        %v2193 = vmul.f32 %v2019, %v1678
        %v2194 = vmul.f32 %v2022, %v1682
        %v2195 = vpack.c.bf16 %v1911, %v1895
        %v2196 = vpack.c.bf16 %v1912, %v1896
        %v2197 = vpack.c.bf16 %v1913, %v1897
        %v2198 = vpack.c.bf16 %v1914, %v1898
        %v2199 = vpack.c.bf16 %v1943, %v1927
        %v2200 = vpack.c.bf16 %v1944, %v1928
        %v2201 = vpack.c.bf16 %v1945, %v1929
        %v2202 = vpack.c.bf16 %v1946, %v1930
        %v2203 = vpack.c.bf16 %v1975, %v1959
        %v2204 = vpack.c.bf16 %v1976, %v1960
        %v2205 = vpack.c.bf16 %v1977, %v1961
        %v2206 = vpack.c.bf16 %v1978, %v1962
        %v2207 = vpack.c.bf16 %v2007, %v1991
        %v2208 = vpack.c.bf16 %v2008, %v1992
        %v2209 = vpack.c.bf16 %v2009, %v1993
        %v2210 = vpack.c.bf16 %v2010, %v1994
        %v2211 = vpack.c.bf16 %v2039, %v2023
        %v2212 = vpack.c.bf16 %v2040, %v2024
        %v2213 = vpack.c.bf16 %v2041, %v2025
        %v2214 = vpack.c.bf16 %v2042, %v2026
        %v2215 = vpack.c.bf16 %v2071, %v2055
        %v2216 = vpack.c.bf16 %v2072, %v2056
        %v2217 = vpack.c.bf16 %v2073, %v2057
        %v2218 = vpack.c.bf16 %v2074, %v2058
        %v2219 = vpack.c.bf16 %v2091, %v2087
        %v2220 = vpack.c.bf16 %v2092, %v2088
        %v2221 = vpack.c.bf16 %v2093, %v2089
        %v2222 = vpack.c.bf16 %v2094, %v2090
        %v2223 = vpack.c.bf16 %v2123, %v2107
        %v2224 = vpack.c.bf16 %v2124, %v2108
        %v2225 = vpack.c.bf16 %v2125, %v2109
        %v2226 = vpack.c.bf16 %v2126, %v2110
        %v2227 = vpack.c.bf16 %v2155, %v2139
        %v2228 = vpack.c.bf16 %v2156, %v2140
        %v2229 = vpack.c.bf16 %v2157, %v2141
        %v2230 = vpack.c.bf16 %v2158, %v2142
        %v2231 = vpack.c.bf16 %v2163, %v2159
        %v2232 = vpack.c.bf16 %v2164, %v2160
        %v2233 = vpack.c.bf16 %v2165, %v2161
        %v2234 = vpack.c.bf16 %v2166, %v2162
        %v2235 = vpack.c.bf16 %v2171, %v2167
        %v2236 = vpack.c.bf16 %v2172, %v2168
        %v2237 = vpack.c.bf16 %v2173, %v2169
        %v2238 = vpack.c.bf16 %v2174, %v2170
        %v2239 = vpack.c.bf16 %v2179, %v2175
        %v2240 = vpack.c.bf16 %v2180, %v2176
        %v2241 = vpack.c.bf16 %v2181, %v2177
        %v2242 = vpack.c.bf16 %v2182, %v2178
        %v2243 = vpack.c.bf16 %v2187, %v2183
        %v2244 = vpack.c.bf16 %v2188, %v2184
        %v2245 = vpack.c.bf16 %v2189, %v2185
        %v2246 = vpack.c.bf16 %v2190, %v2186
        %v2247 = vpack.c.bf16 %v2191, %v2191
        %v2248 = vpack.c.bf16 %v2192, %v2192
        %v2249 = vpack.c.bf16 %v2193, %v2193
        %v2250 = vpack.c.bf16 %v2194, %v2194
        %v2251 = vld [vmem:[%s7] sm:$0xff]
        %2253 = vset.pattern.permute.xlu0 0
        %2254 = vperm.xlu0 %2253, %v1882
        %v2255 = vpop.permute.xlu0 %2254
        %v2258 = vunpack.c.l.b16 %v2251
        %v2259 = vunpack.c.h.b16 %v2251
        %v2260 = vpack.c.b16 %v2258, %v2258
        %v2261 = vpack.c.b16 %v2259, %v2259
        %v2264 = vsel %vm1755, %v2261, 0
        %v2267 = vsel %vm1759, %v2247, 0
        %v2270 = vsel %vm1759, %v2248, 0
        %v2273 = vsel %vm1759, %v2249, 0
        %v2276 = vsel %vm1759, %v2250, 0
        %2278 = vmatprep.subr.bf16.mxu0 %v2224
        %2279 = vmatpush1.bf16.msra.mxu0 %v2223
        %2280 = vmatprep.subr.bf16.mxu0 %v2220
        %2281 = vmatpush1.bf16.msra.mxu0 %v2219
        %2282 = vmatprep.subr.bf16.mxu0 %v2216
        %2283 = vmatpush1.bf16.msra.mxu0 %v2215
        %2284 = vmatprep.subr.bf16.mxu0 %v2212
        %2285 = vmatpush1.bf16.msra.mxu0 %v2211
        %2286 = vmatprep.subr.bf16.mxu0 %v2208
        %2287 = vmatpush1.bf16.msra.mxu0 %v2207
        %2288 = vmatprep.subr.bf16.mxu0 %v2204
        %2289 = vmatpush1.bf16.msra.mxu0 %v2203
        %2290 = vmatprep.subr.bf16.mxu0 %v2200
        %2291 = vmatpush1.bf16.msra.mxu0 %v2199
        %2292 = vmatprep.subr.bf16.mxu0 %v2196
        %2293 = vmatpush1.bf16.msra.mxu0 %v2195
        %2294 = vmatprep.subr.bf16.mxu0 0
        %2295 = vmatpush2.bf16.msra.mxu0 0
        %2296 = vmatprep.subr.bf16.mxu0 0
        %2297 = vmatpush2.bf16.msra.mxu0 0
        %2298 = vmatprep.subr.bf16.mxu0 %v2270
        %2299 = vmatpush2.bf16.msra.mxu0 %v2267
        %2300 = vmatprep.subr.bf16.mxu0 %v2244
        %2301 = vmatpush2.bf16.msra.mxu0 %v2243
        %2302 = vmatprep.subr.bf16.mxu0 %v2240
        %2303 = vmatpush2.bf16.msra.mxu0 %v2239
        %2304 = vmatprep.subr.bf16.mxu0 %v2236
        %2305 = vmatpush2.bf16.msra.mxu0 %v2235
        %2306 = vmatprep.subr.bf16.mxu0 %v2232
        %2307 = vmatpush2.bf16.msra.mxu0 %v2231
        %2308 = vmatprep.subr.bf16.mxu0 %v2228
        %2309 = vmatpush2.bf16.msra.mxu0 %v2227
        %2310 = vmatprep.mubr.bf16.mxu0 %v2264
        %2311 = vmatmul.mubr.bf16.gmra.mxu0 %v2260
        %v2312 = vpop.f32.mrf.mxu0
        %v2313 = vadd.f32 %v2255, %v2312
        %v2314 = vpop.f32.mrf.mxu0
        %v2315 = vadd.f32 %v2255, %v2314
        %v2316 = vpop.f32.mrf.mxu0
        %v2317 = vpop.f32.mrf.mxu0
        %2318 = vdwg.mxu0
        %2319 = vmatprep.subr.bf16.mxu0 %v2226
        %2320 = vmatpush1.bf16.msra.mxu0 %v2225
        %2321 = vmatprep.subr.bf16.mxu0 %v2222
        %2322 = vmatpush1.bf16.msra.mxu0 %v2221
        %2323 = vmatprep.subr.bf16.mxu0 %v2218
        %2324 = vmatpush1.bf16.msra.mxu0 %v2217
        %2325 = vmatprep.subr.bf16.mxu0 %v2214
        %2326 = vmatpush1.bf16.msra.mxu0 %v2213
        %2327 = vmatprep.subr.bf16.mxu0 %v2210
        %2328 = vmatpush1.bf16.msra.mxu0 %v2209
        %2329 = vmatprep.subr.bf16.mxu0 %v2206
        %2330 = vmatpush1.bf16.msra.mxu0 %v2205
        %2331 = vmatprep.subr.bf16.mxu0 %v2202
        %2332 = vmatpush1.bf16.msra.mxu0 %v2201
        %2333 = vmatprep.subr.bf16.mxu0 %v2198
        %2334 = vmatpush1.bf16.msra.mxu0 %v2197
        %2335 = vmatprep.subr.bf16.mxu0 0
        %2336 = vmatpush2.bf16.msra.mxu0 0
        %2337 = vmatprep.subr.bf16.mxu0 0
        %2338 = vmatpush2.bf16.msra.mxu0 0
        %2339 = vmatprep.subr.bf16.mxu0 %v2276
        %2340 = vmatpush2.bf16.msra.mxu0 %v2273
        %2341 = vmatprep.subr.bf16.mxu0 %v2246
        %2342 = vmatpush2.bf16.msra.mxu0 %v2245
        %2343 = vmatprep.subr.bf16.mxu0 %v2242
        %2344 = vmatpush2.bf16.msra.mxu0 %v2241
        %2345 = vmatprep.subr.bf16.mxu0 %v2238
        %2346 = vmatpush2.bf16.msra.mxu0 %v2237
        %2347 = vmatprep.subr.bf16.mxu0 %v2234
        %2348 = vmatpush2.bf16.msra.mxu0 %v2233
        %2349 = vmatprep.subr.bf16.mxu0 %v2230
        %2350 = vmatpush2.bf16.msra.mxu0 %v2229
        %2351 = vmatprep.mubr.bf16.mxu0 %v2264
        %2352 = vmatmul.mubr.bf16.gmra.mxu0 %v2260
        %v2353 = vpop.f32.mrf.mxu0
        %v2354 = vadd.f32 %v2255, %v2353
        %v2355 = vpop.f32.mrf.mxu0
        %v2356 = vadd.f32 %v2255, %v2355
        %v2357 = vpop.f32.mrf.mxu0
        %v2358 = vpop.f32.mrf.mxu0
        %2359 = vdwg.mxu0
        %v2360 = vxor.u32 %v2313, 2147483648
        %v2361 = vxor.u32 %v2315, 2147483648
        %v2362 = vxor.u32 %v2354, 2147483648
        %v2363 = vxor.u32 %v2356, 2147483648
        %v2364 = vmul.f32 %v2360, 1.442695
        %v2365 = vpow.pop %v2364
        %v2366 = vmul.f32 %v2361, 1.442695
        %v2367 = vpow.pop %v2366
        %v2368 = vmul.f32 %v2362, 1.442695
        %v2369 = vpow.pop %v2368
        %v2370 = vmul.f32 %v2363, 1.442695
        %v2371 = vpow.pop %v2370
        %v2372 = vadd.f32 %v2365, 1.0
        %v2373 = vadd.f32 %v2367, 1.0
        %v2374 = vadd.f32 %v2369, 1.0
        %v2375 = vadd.f32 %v2371, 1.0
        %v2376 = vrcp.pop %v2372
        %v2377 = vmul.f32 1.0, %v2376
        %v2378 = vrcp.pop %v2373
        %v2379 = vmul.f32 1.0, %v2378
        %v2380 = vrcp.pop %v2374
        %v2381 = vmul.f32 1.0, %v2380
        %v2382 = vrcp.pop %v2375
        %v2383 = vmul.f32 1.0, %v2382
        %v2384 = vmul.f32 %v2313, %v2377
        %v2385 = vmul.f32 %v2315, %v2379
        %v2386 = vmul.f32 %v2354, %v2381
        %v2387 = vmul.f32 %v2356, %v2383
        %v2388 = vld [vmem:[%s9] sm:$0xf]
        %v2389 = vld [vmem:[%s10] sm:$0xff]
        %2391 = vset.pattern.permute.xlu0 0
        %2392 = vperm.xlu0 %2391, %v2389
        %v2393 = vpop.permute.xlu0 %2392
        %vm2395 = vcmask 64512
        %v2397 = vsel %vm2395, %v2388, 0
        %v2400 = vsel %vm1759, %v493, 0
        %2402 = vmatprep.subr.bf16.mxu0 0
        %2403 = vmatpush1.bf16.msra.mxu0 0
        %2404 = vmatprep.subr.bf16.mxu0 0
        %2405 = vmatpush1.bf16.msra.mxu0 0
        %2406 = vmatprep.subr.bf16.mxu0 0
        %2407 = vmatpush1.bf16.msra.mxu0 0
        %2408 = vmatprep.subr.bf16.mxu0 0
        %2409 = vmatpush1.bf16.msra.mxu0 0
        %2410 = vmatprep.subr.bf16.mxu0 0
        %2411 = vmatpush1.bf16.msra.mxu0 0
        %2412 = vmatprep.subr.bf16.mxu0 0
        %2413 = vmatpush1.bf16.msra.mxu0 0
        %2414 = vmatprep.subr.bf16.mxu0 0
        %2415 = vmatpush1.bf16.msra.mxu0 0
        %2416 = vmatprep.subr.bf16.mxu0 0
        %2417 = vmatpush1.bf16.msra.mxu0 %v2400
        %2418 = vmatprep.subr.bf16.mxu0 0
        %2419 = vmatpush2.bf16.msra.mxu0 0
        %2420 = vmatprep.subr.bf16.mxu0 0
        %2421 = vmatpush2.bf16.msra.mxu0 0
        %2422 = vmatprep.subr.bf16.mxu0 0
        %2423 = vmatpush2.bf16.msra.mxu0 0
        %2424 = vmatprep.subr.bf16.mxu0 0
        %2425 = vmatpush2.bf16.msra.mxu0 0
        %2426 = vmatprep.subr.bf16.mxu0 0
        %2427 = vmatpush2.bf16.msra.mxu0 0
        %2428 = vmatprep.subr.bf16.mxu0 0
        %2429 = vmatpush2.bf16.msra.mxu0 0
        %2430 = vmatprep.subr.bf16.mxu0 0
        %2431 = vmatpush2.bf16.msra.mxu0 0
        %2432 = vmatprep.subr.bf16.mxu0 0
        %2433 = vmatpush2.bf16.msra.mxu0 0
        %2434 = vmatprep.mubr.bf16.mxu0 0
        %2435 = vmatmul.mubr.bf16.gmra.mxu0 %v2397
        %v2436 = vpop.f32.mrf.mxu0
        %v2437 = vadd.f32 %v2393, %v2436
        %v2438 = vpop.f32.mrf.mxu0
        %v2439 = vpop.f32.mrf.mxu0
        %v2440 = vpop.f32.mrf.mxu0
        %2441 = vdwg.mxu0
        %2442 = vadd.xlane.f32.xlu0 %v2437
        %v2443 = vpop.xlane.xlu0 %2442
        %v2444 = vmul.f32 %v2437, %v2437
        %2445 = vadd.xlane.f32.xlu0 %v2444
        %v2446 = vpop.xlane.xlu0 %2445
        %v2447 = vlaneseq
        %v2448 = vshrl.u32 %v2447, 7
        %v2449 = vadd.f32 %v2443, 0.0
        %s2450 = vtos %v2449
        %v2451 = vstv %s2450
        %v2452 = vadd.f32 %v2446, 0.0
        %s2453 = vtos %v2452
        %v2454 = vstv %s2453
        %v2455 = vrcp.pop 128.0
        %v2456 = vmul.f32 %v2451, %v2455
        %v2457 = vmul.f32 %v2454, %v2455
        %v2458 = vmul.f32 %v2456, %v2456
        %v2459 = vsub.f32 %v2457, %v2458
        %v2460 = vmax.f32 %v2459, 0.0
        %vm2461 = vcmp.ge.s32.totalorder %v2448, 0
        %vm2462 = vcmp.lt.s32.totalorder %v2448, 1
        %vm2463 = vmand %vm2461, %vm2462
        %v2464 = vsel %vm2463, %v2456, 0.0
        %v2465 = vsel %vm2463, %v2460, 0.0
        %v2467 = vrot.slane %v2449, 1
        %s2469 = vtos %v2467
        %v2470 = vstv %s2469
        %v2472 = vrot.slane %v2452, 1
        %s2474 = vtos %v2472
        %v2475 = vstv %s2474
        %v2476 = vmul.f32 %v2470, %v2455
        %v2477 = vmul.f32 %v2475, %v2455
        %v2478 = vmul.f32 %v2476, %v2476
        %v2479 = vsub.f32 %v2477, %v2478
        %v2480 = vmax.f32 %v2479, 0.0
        %vm2481 = vcmp.ge.s32.totalorder %v2448, 1
        %vm2482 = vcmp.lt.s32.totalorder %v2448, 2
        %vm2483 = vmand %vm2481, %vm2482
        %v2484 = vsel %vm2483, %v2476, %v2464
        %v2485 = vsel %vm2483, %v2480, %v2465
        %v2486 = vrot.slane %v2449, 2
        %s2488 = vtos %v2486
        %v2489 = vstv %s2488
        %v2490 = vrot.slane %v2452, 2
        %s2492 = vtos %v2490
        %v2493 = vstv %s2492
        %v2494 = vmul.f32 %v2489, %v2455
        %v2495 = vmul.f32 %v2493, %v2455
        %v2496 = vmul.f32 %v2494, %v2494
        %v2497 = vsub.f32 %v2495, %v2496
        %v2498 = vmax.f32 %v2497, 0.0
        %vm2499 = vcmp.ge.s32.totalorder %v2448, 2
        %vm2500 = vcmp.lt.s32.totalorder %v2448, 3
        %vm2501 = vmand %vm2499, %vm2500
        %v2502 = vsel %vm2501, %v2494, %v2484
        %v2503 = vsel %vm2501, %v2498, %v2485
        %v2504 = vrot.slane %v2449, 3
        %s2506 = vtos %v2504
        %v2507 = vstv %s2506
        %v2508 = vrot.slane %v2452, 3
        %s2510 = vtos %v2508
        %v2511 = vstv %s2510
        %v2512 = vmul.f32 %v2507, %v2455
        %v2513 = vmul.f32 %v2511, %v2455
        %v2514 = vmul.f32 %v2512, %v2512
        %v2515 = vsub.f32 %v2513, %v2514
        %v2516 = vmax.f32 %v2515, 0.0
        %vm2517 = vcmp.ge.s32.totalorder %v2448, 3
        %vm2518 = vcmp.lt.s32.totalorder %v2448, 4
        %vm2519 = vmand %vm2517, %vm2518
        %v2520 = vsel %vm2519, %v2512, %v2502
        %v2521 = vsel %vm2519, %v2516, %v2503
        %v2522 = vrot.slane %v2449, 4
        %s2524 = vtos %v2522
        %v2525 = vstv %s2524
        %v2526 = vrot.slane %v2452, 4
        %s2528 = vtos %v2526
        %v2529 = vstv %s2528
        %v2530 = vmul.f32 %v2525, %v2455
        %v2531 = vmul.f32 %v2529, %v2455
        %v2532 = vmul.f32 %v2530, %v2530
        %v2533 = vsub.f32 %v2531, %v2532
        %v2534 = vmax.f32 %v2533, 0.0
        %vm2535 = vcmp.ge.s32.totalorder %v2448, 4
        %vm2536 = vcmp.lt.s32.totalorder %v2448, 5
        %vm2537 = vmand %vm2535, %vm2536
        %v2538 = vsel %vm2537, %v2530, %v2520
        %v2539 = vsel %vm2537, %v2534, %v2521
        %v2540 = vrot.slane %v2449, 5
        %s2542 = vtos %v2540
        %v2543 = vstv %s2542
        %v2544 = vrot.slane %v2452, 5
        %s2546 = vtos %v2544
        %v2547 = vstv %s2546
        %v2548 = vmul.f32 %v2543, %v2455
        %v2549 = vmul.f32 %v2547, %v2455
        %v2550 = vmul.f32 %v2548, %v2548
        %v2551 = vsub.f32 %v2549, %v2550
        %v2552 = vmax.f32 %v2551, 0.0
        %vm2553 = vcmp.ge.s32.totalorder %v2448, 5
        %vm2554 = vcmp.lt.s32.totalorder %v2448, 6
        %vm2555 = vmand %vm2553, %vm2554
        %v2556 = vsel %vm2555, %v2548, %v2538
        %v2557 = vsel %vm2555, %v2552, %v2539
        %v2558 = vrot.slane %v2449, 6
        %s2560 = vtos %v2558
        %v2561 = vstv %s2560
        %v2562 = vrot.slane %v2452, 6
        %s2564 = vtos %v2562
        %v2565 = vstv %s2564
        %v2566 = vmul.f32 %v2561, %v2455
        %v2567 = vmul.f32 %v2565, %v2455
        %v2568 = vmul.f32 %v2566, %v2566
        %v2569 = vsub.f32 %v2567, %v2568
        %v2570 = vmax.f32 %v2569, 0.0
        %vm2571 = vcmp.ge.s32.totalorder %v2448, 6
        %vm2572 = vcmp.lt.s32.totalorder %v2448, 7
        %vm2573 = vmand %vm2571, %vm2572
        %v2574 = vsel %vm2573, %v2566, %v2556
        %v2575 = vsel %vm2573, %v2570, %v2557
        %v2576 = vrot.slane %v2449, 7
        %s2578 = vtos %v2576
        %v2579 = vstv %s2578
        %v2580 = vrot.slane %v2452, 7
        %s2582 = vtos %v2580
        %v2583 = vstv %s2582
        %v2584 = vmul.f32 %v2579, %v2455
        %v2585 = vmul.f32 %v2583, %v2455
        %v2586 = vmul.f32 %v2584, %v2584
        %v2587 = vsub.f32 %v2585, %v2586
        %v2588 = vmax.f32 %v2587, 0.0
        %vm2589 = vcmp.ge.s32.totalorder %v2448, 7
        %vm2590 = vcmp.lt.s32.totalorder %v2448, 8
        %vm2591 = vmand %vm2589, %vm2590
        %v2592 = vsel %vm2591, %v2584, %v2574
        %v2593 = vsel %vm2591, %v2588, %v2575
        %v2594 = vsub.f32 %v2437, %v2592
        %v2595 = vadd.f32 %v2593, 1e-05
        %v2596 = vrsqrt.pop %v2595
        %v2597 = vmul.f32 %v2594, %v2596
        %v2598 = vld [vmem:[%s11] sm:$0xff]
        %2600 = vset.pattern.permute.xlu0 0
        %2601 = vperm.xlu0 %2600, %v2598
        %v2602 = vpop.permute.xlu0 %2601
        %v2604 = vmul.f32 %v2597, %v2602
        %v2605 = vld [vmem:[%s12] sm:$0xff]
        %2607 = vset.pattern.permute.xlu0 0
        %2608 = vperm.xlu0 %2607, %v2605
        %v2609 = vpop.permute.xlu0 %2608
        %v2611 = vadd.f32 %v2604, %v2609
        %v2612 = vxor.u32 %v2611, 2147483648
        %v2613 = vmul.f32 %v2612, 1.442695
        %v2614 = vpow.pop %v2613
        %v2615 = vadd.f32 %v2614, 1.0
        %v2616 = vrcp.pop %v2615
        %v2617 = vmul.f32 1.0, %v2616
        %v2618 = vmul.f32 %v2611, %v2617
        %2619 = vrot.lane.b32.xlu0 %v2384, 127
        %v2620 = vpop.permute.xlu0 %2619
        %2621 = vrot.lane.b32.xlu0 %v2385, 127
        %v2622 = vpop.permute.xlu0 %2621
        %2623 = vrot.lane.b32.xlu0 %v2386, 127
        %v2624 = vpop.permute.xlu0 %2623
        %2625 = vrot.lane.b32.xlu0 %v2387, 127
        %v2626 = vpop.permute.xlu0 %2625
        %v2627 = vsel %vm1383, %v2624, %v2626
        %v2628 = vsel %vm1383, %v2622, %v2624
        %v2629 = vsel %vm1383, %v2620, %v2622
        %v2630 = vsel %vm1383, %v2626, %v2620
        %2631 = vrot.lane.b32.xlu0 %v2384, 120
        %v2632 = vpop.permute.xlu0 %2631
        %2633 = vrot.lane.b32.xlu0 %v2385, 120
        %v2634 = vpop.permute.xlu0 %2633
        %2635 = vrot.lane.b32.xlu0 %v2386, 120
        %v2636 = vpop.permute.xlu0 %2635
        %2637 = vrot.lane.b32.xlu0 %v2387, 120
        %v2638 = vpop.permute.xlu0 %2637
        %v2639 = vsel %vm1449, %v2636, %v2638
        %v2640 = vsel %vm1449, %v2634, %v2636
        %v2641 = vsel %vm1449, %v2632, %v2634
        %v2642 = vsel %vm1449, %v2638, %v2632
        %2643 = vrot.lane.b32.xlu0 %v2384, 119
        %v2644 = vpop.permute.xlu0 %2643
        %2645 = vrot.lane.b32.xlu0 %v2385, 119
        %v2646 = vpop.permute.xlu0 %2645
        %2647 = vrot.lane.b32.xlu0 %v2386, 119
        %v2648 = vpop.permute.xlu0 %2647
        %2649 = vrot.lane.b32.xlu0 %v2387, 119
        %v2650 = vpop.permute.xlu0 %2649
        %v2651 = vsel %vm1482, %v2648, %v2650
        %v2652 = vsel %vm1482, %v2646, %v2648
        %v2653 = vsel %vm1482, %v2644, %v2646
        %v2654 = vsel %vm1482, %v2650, %v2644
        %2655 = vrot.lane.b32.xlu0 %v2384, 64
        %v2656 = vpop.permute.xlu0 %2655
        %2657 = vrot.lane.b32.xlu0 %v2385, 64
        %v2658 = vpop.permute.xlu0 %2657
        %2659 = vrot.lane.b32.xlu0 %v2386, 64
        %v2660 = vpop.permute.xlu0 %2659
        %2661 = vrot.lane.b32.xlu0 %v2387, 64
        %v2662 = vpop.permute.xlu0 %2661
        %v2663 = vsel %vm1066, %v2660, %v2662
        %v2664 = vsel %vm1066, %v2658, %v2660
        %v2665 = vsel %vm1066, %v2656, %v2658
        %v2666 = vsel %vm1066, %v2662, %v2656
        %2667 = vrot.lane.b32.xlu0 %v2384, 63
        %v2668 = vpop.permute.xlu0 %2667
        %2669 = vrot.lane.b32.xlu0 %v2385, 63
        %v2670 = vpop.permute.xlu0 %2669
        %2671 = vrot.lane.b32.xlu0 %v2386, 63
        %v2672 = vpop.permute.xlu0 %2671
        %2673 = vrot.lane.b32.xlu0 %v2387, 63
        %v2674 = vpop.permute.xlu0 %2673
        %v2675 = vsel %vm1099, %v2672, %v2674
        %v2676 = vsel %vm1099, %v2670, %v2672
        %v2677 = vsel %vm1099, %v2668, %v2670
        %v2678 = vsel %vm1099, %v2674, %v2668
        %2679 = vrot.lane.b32.xlu0 %v2384, 56
        %v2680 = vpop.permute.xlu0 %2679
        %2681 = vrot.lane.b32.xlu0 %v2385, 56
        %v2682 = vpop.permute.xlu0 %2681
        %2683 = vrot.lane.b32.xlu0 %v2386, 56
        %v2684 = vpop.permute.xlu0 %2683
        %2685 = vrot.lane.b32.xlu0 %v2387, 56
        %v2686 = vpop.permute.xlu0 %2685
        %v2687 = vsel %vm1165, %v2684, %v2686
        %v2688 = vsel %vm1165, %v2682, %v2684
        %v2689 = vsel %vm1165, %v2680, %v2682
        %v2690 = vsel %vm1165, %v2686, %v2680
        %2691 = vrot.lane.b32.xlu0 %v2384, 55
        %v2692 = vpop.permute.xlu0 %2691
        %2693 = vrot.lane.b32.xlu0 %v2385, 55
        %v2694 = vpop.permute.xlu0 %2693
        %2695 = vrot.lane.b32.xlu0 %v2386, 55
        %v2696 = vpop.permute.xlu0 %2695
        %2697 = vrot.lane.b32.xlu0 %v2387, 55
        %v2698 = vpop.permute.xlu0 %2697
        %v2699 = vsel %vm1198, %v2696, %v2698
        %v2700 = vsel %vm1198, %v2694, %v2696
        %v2701 = vsel %vm1198, %v2692, %v2694
        %v2702 = vsel %vm1198, %v2698, %v2692
        %v2703 = vpack.c.bf16 %v2629, %v2384
        %v2704 = vpack.c.bf16 %v2628, %v2385
        %v2705 = vpack.c.bf16 %v2627, %v2386
        %v2706 = vpack.c.bf16 %v2630, %v2387
        %v2707 = vpack.c.bf16 %v2653, %v2641
        %v2708 = vpack.c.bf16 %v2652, %v2640
        %v2709 = vpack.c.bf16 %v2651, %v2639
        %v2710 = vpack.c.bf16 %v2654, %v2642
        %v2711 = vpack.c.bf16 %v2677, %v2665
        %v2712 = vpack.c.bf16 %v2676, %v2664
        %v2713 = vpack.c.bf16 %v2675, %v2663
        %v2714 = vpack.c.bf16 %v2678, %v2666
        %v2715 = vpack.c.bf16 %v2701, %v2689
        %v2716 = vpack.c.bf16 %v2700, %v2688
        %v2717 = vpack.c.bf16 %v2699, %v2687
        %v2718 = vpack.c.bf16 %v2702, %v2690
        %v2719 = vadd.s32 %v2448, 8
        %v2720 = vadd.s32 %v2448, 16
        %v2721 = vadd.s32 %v2448, 24
        %v2722 = vadd.s32 %v2448, 32
        %v2723 = vadd.s32 %v2448, 40
        %v2724 = vadd.s32 %v2448, 48
        %v2725 = vadd.s32 %v2448, 56
        %v2726 = vadd.s32 %v2448, 64
        %v2727 = vadd.s32 %v2448, 72
        %v2728 = vadd.s32 %v2448, 80
        %v2729 = vadd.s32 %v2448, 88
        %v2730 = vadd.s32 %v2448, 96
        %v2731 = vadd.s32 %v2448, 104
        %v2732 = vadd.s32 %v2448, 112
        %v2733 = vadd.s32 %v2448, 120
        %v2734 = vadd.s32 %v2448, 128
        %v2735 = vadd.s32 %v2448, 136
        %v2736 = vadd.s32 %v2448, 144
        %v2737 = vadd.s32 %v2448, 152
        %v2738 = vadd.s32 %v2448, 160
        %v2739 = vadd.s32 %v2448, 168
        %v2740 = vadd.s32 %v2448, 176
        %v2741 = vadd.s32 %v2448, 184
        %v2742 = vadd.s32 %v2448, 192
        %v2743 = vadd.s32 %v2448, 200
        %v2744 = vadd.s32 %v2448, 208
        %v2745 = vadd.s32 %v2448, 216
        %v2746 = vadd.s32 %v2448, 224
        %v2747 = vadd.s32 %v2448, 232
        %v2748 = vadd.s32 %v2448, 240
        %v2749 = vadd.s32 %v2448, 248
        %v2750 = vadd.s32 %v2448, 256
        %v2751 = vadd.s32 %v2448, 264
        %v2752 = vadd.s32 %v2448, 272
        %v2753 = vadd.s32 %v2448, 280
        %v2754 = vadd.s32 %v2448, 288
        %v2755 = vadd.s32 %v2448, 296
        %v2756 = vadd.s32 %v2448, 304
        %v2757 = vadd.s32 %v2448, 312
        %v2758 = vadd.s32 %v2448, 320
        %v2759 = vadd.s32 %v2448, 328
        %v2760 = vadd.s32 %v2448, 336
        %v2761 = vadd.s32 %v2448, 344
        %v2762 = vadd.s32 %v2448, 352
        %v2763 = vadd.s32 %v2448, 360
        %v2764 = vadd.s32 %v2448, 368
        %v2765 = vadd.s32 %v2448, 376
        %v2766 = vadd.s32 %v2448, 384
        %v2767 = vadd.s32 %v2448, 392
        %v2768 = vadd.s32 %v2448, 400
        %v2769 = vadd.s32 %v2448, 408
        %v2770 = vadd.s32 %v2448, 416
        %v2771 = vadd.s32 %v2448, 424
        %v2772 = vadd.s32 %v2448, 432
        %v2773 = vadd.s32 %v2448, 440
        %v2774 = vadd.s32 %v2448, 448
        %v2775 = vadd.s32 %v2448, 456
        %v2776 = vadd.s32 %v2448, 464
        %v2777 = vadd.s32 %v2448, 472
        %v2778 = vadd.s32 %v2448, 480
        %v2779 = vadd.s32 %v2448, 488
        %v2780 = vadd.s32 %v2448, 496
        %v2781 = vadd.s32 %v2448, 504
        %v2782 = vld [vmem:[%s485] sm:$0x1]
        %v2783 = vlaneseq
        %v2784 = vshrl.u32 %v2783, 7
        %v2785 = vsub.s32 0, %v2784
        %v2786 = vrot.slane %v2782, %v2785
        %vm2787 = vcmp.eq.s32.totalorder %v2448, %v2786
        %vm2788 = vcmp.eq.s32.totalorder %v2719, %v2786
        %vm2789 = vcmp.eq.s32.totalorder %v2720, %v2786
        %vm2790 = vcmp.eq.s32.totalorder %v2721, %v2786
        %vm2791 = vcmp.eq.s32.totalorder %v2722, %v2786
        %vm2792 = vcmp.eq.s32.totalorder %v2723, %v2786
        %vm2793 = vcmp.eq.s32.totalorder %v2724, %v2786
        %vm2794 = vcmp.eq.s32.totalorder %v2725, %v2786
        %vm2795 = vcmp.eq.s32.totalorder %v2726, %v2786
        %vm2796 = vcmp.eq.s32.totalorder %v2727, %v2786
        %vm2797 = vcmp.eq.s32.totalorder %v2728, %v2786
        %vm2798 = vcmp.eq.s32.totalorder %v2729, %v2786
        %vm2799 = vcmp.eq.s32.totalorder %v2730, %v2786
        %vm2800 = vcmp.eq.s32.totalorder %v2731, %v2786
        %vm2801 = vcmp.eq.s32.totalorder %v2732, %v2786
        %vm2802 = vcmp.eq.s32.totalorder %v2733, %v2786
        %vm2803 = vcmp.eq.s32.totalorder %v2734, %v2786
        %vm2804 = vcmp.eq.s32.totalorder %v2735, %v2786
        %vm2805 = vcmp.eq.s32.totalorder %v2736, %v2786
        %vm2806 = vcmp.eq.s32.totalorder %v2737, %v2786
        %vm2807 = vcmp.eq.s32.totalorder %v2738, %v2786
        %vm2808 = vcmp.eq.s32.totalorder %v2739, %v2786
        %vm2809 = vcmp.eq.s32.totalorder %v2740, %v2786
        %vm2810 = vcmp.eq.s32.totalorder %v2741, %v2786
        %vm2811 = vcmp.eq.s32.totalorder %v2742, %v2786
        %vm2812 = vcmp.eq.s32.totalorder %v2743, %v2786
        %vm2813 = vcmp.eq.s32.totalorder %v2744, %v2786
        %vm2814 = vcmp.eq.s32.totalorder %v2745, %v2786
        %vm2815 = vcmp.eq.s32.totalorder %v2746, %v2786
        %vm2816 = vcmp.eq.s32.totalorder %v2747, %v2786
        %vm2817 = vcmp.eq.s32.totalorder %v2748, %v2786
        %vm2818 = vcmp.eq.s32.totalorder %v2749, %v2786
        %vm2819 = vcmp.eq.s32.totalorder %v2750, %v2786
        %vm2820 = vcmp.eq.s32.totalorder %v2751, %v2786
        %vm2821 = vcmp.eq.s32.totalorder %v2752, %v2786
        %vm2822 = vcmp.eq.s32.totalorder %v2753, %v2786
        %vm2823 = vcmp.eq.s32.totalorder %v2754, %v2786
        %vm2824 = vcmp.eq.s32.totalorder %v2755, %v2786
        %vm2825 = vcmp.eq.s32.totalorder %v2756, %v2786
        %vm2826 = vcmp.eq.s32.totalorder %v2757, %v2786
        %vm2827 = vcmp.eq.s32.totalorder %v2758, %v2786
        %vm2828 = vcmp.eq.s32.totalorder %v2759, %v2786
        %vm2829 = vcmp.eq.s32.totalorder %v2760, %v2786
        %vm2830 = vcmp.eq.s32.totalorder %v2761, %v2786
        %vm2831 = vcmp.eq.s32.totalorder %v2762, %v2786
        %vm2832 = vcmp.eq.s32.totalorder %v2763, %v2786
        %vm2833 = vcmp.eq.s32.totalorder %v2764, %v2786
        %vm2834 = vcmp.eq.s32.totalorder %v2765, %v2786
        %vm2835 = vcmp.eq.s32.totalorder %v2766, %v2786
        %vm2836 = vcmp.eq.s32.totalorder %v2767, %v2786
        %vm2837 = vcmp.eq.s32.totalorder %v2768, %v2786
        %vm2838 = vcmp.eq.s32.totalorder %v2769, %v2786
        %vm2839 = vcmp.eq.s32.totalorder %v2770, %v2786
        %vm2840 = vcmp.eq.s32.totalorder %v2771, %v2786
        %vm2841 = vcmp.eq.s32.totalorder %v2772, %v2786
        %vm2842 = vcmp.eq.s32.totalorder %v2773, %v2786
        %vm2843 = vcmp.eq.s32.totalorder %v2774, %v2786
        %vm2844 = vcmp.eq.s32.totalorder %v2775, %v2786
        %vm2845 = vcmp.eq.s32.totalorder %v2776, %v2786
        %vm2846 = vcmp.eq.s32.totalorder %v2777, %v2786
        %vm2847 = vcmp.eq.s32.totalorder %v2778, %v2786
        %vm2848 = vcmp.eq.s32.totalorder %v2779, %v2786
        %vm2849 = vcmp.eq.s32.totalorder %v2780, %v2786
        %vm2850 = vcmp.eq.s32.totalorder %v2781, %v2786
        %v2851 = vsel %vm2787, 1, 0
        %v2852 = vsel %vm2788, 1, 0
        %v2853 = vsel %vm2789, 1, 0
        %v2854 = vsel %vm2790, 1, 0
        %v2855 = vsel %vm2791, 1, 0
        %v2856 = vsel %vm2792, 1, 0
        %v2857 = vsel %vm2793, 1, 0
        %v2858 = vsel %vm2794, 1, 0
        %v2859 = vsel %vm2795, 1, 0
        %v2860 = vsel %vm2796, 1, 0
        %v2861 = vsel %vm2797, 1, 0
        %v2862 = vsel %vm2798, 1, 0
        %v2863 = vsel %vm2799, 1, 0
        %v2864 = vsel %vm2800, 1, 0
        %v2865 = vsel %vm2801, 1, 0
        %v2866 = vsel %vm2802, 1, 0
        %v2867 = vsel %vm2803, 1, 0
        %v2868 = vsel %vm2804, 1, 0
        %v2869 = vsel %vm2805, 1, 0
        %v2870 = vsel %vm2806, 1, 0
        %v2871 = vsel %vm2807, 1, 0
        %v2872 = vsel %vm2808, 1, 0
        %v2873 = vsel %vm2809, 1, 0
        %v2874 = vsel %vm2810, 1, 0
        %v2875 = vsel %vm2811, 1, 0
        %v2876 = vsel %vm2812, 1, 0
        %v2877 = vsel %vm2813, 1, 0
        %v2878 = vsel %vm2814, 1, 0
        %v2879 = vsel %vm2815, 1, 0
        %v2880 = vsel %vm2816, 1, 0
        %v2881 = vsel %vm2817, 1, 0
        %v2882 = vsel %vm2818, 1, 0
        %v2883 = vsel %vm2819, 1, 0
        %v2884 = vsel %vm2820, 1, 0
        %v2885 = vsel %vm2821, 1, 0
        %v2886 = vsel %vm2822, 1, 0
        %v2887 = vsel %vm2823, 1, 0
        %v2888 = vsel %vm2824, 1, 0
        %v2889 = vsel %vm2825, 1, 0
        %v2890 = vsel %vm2826, 1, 0
        %v2891 = vsel %vm2827, 1, 0
        %v2892 = vsel %vm2828, 1, 0
        %v2893 = vsel %vm2829, 1, 0
        %v2894 = vsel %vm2830, 1, 0
        %v2895 = vsel %vm2831, 1, 0
        %v2896 = vsel %vm2832, 1, 0
        %v2897 = vsel %vm2833, 1, 0
        %v2898 = vsel %vm2834, 1, 0
        %v2899 = vsel %vm2835, 1, 0
        %v2900 = vsel %vm2836, 1, 0
        %v2901 = vsel %vm2837, 1, 0
        %v2902 = vsel %vm2838, 1, 0
        %v2903 = vsel %vm2839, 1, 0
        %v2904 = vsel %vm2840, 1, 0
        %v2905 = vsel %vm2841, 1, 0
        %v2906 = vsel %vm2842, 1, 0
        %v2907 = vsel %vm2843, 1, 0
        %v2908 = vsel %vm2844, 1, 0
        %v2909 = vsel %vm2845, 1, 0
        %v2910 = vsel %vm2846, 1, 0
        %v2911 = vsel %vm2847, 1, 0
        %v2912 = vsel %vm2848, 1, 0
        %v2913 = vsel %vm2849, 1, 0
        %v2914 = vsel %vm2850, 1, 0
        %v2915 = vcvt.s32.f32 %v2851
        %v2916 = vcvt.s32.f32 %v2852
        %v2917 = vcvt.s32.f32 %v2853
        %v2918 = vcvt.s32.f32 %v2854
        %v2919 = vcvt.s32.f32 %v2855
        %v2920 = vcvt.s32.f32 %v2856
        %v2921 = vcvt.s32.f32 %v2857
        %v2922 = vcvt.s32.f32 %v2858
        %v2923 = vcvt.s32.f32 %v2859
        %v2924 = vcvt.s32.f32 %v2860
        %v2925 = vcvt.s32.f32 %v2861
        %v2926 = vcvt.s32.f32 %v2862
        %v2927 = vcvt.s32.f32 %v2863
        %v2928 = vcvt.s32.f32 %v2864
        %v2929 = vcvt.s32.f32 %v2865
        %v2930 = vcvt.s32.f32 %v2866
        %v2931 = vcvt.s32.f32 %v2867
        %v2932 = vcvt.s32.f32 %v2868
        %v2933 = vcvt.s32.f32 %v2869
        %v2934 = vcvt.s32.f32 %v2870
        %v2935 = vcvt.s32.f32 %v2871
        %v2936 = vcvt.s32.f32 %v2872
        %v2937 = vcvt.s32.f32 %v2873
        %v2938 = vcvt.s32.f32 %v2874
        %v2939 = vcvt.s32.f32 %v2875
        %v2940 = vcvt.s32.f32 %v2876
        %v2941 = vcvt.s32.f32 %v2877
        %v2942 = vcvt.s32.f32 %v2878
        %v2943 = vcvt.s32.f32 %v2879
        %v2944 = vcvt.s32.f32 %v2880
        %v2945 = vcvt.s32.f32 %v2881
        %v2946 = vcvt.s32.f32 %v2882
        %v2947 = vcvt.s32.f32 %v2883
        %v2948 = vcvt.s32.f32 %v2884
        %v2949 = vcvt.s32.f32 %v2885
        %v2950 = vcvt.s32.f32 %v2886
        %v2951 = vcvt.s32.f32 %v2887
        %v2952 = vcvt.s32.f32 %v2888
        %v2953 = vcvt.s32.f32 %v2889
        %v2954 = vcvt.s32.f32 %v2890
        %v2955 = vcvt.s32.f32 %v2891
        %v2956 = vcvt.s32.f32 %v2892
        %v2957 = vcvt.s32.f32 %v2893
        %v2958 = vcvt.s32.f32 %v2894
        %v2959 = vcvt.s32.f32 %v2895
        %v2960 = vcvt.s32.f32 %v2896
        %v2961 = vcvt.s32.f32 %v2897
        %v2962 = vcvt.s32.f32 %v2898
        %v2963 = vcvt.s32.f32 %v2899
        %v2964 = vcvt.s32.f32 %v2900
        %v2965 = vcvt.s32.f32 %v2901
        %v2966 = vcvt.s32.f32 %v2902
        %v2967 = vcvt.s32.f32 %v2903
        %v2968 = vcvt.s32.f32 %v2904
        %v2969 = vcvt.s32.f32 %v2905
        %v2970 = vcvt.s32.f32 %v2906
        %v2971 = vcvt.s32.f32 %v2907
        %v2972 = vcvt.s32.f32 %v2908
        %v2973 = vcvt.s32.f32 %v2909
        %v2974 = vcvt.s32.f32 %v2910
        %v2975 = vcvt.s32.f32 %v2911
        %v2976 = vcvt.s32.f32 %v2912
        %v2977 = vcvt.s32.f32 %v2913
        %v2978 = vcvt.s32.f32 %v2914
        %v2979 = vpack.c.bf16 %v2916, %v2915
        %v2980 = vpack.c.bf16 %v2918, %v2917
        %v2981 = vpack.c.bf16 %v2920, %v2919
        %v2982 = vpack.c.bf16 %v2922, %v2921
        %v2983 = vpack.c.bf16 %v2924, %v2923
        %v2984 = vpack.c.bf16 %v2926, %v2925
        %v2985 = vpack.c.bf16 %v2928, %v2927
        %v2986 = vpack.c.bf16 %v2930, %v2929
        %v2987 = vpack.c.bf16 %v2932, %v2931
        %v2988 = vpack.c.bf16 %v2934, %v2933
        %v2989 = vpack.c.bf16 %v2936, %v2935
        %v2990 = vpack.c.bf16 %v2938, %v2937
        %v2991 = vpack.c.bf16 %v2940, %v2939
        %v2992 = vpack.c.bf16 %v2942, %v2941
        %v2993 = vpack.c.bf16 %v2944, %v2943
        %v2994 = vpack.c.bf16 %v2946, %v2945
        %v2995 = vpack.c.bf16 %v2948, %v2947
        %v2996 = vpack.c.bf16 %v2950, %v2949
        %v2997 = vpack.c.bf16 %v2952, %v2951
        %v2998 = vpack.c.bf16 %v2954, %v2953
        %v2999 = vpack.c.bf16 %v2956, %v2955
        %v3000 = vpack.c.bf16 %v2958, %v2957
        %v3001 = vpack.c.bf16 %v2960, %v2959
        %v3002 = vpack.c.bf16 %v2962, %v2961
        %v3003 = vpack.c.bf16 %v2964, %v2963
        %v3004 = vpack.c.bf16 %v2966, %v2965
        %v3005 = vpack.c.bf16 %v2968, %v2967
        %v3006 = vpack.c.bf16 %v2970, %v2969
        %v3007 = vpack.c.bf16 %v2972, %v2971
        %v3008 = vpack.c.bf16 %v2974, %v2973
        %v3009 = vpack.c.bf16 %v2976, %v2975
        %v3010 = vpack.c.bf16 %v2978, %v2977
        %3011 = vmatprep.subr.bf16.mxu0 0
        %3012 = vmatpush1.bf16.msra.mxu0 %v2986
        %3013 = vmatprep.subr.bf16.mxu0 0
        %3014 = vmatpush1.bf16.msra.mxu0 %v2985
        %3015 = vmatprep.subr.bf16.mxu0 0
        %3016 = vmatpush1.bf16.msra.mxu0 %v2984
        %3017 = vmatprep.subr.bf16.mxu0 0
        %3018 = vmatpush1.bf16.msra.mxu0 %v2983
        %3019 = vmatprep.subr.bf16.mxu0 0
        %3020 = vmatpush1.bf16.msra.mxu0 %v2982
        %3021 = vmatprep.subr.bf16.mxu0 0
        %3022 = vmatpush1.bf16.msra.mxu0 %v2981
        %3023 = vmatprep.subr.bf16.mxu0 0
        %3024 = vmatpush1.bf16.msra.mxu0 %v2980
        %3025 = vmatprep.subr.bf16.mxu0 0
        %3026 = vmatpush1.bf16.msra.mxu0 %v2979
        %3027 = vmatprep.subr.bf16.mxu0 0
        %3028 = vmatpush2.bf16.msra.mxu0 %v2994
        %3029 = vmatprep.subr.bf16.mxu0 0
        %3030 = vmatpush2.bf16.msra.mxu0 %v2993
        %3031 = vmatprep.subr.bf16.mxu0 0
        %3032 = vmatpush2.bf16.msra.mxu0 %v2992
        %3033 = vmatprep.subr.bf16.mxu0 0
        %3034 = vmatpush2.bf16.msra.mxu0 %v2991
        %3035 = vmatprep.subr.bf16.mxu0 0
        %3036 = vmatpush2.bf16.msra.mxu0 %v2990
        %3037 = vmatprep.subr.bf16.mxu0 0
        %3038 = vmatpush2.bf16.msra.mxu0 %v2989
        %3039 = vmatprep.subr.bf16.mxu0 0
        %3040 = vmatpush2.bf16.msra.mxu0 %v2988
        %3041 = vmatprep.subr.bf16.mxu0 0
        %3042 = vmatpush2.bf16.msra.mxu0 %v2987
        %3043 = vmatprep.mubr.bf16.mxu0 %v2704
        %3044 = vmatmul.mubr.bf16.gmra.mxu0 %v2703
        %v3045 = vpop.f32.mrf.mxu0
        %v3046 = vadd.f32 0.0, %v3045
        %v3047 = vpop.f32.mrf.mxu0
        %v3048 = vpop.f32.mrf.mxu0
        %v3049 = vadd.f32 0.0, %v3048
        %v3050 = vpop.f32.mrf.mxu0
        %3051 = vmatprep.mubr.bf16.mxu0 %v2708
        %3052 = vmatmul.mubr.bf16.gmra.mxu0 %v2707
        %v3053 = vpop.f32.mrf.mxu0
        %v3054 = vadd.f32 0.0, %v3053
        %v3055 = vpop.f32.mrf.mxu0
        %v3056 = vpop.f32.mrf.mxu0
        %v3057 = vadd.f32 0.0, %v3056
        %v3058 = vpop.f32.mrf.mxu0
        %3059 = vmatprep.mubr.bf16.mxu0 %v2712
        %3060 = vmatmul.mubr.bf16.gmra.mxu0 %v2711
        %v3061 = vpop.f32.mrf.mxu0
        %v3062 = vadd.f32 0.0, %v3061
        %v3063 = vpop.f32.mrf.mxu0
        %v3064 = vpop.f32.mrf.mxu0
        %v3065 = vadd.f32 0.0, %v3064
        %v3066 = vpop.f32.mrf.mxu0
        %3067 = vmatprep.mubr.bf16.mxu0 %v2716
        %3068 = vmatmul.mubr.bf16.gmra.mxu0 %v2715
        %v3069 = vpop.f32.mrf.mxu0
        %v3070 = vadd.f32 0.0, %v3069
        %v3071 = vpop.f32.mrf.mxu0
        %v3072 = vpop.f32.mrf.mxu0
        %v3073 = vadd.f32 0.0, %v3072
        %v3074 = vpop.f32.mrf.mxu0
        %3075 = vdwg.mxu0
        %3076 = vmatprep.subr.bf16.mxu0 0
        %3077 = vmatpush1.bf16.msra.mxu0 %v3002
        %3078 = vmatprep.subr.bf16.mxu0 0
        %3079 = vmatpush1.bf16.msra.mxu0 %v3001
        %3080 = vmatprep.subr.bf16.mxu0 0
        %3081 = vmatpush1.bf16.msra.mxu0 %v3000
        %3082 = vmatprep.subr.bf16.mxu0 0
        %3083 = vmatpush1.bf16.msra.mxu0 %v2999
        %3084 = vmatprep.subr.bf16.mxu0 0
        %3085 = vmatpush1.bf16.msra.mxu0 %v2998
        %3086 = vmatprep.subr.bf16.mxu0 0
        %3087 = vmatpush1.bf16.msra.mxu0 %v2997
        %3088 = vmatprep.subr.bf16.mxu0 0
        %3089 = vmatpush1.bf16.msra.mxu0 %v2996
        %3090 = vmatprep.subr.bf16.mxu0 0
        %3091 = vmatpush1.bf16.msra.mxu0 %v2995
        %3092 = vmatprep.subr.bf16.mxu0 0
        %3093 = vmatpush2.bf16.msra.mxu0 %v3010
        %3094 = vmatprep.subr.bf16.mxu0 0
        %3095 = vmatpush2.bf16.msra.mxu0 %v3009
        %3096 = vmatprep.subr.bf16.mxu0 0
        %3097 = vmatpush2.bf16.msra.mxu0 %v3008
        %3098 = vmatprep.subr.bf16.mxu0 0
        %3099 = vmatpush2.bf16.msra.mxu0 %v3007
        %3100 = vmatprep.subr.bf16.mxu0 0
        %3101 = vmatpush2.bf16.msra.mxu0 %v3006
        %3102 = vmatprep.subr.bf16.mxu0 0
        %3103 = vmatpush2.bf16.msra.mxu0 %v3005
        %3104 = vmatprep.subr.bf16.mxu0 0
        %3105 = vmatpush2.bf16.msra.mxu0 %v3004
        %3106 = vmatprep.subr.bf16.mxu0 0
        %3107 = vmatpush2.bf16.msra.mxu0 %v3003
        %3108 = vmatprep.mubr.bf16.mxu0 %v2706
        %3109 = vmatmul.mubr.bf16.gmra.mxu0 %v2705
        %v3110 = vpop.f32.mrf.mxu0
        %v3111 = vadd.f32 %v3046, %v3110
        %v3112 = vpop.f32.mrf.mxu0
        %v3113 = vpop.f32.mrf.mxu0
        %v3114 = vadd.f32 %v3049, %v3113
        %v3115 = vpop.f32.mrf.mxu0
        %3116 = vmatprep.mubr.bf16.mxu0 %v2710
        %3117 = vmatmul.mubr.bf16.gmra.mxu0 %v2709
        %v3118 = vpop.f32.mrf.mxu0
        %v3119 = vadd.f32 %v3054, %v3118
        %v3120 = vpop.f32.mrf.mxu0
        %v3121 = vpop.f32.mrf.mxu0
        %v3122 = vadd.f32 %v3057, %v3121
        %v3123 = vpop.f32.mrf.mxu0
        %3124 = vmatprep.mubr.bf16.mxu0 %v2714
        %3125 = vmatmul.mubr.bf16.gmra.mxu0 %v2713
        %v3126 = vpop.f32.mrf.mxu0
        %v3127 = vadd.f32 %v3062, %v3126
        %v3128 = vpop.f32.mrf.mxu0
        %v3129 = vpop.f32.mrf.mxu0
        %v3130 = vadd.f32 %v3065, %v3129
        %v3131 = vpop.f32.mrf.mxu0
        %3132 = vmatprep.mubr.bf16.mxu0 %v2718
        %3133 = vmatmul.mubr.bf16.gmra.mxu0 %v2717
        %v3134 = vpop.f32.mrf.mxu0
        %v3135 = vadd.f32 %v3070, %v3134
        %v3136 = vpop.f32.mrf.mxu0
        %v3137 = vpop.f32.mrf.mxu0
        %v3138 = vadd.f32 %v3073, %v3137
        %v3139 = vpop.f32.mrf.mxu0
        %3140 = vdwg.mxu0
        %v3141 = vld [vmem:[%s489] sm:$0x1]
        %v3142 = vlaneseq
        %v3143 = vshrl.u32 %v3142, 7
        %v3144 = vsub.s32 0, %v3143
        %v3145 = vrot.slane %v3141, %v3144
        %v3146 = vmul.f32 %v3111, %v3145
        %v3147 = vadd.f32 %v3146, 0.0
        %v3148 = vld [vmem:[%s489 + $0x1] sm:$0x1]
        %v3149 = vlaneseq
        %v3150 = vshrl.u32 %v3149, 7
        %v3151 = vsub.s32 0, %v3150
        %v3152 = vrot.slane %v3148, %v3151
        %v3153 = vmul.f32 %v3114, %v3152
        %v3154 = vadd.f32 %v3147, %v3153
        %v3155 = vld [vmem:[%s489 + $0x2] sm:$0x1]
        %v3156 = vlaneseq
        %v3157 = vshrl.u32 %v3156, 7
        %v3158 = vsub.s32 0, %v3157
        %v3159 = vrot.slane %v3155, %v3158
        %v3160 = vmul.f32 %v3119, %v3159
        %v3161 = vadd.f32 %v3154, %v3160
        %v3162 = vld [vmem:[%s489 + $0x3] sm:$0x1]
        %v3163 = vlaneseq
        %v3164 = vshrl.u32 %v3163, 7
        %v3165 = vsub.s32 0, %v3164
        %v3166 = vrot.slane %v3162, %v3165
        %v3167 = vmul.f32 %v3122, %v3166
        %v3168 = vadd.f32 %v3161, %v3167
        %v3169 = vld [vmem:[%s489 + $0x4] sm:$0x1]
        %v3170 = vlaneseq
        %v3171 = vshrl.u32 %v3170, 7
        %v3172 = vsub.s32 0, %v3171
        %v3173 = vrot.slane %v3169, %v3172
        %v3174 = vmul.f32 %v3127, %v3173
        %v3175 = vadd.f32 %v3168, %v3174
        %v3176 = vld [vmem:[%s489 + $0x5] sm:$0x1]
        %v3177 = vlaneseq
        %v3178 = vshrl.u32 %v3177, 7
        %v3179 = vsub.s32 0, %v3178
        %v3180 = vrot.slane %v3176, %v3179
        %v3181 = vmul.f32 %v3130, %v3180
        %v3182 = vadd.f32 %v3175, %v3181
        %v3183 = vld [vmem:[%s489 + $0x6] sm:$0x1]
        %v3184 = vlaneseq
        %v3185 = vshrl.u32 %v3184, 7
        %v3186 = vsub.s32 0, %v3185
        %v3187 = vrot.slane %v3183, %v3186
        %v3188 = vmul.f32 %v3135, %v3187
        %v3189 = vadd.f32 %v3182, %v3188
        %v3190 = vld [vmem:[%s489 + $0x7] sm:$0x1]
        %v3191 = vlaneseq
        %v3192 = vshrl.u32 %v3191, 7
        %v3193 = vsub.s32 0, %v3192
        %v3194 = vrot.slane %v3190, %v3193
        %v3195 = vmul.f32 %v3138, %v3194
        %v3196 = vadd.f32 %v3189, %v3195
        %v3197 = vadd.f32 %v3196, %v2618
        %3198 = vst [vmem:[%s472] sm:$0xff] %v3197
        %s3199 = sand.u32 %s328, 1
        %s3200 = scalar_lea.sflag [#allocation3], %s3199
        %s3201 = sand.u32 %s328, 1
        %s3202 = smul.addr %s3201, 8
        %s3203 = scalar_lea.vmem [#allocation2], %s3202
        // Predicated region
        $region73: #{tpu_custom_call.1} parent=71 // pred_check
          %p3204 = pneg %p338
        $region74: #{tpu_custom_call.1} parent=71 // pred_check_branch
          %3206 = sbr.rel (%p3204) target = $region76
        $region75: #{tpu_custom_call.1} parent=71 // pred_region
          %s3208 = ssub.s32 128, 128
          %3209 = vsyncadd %s3200, %s3208
          %s3210 = smul.addr %s27, 128
          %s3211 = scalar_lea.hbm %s13, %s3210
          %s3213 = sshll.u32 %s3203, 4
          %s3214 = int_to_ptr.vmem [resolvable:$true] %s3213
          %3216 = dma.vmem_to_hbm [thread:$0]  %s3214, 128, %s3211, %s3200
        $region76: #{tpu_custom_call.1} parent=71 // pred_fallthru
          _
      $region72: #{tpu_custom_call.1} parent=5 // pred_fallthru
        _
      %p3217 = scmp.le.s32.totalorder 2, %s22
      // Predicated region
      $region77: #{tpu_custom_call.1} parent=5 // pred_check
        %p3218 = pneg %p3217
      $region78: #{tpu_custom_call.1} parent=5 // pred_check_branch
        %3220 = sbr.rel (%p3218) target = $region80
      $region79: #{tpu_custom_call.1} parent=5 // pred_region
        %s3221 = ssub.s32 %s22, 2
        // Predicated region
        $region81: #{tpu_custom_call.1} parent=79 // pred_check
          %p3222 = pneg %p344
        $region82: #{tpu_custom_call.1} parent=79 // pred_check_branch
          %3224 = sbr.rel (%p3222) target = $region84
        $region83: #{tpu_custom_call.1} parent=79 // pred_region
          %s3225 = sand.u32 %s329, 1
          %s3226 = scalar_lea.sflag [#allocation3], %s3225
          %s3227 = sand.u32 %s329, 1
          %s3228 = smul.addr %s3227, 8
          %s3229 = scalar_lea.vmem [#allocation2], %s3228
          %3230 = dma.done %s3226, 128
        $region84: #{tpu_custom_call.1} parent=79 // pred_fallthru
          _
      $region80: #{tpu_custom_call.1} parent=5 // pred_fallthru
        _
    $region6: #{tpu_custom_call.1} parent=1 // loop_footer
      %s26 = sadd.s32 1, %s22
    $region7: #{tpu_custom_call.1} parent=1 // loop_footer_branch
      %21 = sbr.rel target = $region3
    $region8: #{tpu_custom_call.1} parent=1 // loop_exit
      _
    %3231 = vsyncpa [#allocation3], 1
    %s3232 = scalar_lea.sflag [#allocation3], 1
    %3233 = vsyncpa %s3232, 1

</llo_original>
